<compile_context>
chip_gen: v6e
topology: v6e:2x2x1
jax: 0.10.0
libtpu: 0.0.40
codegen_flags: <defaults>
</compile_context>

<pallas_src>
import functools

import jax
import jax.numpy as jnp
import numpy as np
from jax.experimental import pallas as pl
from jax.experimental.pallas import tpu as pltpu


def _fused_kernel(x_ref, m_ref, w1_ref, b1_ref, w2_ref, b2_ref, w3_ref, b3_ref,
                  o_ref, hbuf_ref, *, L, pad, shifts, ch_pad):
    """One grid step = `images_per_step` images packed along the lane axis.

    x_ref   : (1, 1, L)            padded+flattened inputs (zero border / zero tails)
    m_ref   : (1, 1, L)            corr mask, zero on padded border and lane tails
    w1_ref  : (ch_pad, 9)          layer-1 taps (Cin == 1)
    b1_ref  : (ch_pad, 1)
    w2_ref  : (9, ch_pad, ch_pad)  per-tap layer-2 weight (tap, Cout, Cin)
    b2_ref  : (ch_pad, 1)
    w3_ref  : (9, 8, ch_pad)       per-tap layer-3 weight (Cout=1 padded to 8 rows)
    b3_ref  : (8, 1)
    o_ref   : (1, 1, L)
    hbuf_ref: (ch_pad, pad + L + pad) VMEM halo buffer for the 3x3 shifted windows
    """
    m = m_ref[0]                                      # (1, L)
    mb = jnp.broadcast_to(m, (ch_pad, L))             # hoisted: reused by layers 1 & 2

    # Zero only the halo flanks the shifted windows can read (interior is always
    # overwritten before any read).  Do NOT gate on program_id==0: scratch is
    # per-core under megacore parallel sharding.
    flank0 = jnp.zeros((ch_pad, pad), jnp.float32)
    hbuf_ref[:, pl.ds(0, pad)] = flank0
    hbuf_ref[:, pl.ds(pad + L, pad)] = flank0

    # ---------------- layer 1 (Cin = 1): 9 VPU FMAs, no MXU ----------------
    # Broadcast x into every sublane row so each tap window is already (ch_pad, L).
    hbuf_ref[:, pl.ds(pad, L)] = jnp.broadcast_to(x_ref[0], (ch_pad, L))
    w1 = w1_ref[...]                                  # (ch_pad, 9)
    acc = jnp.zeros((ch_pad, L), jnp.float32)
    for t, s in enumerate(shifts):
        acc = acc + w1[:, t:t + 1] * hbuf_ref[:, pl.ds(pad + s, L)]
    h = jnp.maximum(acc + b1_ref[...], 0.0) * mb      # ReLU + mask (zero border/tails)

    # ---------------- layer 2: 9 accumulated MXU matmuls (K = ch_pad) ----------------
    hbuf_ref[:, pl.ds(pad, L)] = h
    acc = jnp.zeros((ch_pad, L), jnp.float32)
    for t, s in enumerate(shifts):
        acc = acc + jnp.dot(w2_ref[t], hbuf_ref[:, pl.ds(pad + s, L)],
                            preferred_element_type=jnp.float32)
    h = jnp.maximum(acc + b2_ref[...], 0.0) * mb

    # ---------------- layer 3: same; only row 0 is the real output ----------------
    hbuf_ref[:, pl.ds(pad, L)] = h
    acc = jnp.zeros((8, L), jnp.float32)
    for t, s in enumerate(shifts):
        acc = acc + jnp.dot(w3_ref[t], hbuf_ref[:, pl.ds(pad + s, L)],
                            preferred_element_type=jnp.float32)
    b3 = b3_ref[...]                                  # (8, 1)
    y = jnp.maximum(acc[0:1, :] + b3[0:1, :], 0.0) * m
    o_ref[0] = y.astype(o_ref.dtype)


def _to_kernel_weights(params, ch_pad):
    """Convert PyTorch-layout (Cout, Cin, 3, 3) weights to the kernel's per-tap layout."""
    ch = params["w1"].shape[0]

    def bias(b, co_pad):
        return jnp.pad(b, (0, co_pad - b.shape[0])).reshape(co_pad, 1)

    def per_tap(w, co_pad, ci_pad):
        co, ci = w.shape[0], w.shape[1]
        wt = jnp.transpose(w, (2, 3, 0, 1)).reshape(9, co, ci)     # tap = kh*3 + kw
        return jnp.pad(wt, ((0, 0), (0, co_pad - co), (0, ci_pad - ci)))

    w1k = jnp.pad(params["w1"][:, 0].reshape(ch, 9), ((0, ch_pad - ch), (0, 0)))  # (ch_pad, 9)
    b1k = bias(params["b1"], ch_pad)
    w2k = per_tap(params["w2"], ch_pad, ch_pad)                    # (9, ch_pad, ch_pad)
    b2k = bias(params["b2"], ch_pad)
    w3k = per_tap(params["w3"], 8, ch_pad)                         # (9, 8, ch_pad)
    b3k = bias(params["b3"], 8)
    return w1k, b1k, w2k, b2k, w3k, b3k


def nc_conv2d_masked(x, corr_mask_conv, params, images_per_step=None):
    """Forward pass of NC_Conv2D_Masked.  x, corr_mask_conv: (N, 1, H, W) float32 (NCHW)."""
    N, C, H, W = x.shape
    assert C == 1
    Hp, Wp = H + 2, W + 2
    sp_valid = Hp * Wp
    sp = ((sp_valid + 127) // 128) * 128       # lane-pad flattened padded-spatial per image
    pad = 128                                  # halo width (>= Wp+1), keeps stores lane-aligned
    ch = params["w1"].shape[0]
    ch_pad = max(8, ((ch + 7) // 8) * 8)       # hidden channels padded to a sublane multiple

    # Batch folding: pack several images per step to amortize per-step overhead, but keep
    # >= 2 grid steps when N >= 2 so both v7x TensorCores get work.  Cap the per-step lane
    # extent so VMEM stays a few MiB on every generation (v7x has only 64 MiB physical).
    if images_per_step is None:
        images_per_step = max(1, -(-N // 2))
    max_lanes = 32 * 1024
    images_per_step = max(1, min(images_per_step, max_lanes // sp))
    n_steps = -(-N // images_per_step)
    Nb = n_steps * images_per_step
    L = images_per_step * sp

    def flatten_pad(a):                        # (N, H, W) -> (n_steps, 1, L)
        ap = jnp.pad(a, ((0, 0), (1, 1), (1, 1)))                  # zero border = conv padding
        af = ap.reshape(N, sp_valid)
        af = jnp.pad(af, ((0, Nb - N), (0, sp - sp_valid)))        # batch pad + zero lane tail
        return af.reshape(n_steps, 1, L)

    xf = flatten_pad(x[:, 0])
    mf = flatten_pad(corr_mask_conv[:, 0])     # zero border doubles as the conv zero-padding

    w1k, b1k, w2k, b2k, w3k, b3k = _to_kernel_weights(params, ch_pad)

    # flattened-index shift of tap (kh, kw) on the padded grid
    shifts = tuple((kh - 1) * Wp + (kw - 1) for kh in range(3) for kw in range(3))

    kernel = functools.partial(_fused_kernel, L=L, pad=pad, shifts=shifts, ch_pad=ch_pad)

    out_flat = pl.pallas_call(
        kernel,
        out_shape=jax.ShapeDtypeStruct((n_steps, 1, L), x.dtype),
        grid=(n_steps,),
        in_specs=[
            pl.BlockSpec((1, 1, L), lambda n: (n, 0, 0)),              # x
            pl.BlockSpec((1, 1, L), lambda n: (n, 0, 0)),              # mask
            pl.BlockSpec((ch_pad, 9), lambda n: (0, 0)),               # w1
            pl.BlockSpec((ch_pad, 1), lambda n: (0, 0)),               # b1
            pl.BlockSpec((9, ch_pad, ch_pad), lambda n: (0, 0, 0)),    # w2 (per tap)
            pl.BlockSpec((ch_pad, 1), lambda n: (0, 0)),               # b2
            pl.BlockSpec((9, 8, ch_pad), lambda n: (0, 0, 0)),         # w3 (per tap)
            pl.BlockSpec((8, 1), lambda n: (0, 0)),                    # b3
        ],
        out_specs=pl.BlockSpec((1, 1, L), lambda n: (n, 0, 0)),
        scratch_shapes=[pltpu.VMEM((ch_pad, pad + L + pad), jnp.float32)],
        compiler_params=pltpu.CompilerParams(
            dimension_semantics=("parallel",)),                        # v7x: steps across 2 TCs
    )(xf, mf, w1k, b1k, w2k, b2k, w3k, b3k)

    out = out_flat.reshape(Nb, sp)[:N, :sp_valid]
    out = out.reshape(N, Hp, Wp)[:, 1:Hp - 1, 1:Wp - 1]
    return out.reshape(N, 1, H, W)


def init_params(key, ch_hidden=10):
    """Deterministic synthetic params in PyTorch layout: (Cout, Cin, 3, 3) + (Cout,)."""
    ks = jax.random.split(key, 6)

    def mk_w(k, co, ci):
        bound = 1.0 / np.sqrt(ci * 9)
        return jax.random.uniform(k, (co, ci, 3, 3), jnp.float32, -bound, bound)

    def mk_b(k, co, ci):
        bound = 1.0 / np.sqrt(ci * 9)
        return jax.random.uniform(k, (co,), jnp.float32, -bound, bound)

    return {
        "w1": mk_w(ks[0], ch_hidden, 1), "b1": mk_b(ks[1], ch_hidden, 1),
        "w2": mk_w(ks[2], ch_hidden, ch_hidden), "b2": mk_b(ks[3], ch_hidden, ch_hidden),
        "w3": mk_w(ks[4], 1, ch_hidden), "b3": mk_b(ks[5], 1, ch_hidden),
    }


# ---------------- pure-JAX reference (matches the PyTorch module, NCHW) ----------------
def _conv_ref_layer(x, w, b, mask):
    y = jax.lax.conv_general_dilated(
        x, w, window_strides=(1, 1), padding=((1, 1), (1, 1)),
        dimension_numbers=("NCHW", "OIHW", "NCHW"))
    y = jnp.maximum(y + b[None, :, None, None], 0.0)
    return y * mask


def nc_conv2d_masked_ref(x, mask, params):
    h = _conv_ref_layer(x, params["w1"], params["b1"], mask)
    h = _conv_ref_layer(h, params["w2"], params["b2"], mask)
    h = _conv_ref_layer(h, params["w3"], params["b3"], mask)
    return h


if __name__ == "__main__":
    key = jax.random.PRNGKey(0)
    k_param, k_x, k_m = jax.random.split(key, 3)

    N, H, W = 2, 16, 16
    ch_hidden = 10

    params = init_params(k_param, ch_hidden=ch_hidden)

    # PyTorch-equivalent NCHW inputs.
    x = jax.random.normal(k_x, (N, 1, H, W), jnp.float32)
    corr_mask = (jax.random.uniform(k_m, (N, 1, H, W)) > 0.5).astype(jnp.float32)

    fwd = jax.jit(nc_conv2d_masked)
    out = jax.block_until_ready(fwd(x, corr_mask, params))

    ref = nc_conv2d_masked_ref(x, corr_mask, params)
    np.testing.assert_allclose(np.asarray(out), np.asarray(ref), rtol=2e-5, atol=2e-5)

    assert out.shape == (N, 1, H, W)
    print("KERNEL_OK")
</pallas_src>

<mosaic_0001>
module attributes {stable_mosaic.version = 11 : i64} {
  func.func @_fused_kernel(%arg0: i32, %arg1: memref<1x1x384xf32, #tpu.memory_space<vmem>>, %arg2: memref<1x1x384xf32, #tpu.memory_space<vmem>>, %arg3: memref<16x9xf32, #tpu.memory_space<vmem>>, %arg4: memref<16x1xf32, #tpu.memory_space<vmem>>, %arg5: memref<9x16x16xf32, #tpu.memory_space<vmem>>, %arg6: memref<16x1xf32, #tpu.memory_space<vmem>>, %arg7: memref<9x8x16xf32, #tpu.memory_space<vmem>>, %arg8: memref<8x1xf32, #tpu.memory_space<vmem>>, %arg9: memref<1x1x384xf32, #tpu.memory_space<vmem>>, %arg10: memref<16x640xf32, #tpu.memory_space<vmem>>) attributes {dimension_semantics = [#tpu.dimension_semantics<parallel>], iteration_bounds = array<i64: 2>, scalar_prefetch = 0 : i64, scratch_operands = 1 : i64, tpu.core_type = #tpu.core_type<tc>, window_params = [{transform_indices = @transform_0, window_bounds = array<i64: 1, 1, 384>}, {transform_indices = @transform_1, window_bounds = array<i64: 1, 1, 384>}, {pipeline_mode = #tpu.pipeline_mode<synchronous>, transform_indices = @transform_2, window_bounds = array<i64: 16, 9>}, {pipeline_mode = #tpu.pipeline_mode<synchronous>, transform_indices = @transform_3, window_bounds = array<i64: 16, 1>}, {pipeline_mode = #tpu.pipeline_mode<synchronous>, transform_indices = @transform_4, window_bounds = array<i64: 9, 16, 16>}, {pipeline_mode = #tpu.pipeline_mode<synchronous>, transform_indices = @transform_5, window_bounds = array<i64: 16, 1>}, {pipeline_mode = #tpu.pipeline_mode<synchronous>, transform_indices = @transform_6, window_bounds = array<i64: 9, 8, 16>}, {pipeline_mode = #tpu.pipeline_mode<synchronous>, transform_indices = @transform_7, window_bounds = array<i64: 8, 1>}, {transform_indices = @transform_8, window_bounds = array<i64: 1, 1, 384>}]} {
    %c0 = arith.constant 0 : index
    %c0_0 = arith.constant 0 : index
    %c0_1 = arith.constant 0 : index
    %0 = vector.load %arg2[%c0, %c0_0, %c0_1] : memref<1x1x384xf32, #tpu.memory_space<vmem>>, vector<1x1x384xf32>
    %1 = vector.shape_cast %0 : vector<1x1x384xf32> to vector<1x384xf32>
    %2 = vector.shape_cast %1 : vector<1x384xf32> to vector<1x384xf32>
    %3 = vector.broadcast %2 : vector<1x384xf32> to vector<16x384xf32>
    %cst = arith.constant 0.000000e+00 : f32
    %4 = vector.broadcast %cst : f32 to vector<16x128xf32>
    %c0_2 = arith.constant 0 : index
    %c0_3 = arith.constant 0 : index
    %5 = vector.load %arg10[%c0_2, %c0_3] : memref<16x640xf32, #tpu.memory_space<vmem>>, vector<16x128xf32>
    tpu.vector_store %arg10[%c0_2, %c0_3], %4 {strides = array<i32>} : memref<16x640xf32, #tpu.memory_space<vmem>>, vector<16x128xf32>,
    %c0_4 = arith.constant 0 : index
    %c512 = arith.constant 512 : index
    %6 = vector.load %arg10[%c0_4, %c512] : memref<16x640xf32, #tpu.memory_space<vmem>>, vector<16x128xf32>
    tpu.vector_store %arg10[%c0_4, %c512], %4 {strides = array<i32>} : memref<16x640xf32, #tpu.memory_space<vmem>>, vector<16x128xf32>,
    %c0_5 = arith.constant 0 : index
    %c0_6 = arith.constant 0 : index
    %c0_7 = arith.constant 0 : index
    %7 = vector.load %arg1[%c0_5, %c0_6, %c0_7] : memref<1x1x384xf32, #tpu.memory_space<vmem>>, vector<1x1x384xf32>
    %8 = vector.shape_cast %7 : vector<1x1x384xf32> to vector<1x384xf32>
    %9 = vector.shape_cast %8 : vector<1x384xf32> to vector<1x384xf32>
    %10 = vector.broadcast %9 : vector<1x384xf32> to vector<16x384xf32>
    %c0_8 = arith.constant 0 : index
    %c128 = arith.constant 128 : index
    %11 = vector.load %arg10[%c0_8, %c128] : memref<16x640xf32, #tpu.memory_space<vmem>>, vector<16x384xf32>
    tpu.vector_store %arg10[%c0_8, %c128], %10 {strides = array<i32>} : memref<16x640xf32, #tpu.memory_space<vmem>>, vector<16x384xf32>,
    %c0_9 = arith.constant 0 : index
    %c0_10 = arith.constant 0 : index
    %12 = vector.load %arg3[%c0_9, %c0_10] : memref<16x9xf32, #tpu.memory_space<vmem>>, vector<16x9xf32>
    %cst_11 = arith.constant 0.000000e+00 : f32
    %13 = vector.broadcast %cst_11 : f32 to vector<16x384xf32>
    %14 = vector.extract_strided_slice %12 {offsets = [0, 0], sizes = [16, 1], strides = [1, 1]} : vector<16x9xf32> to vector<16x1xf32>
    %c0_12 = arith.constant 0 : index
    %c109 = arith.constant 109 : index
    %15 = vector.load %arg10[%c0_12, %c109] : memref<16x640xf32, #tpu.memory_space<vmem>>, vector<16x384xf32>
    %16 = vector.broadcast %14 : vector<16x1xf32> to vector<16x384xf32>
    %17 = arith.mulf %16, %15 : vector<16x384xf32>
    %18 = arith.addf %13, %17 : vector<16x384xf32>
    %19 = vector.extract_strided_slice %12 {offsets = [0, 1], sizes = [16, 1], strides = [1, 1]} : vector<16x9xf32> to vector<16x1xf32>
    %c0_13 = arith.constant 0 : index
    %c110 = arith.constant 110 : index
    %20 = vector.load %arg10[%c0_13, %c110] : memref<16x640xf32, #tpu.memory_space<vmem>>, vector<16x384xf32>
    %21 = vector.broadcast %19 : vector<16x1xf32> to vector<16x384xf32>
    %22 = arith.mulf %21, %20 : vector<16x384xf32>
    %23 = arith.addf %18, %22 : vector<16x384xf32>
    %24 = vector.extract_strided_slice %12 {offsets = [0, 2], sizes = [16, 1], strides = [1, 1]} : vector<16x9xf32> to vector<16x1xf32>
    %c0_14 = arith.constant 0 : index
    %c111 = arith.constant 111 : index
    %25 = vector.load %arg10[%c0_14, %c111] : memref<16x640xf32, #tpu.memory_space<vmem>>, vector<16x384xf32>
    %26 = vector.broadcast %24 : vector<16x1xf32> to vector<16x384xf32>
    %27 = arith.mulf %26, %25 : vector<16x384xf32>
    %28 = arith.addf %23, %27 : vector<16x384xf32>
    %29 = vector.extract_strided_slice %12 {offsets = [0, 3], sizes = [16, 1], strides = [1, 1]} : vector<16x9xf32> to vector<16x1xf32>
    %c0_15 = arith.constant 0 : index
    %c127 = arith.constant 127 : index
    %30 = vector.load %arg10[%c0_15, %c127] : memref<16x640xf32, #tpu.memory_space<vmem>>, vector<16x384xf32>
    %31 = vector.broadcast %29 : vector<16x1xf32> to vector<16x384xf32>
    %32 = arith.mulf %31, %30 : vector<16x384xf32>
    %33 = arith.addf %28, %32 : vector<16x384xf32>
    %34 = vector.extract_strided_slice %12 {offsets = [0, 4], sizes = [16, 1], strides = [1, 1]} : vector<16x9xf32> to vector<16x1xf32>
    %c0_16 = arith.constant 0 : index
    %c128_17 = arith.constant 128 : index
    %35 = vector.load %arg10[%c0_16, %c128_17] : memref<16x640xf32, #tpu.memory_space<vmem>>, vector<16x384xf32>
    %36 = vector.broadcast %34 : vector<16x1xf32> to vector<16x384xf32>
    %37 = arith.mulf %36, %35 : vector<16x384xf32>
    %38 = arith.addf %33, %37 : vector<16x384xf32>
    %39 = vector.extract_strided_slice %12 {offsets = [0, 5], sizes = [16, 1], strides = [1, 1]} : vector<16x9xf32> to vector<16x1xf32>
    %c0_18 = arith.constant 0 : index
    %c129 = arith.constant 129 : index
    %40 = vector.load %arg10[%c0_18, %c129] : memref<16x640xf32, #tpu.memory_space<vmem>>, vector<16x384xf32>
    %41 = vector.broadcast %39 : vector<16x1xf32> to vector<16x384xf32>
    %42 = arith.mulf %41, %40 : vector<16x384xf32>
    %43 = arith.addf %38, %42 : vector<16x384xf32>
    %44 = vector.extract_strided_slice %12 {offsets = [0, 6], sizes = [16, 1], strides = [1, 1]} : vector<16x9xf32> to vector<16x1xf32>
    %c0_19 = arith.constant 0 : index
    %c145 = arith.constant 145 : index
    %45 = vector.load %arg10[%c0_19, %c145] : memref<16x640xf32, #tpu.memory_space<vmem>>, vector<16x384xf32>
    %46 = vector.broadcast %44 : vector<16x1xf32> to vector<16x384xf32>
    %47 = arith.mulf %46, %45 : vector<16x384xf32>
    %48 = arith.addf %43, %47 : vector<16x384xf32>
    %49 = vector.extract_strided_slice %12 {offsets = [0, 7], sizes = [16, 1], strides = [1, 1]} : vector<16x9xf32> to vector<16x1xf32>
    %c0_20 = arith.constant 0 : index
    %c146 = arith.constant 146 : index
    %50 = vector.load %arg10[%c0_20, %c146] : memref<16x640xf32, #tpu.memory_space<vmem>>, vector<16x384xf32>
    %51 = vector.broadcast %49 : vector<16x1xf32> to vector<16x384xf32>
    %52 = arith.mulf %51, %50 : vector<16x384xf32>
    %53 = arith.addf %48, %52 : vector<16x384xf32>
    %54 = vector.extract_strided_slice %12 {offsets = [0, 8], sizes = [16, 1], strides = [1, 1]} : vector<16x9xf32> to vector<16x1xf32>
    %c0_21 = arith.constant 0 : index
    %c147 = arith.constant 147 : index
    %55 = vector.load %arg10[%c0_21, %c147] : memref<16x640xf32, #tpu.memory_space<vmem>>, vector<16x384xf32>
    %56 = vector.broadcast %54 : vector<16x1xf32> to vector<16x384xf32>
    %57 = arith.mulf %56, %55 : vector<16x384xf32>
    %58 = arith.addf %53, %57 : vector<16x384xf32>
    %c0_22 = arith.constant 0 : index
    %c0_23 = arith.constant 0 : index
    %59 = vector.load %arg4[%c0_22, %c0_23] : memref<16x1xf32, #tpu.memory_space<vmem>>, vector<16x1xf32>
    %60 = vector.broadcast %59 : vector<16x1xf32> to vector<16x384xf32>
    %61 = arith.addf %58, %60 : vector<16x384xf32>
    %cst_24 = arith.constant 0.000000e+00 : f32
    %62 = vector.broadcast %cst_24 : f32 to vector<16x384xf32>
    %63 = arith.maximumf %61, %62 : vector<16x384xf32>
    %64 = arith.mulf %63, %3 : vector<16x384xf32>
    %c0_25 = arith.constant 0 : index
    %c128_26 = arith.constant 128 : index
    %65 = vector.load %arg10[%c0_25, %c128_26] : memref<16x640xf32, #tpu.memory_space<vmem>>, vector<16x384xf32>
    tpu.vector_store %arg10[%c0_25, %c128_26], %64 {strides = array<i32>} : memref<16x640xf32, #tpu.memory_space<vmem>>, vector<16x384xf32>,
    %cst_27 = arith.constant 0.000000e+00 : f32
    %66 = vector.broadcast %cst_27 : f32 to vector<16x384xf32>
    %c0_28 = arith.constant 0 : index
    %c0_29 = arith.constant 0 : index
    %c0_30 = arith.constant 0 : index
    %67 = vector.load %arg5[%c0_28, %c0_29, %c0_30] : memref<9x16x16xf32, #tpu.memory_space<vmem>>, vector<1x16x16xf32>
    %68 = vector.shape_cast %67 : vector<1x16x16xf32> to vector<16x16xf32>
    %c0_31 = arith.constant 0 : index
    %c109_32 = arith.constant 109 : index
    %69 = vector.load %arg10[%c0_31, %c109_32] : memref<16x640xf32, #tpu.memory_space<vmem>>, vector<16x384xf32>
    %cst_33 = arith.constant dense<0.000000e+00> : vector<16x384xf32>
    %70 = tpu.matmul %68, %69, %cst_33 {dimension_numbers = #tpu.dot_dimension_numbers<[1], [0], [0], [1], [0, 0, 1, 1], [], []>} : vector<16x16xf32>, vector<16x384xf32>, vector<16x384xf32> -> vector<16x384xf32>
    %71 = arith.addf %66, %70 : vector<16x384xf32>
    %c1 = arith.constant 1 : index
    %c0_34 = arith.constant 0 : index
    %c0_35 = arith.constant 0 : index
    %72 = vector.load %arg5[%c1, %c0_34, %c0_35] : memref<9x16x16xf32, #tpu.memory_space<vmem>>, vector<1x16x16xf32>
    %73 = vector.shape_cast %72 : vector<1x16x16xf32> to vector<16x16xf32>
    %c0_36 = arith.constant 0 : index
    %c110_37 = arith.constant 110 : index
    %74 = vector.load %arg10[%c0_36, %c110_37] : memref<16x640xf32, #tpu.memory_space<vmem>>, vector<16x384xf32>
    %cst_38 = arith.constant dense<0.000000e+00> : vector<16x384xf32>
    %75 = tpu.matmul %73, %74, %cst_38 {dimension_numbers = #tpu.dot_dimension_numbers<[1], [0], [0], [1], [0, 0, 1, 1], [], []>} : vector<16x16xf32>, vector<16x384xf32>, vector<16x384xf32> -> vector<16x384xf32>
    %76 = arith.addf %71, %75 : vector<16x384xf32>
    %c2 = arith.constant 2 : index
    %c0_39 = arith.constant 0 : index
    %c0_40 = arith.constant 0 : index
    %77 = vector.load %arg5[%c2, %c0_39, %c0_40] : memref<9x16x16xf32, #tpu.memory_space<vmem>>, vector<1x16x16xf32>
    %78 = vector.shape_cast %77 : vector<1x16x16xf32> to vector<16x16xf32>
    %c0_41 = arith.constant 0 : index
    %c111_42 = arith.constant 111 : index
    %79 = vector.load %arg10[%c0_41, %c111_42] : memref<16x640xf32, #tpu.memory_space<vmem>>, vector<16x384xf32>
    %cst_43 = arith.constant dense<0.000000e+00> : vector<16x384xf32>
    %80 = tpu.matmul %78, %79, %cst_43 {dimension_numbers = #tpu.dot_dimension_numbers<[1], [0], [0], [1], [0, 0, 1, 1], [], []>} : vector<16x16xf32>, vector<16x384xf32>, vector<16x384xf32> -> vector<16x384xf32>
    %81 = arith.addf %76, %80 : vector<16x384xf32>
    %c3 = arith.constant 3 : index
    %c0_44 = arith.constant 0 : index
    %c0_45 = arith.constant 0 : index
    %82 = vector.load %arg5[%c3, %c0_44, %c0_45] : memref<9x16x16xf32, #tpu.memory_space<vmem>>, vector<1x16x16xf32>
    %83 = vector.shape_cast %82 : vector<1x16x16xf32> to vector<16x16xf32>
    %c0_46 = arith.constant 0 : index
    %c127_47 = arith.constant 127 : index
    %84 = vector.load %arg10[%c0_46, %c127_47] : memref<16x640xf32, #tpu.memory_space<vmem>>, vector<16x384xf32>
    %cst_48 = arith.constant dense<0.000000e+00> : vector<16x384xf32>
    %85 = tpu.matmul %83, %84, %cst_48 {dimension_numbers = #tpu.dot_dimension_numbers<[1], [0], [0], [1], [0, 0, 1, 1], [], []>} : vector<16x16xf32>, vector<16x384xf32>, vector<16x384xf32> -> vector<16x384xf32>
    %86 = arith.addf %81, %85 : vector<16x384xf32>
    %c4 = arith.constant 4 : index
    %c0_49 = arith.constant 0 : index
    %c0_50 = arith.constant 0 : index
    %87 = vector.load %arg5[%c4, %c0_49, %c0_50] : memref<9x16x16xf32, #tpu.memory_space<vmem>>, vector<1x16x16xf32>
    %88 = vector.shape_cast %87 : vector<1x16x16xf32> to vector<16x16xf32>
    %c0_51 = arith.constant 0 : index
    %c128_52 = arith.constant 128 : index
    %89 = vector.load %arg10[%c0_51, %c128_52] : memref<16x640xf32, #tpu.memory_space<vmem>>, vector<16x384xf32>
    %cst_53 = arith.constant dense<0.000000e+00> : vector<16x384xf32>
    %90 = tpu.matmul %88, %89, %cst_53 {dimension_numbers = #tpu.dot_dimension_numbers<[1], [0], [0], [1], [0, 0, 1, 1], [], []>} : vector<16x16xf32>, vector<16x384xf32>, vector<16x384xf32> -> vector<16x384xf32>
    %91 = arith.addf %86, %90 : vector<16x384xf32>
    %c5 = arith.constant 5 : index
    %c0_54 = arith.constant 0 : index
    %c0_55 = arith.constant 0 : index
    %92 = vector.load %arg5[%c5, %c0_54, %c0_55] : memref<9x16x16xf32, #tpu.memory_space<vmem>>, vector<1x16x16xf32>
    %93 = vector.shape_cast %92 : vector<1x16x16xf32> to vector<16x16xf32>
    %c0_56 = arith.constant 0 : index
    %c129_57 = arith.constant 129 : index
    %94 = vector.load %arg10[%c0_56, %c129_57] : memref<16x640xf32, #tpu.memory_space<vmem>>, vector<16x384xf32>
    %cst_58 = arith.constant dense<0.000000e+00> : vector<16x384xf32>
    %95 = tpu.matmul %93, %94, %cst_58 {dimension_numbers = #tpu.dot_dimension_numbers<[1], [0], [0], [1], [0, 0, 1, 1], [], []>} : vector<16x16xf32>, vector<16x384xf32>, vector<16x384xf32> -> vector<16x384xf32>
    %96 = arith.addf %91, %95 : vector<16x384xf32>
    %c6 = arith.constant 6 : index
    %c0_59 = arith.constant 0 : index
    %c0_60 = arith.constant 0 : index
    %97 = vector.load %arg5[%c6, %c0_59, %c0_60] : memref<9x16x16xf32, #tpu.memory_space<vmem>>, vector<1x16x16xf32>
    %98 = vector.shape_cast %97 : vector<1x16x16xf32> to vector<16x16xf32>
    %c0_61 = arith.constant 0 : index
    %c145_62 = arith.constant 145 : index
    %99 = vector.load %arg10[%c0_61, %c145_62] : memref<16x640xf32, #tpu.memory_space<vmem>>, vector<16x384xf32>
    %cst_63 = arith.constant dense<0.000000e+00> : vector<16x384xf32>
    %100 = tpu.matmul %98, %99, %cst_63 {dimension_numbers = #tpu.dot_dimension_numbers<[1], [0], [0], [1], [0, 0, 1, 1], [], []>} : vector<16x16xf32>, vector<16x384xf32>, vector<16x384xf32> -> vector<16x384xf32>
    %101 = arith.addf %96, %100 : vector<16x384xf32>
    %c7 = arith.constant 7 : index
    %c0_64 = arith.constant 0 : index
    %c0_65 = arith.constant 0 : index
    %102 = vector.load %arg5[%c7, %c0_64, %c0_65] : memref<9x16x16xf32, #tpu.memory_space<vmem>>, vector<1x16x16xf32>
    %103 = vector.shape_cast %102 : vector<1x16x16xf32> to vector<16x16xf32>
    %c0_66 = arith.constant 0 : index
    %c146_67 = arith.constant 146 : index
    %104 = vector.load %arg10[%c0_66, %c146_67] : memref<16x640xf32, #tpu.memory_space<vmem>>, vector<16x384xf32>
    %cst_68 = arith.constant dense<0.000000e+00> : vector<16x384xf32>
    %105 = tpu.matmul %103, %104, %cst_68 {dimension_numbers = #tpu.dot_dimension_numbers<[1], [0], [0], [1], [0, 0, 1, 1], [], []>} : vector<16x16xf32>, vector<16x384xf32>, vector<16x384xf32> -> vector<16x384xf32>
    %106 = arith.addf %101, %105 : vector<16x384xf32>
    %c8 = arith.constant 8 : index
    %c0_69 = arith.constant 0 : index
    %c0_70 = arith.constant 0 : index
    %107 = vector.load %arg5[%c8, %c0_69, %c0_70] : memref<9x16x16xf32, #tpu.memory_space<vmem>>, vector<1x16x16xf32>
    %108 = vector.shape_cast %107 : vector<1x16x16xf32> to vector<16x16xf32>
    %c0_71 = arith.constant 0 : index
    %c147_72 = arith.constant 147 : index
    %109 = vector.load %arg10[%c0_71, %c147_72] : memref<16x640xf32, #tpu.memory_space<vmem>>, vector<16x384xf32>
    %cst_73 = arith.constant dense<0.000000e+00> : vector<16x384xf32>
    %110 = tpu.matmul %108, %109, %cst_73 {dimension_numbers = #tpu.dot_dimension_numbers<[1], [0], [0], [1], [0, 0, 1, 1], [], []>} : vector<16x16xf32>, vector<16x384xf32>, vector<16x384xf32> -> vector<16x384xf32>
    %111 = arith.addf %106, %110 : vector<16x384xf32>
    %c0_74 = arith.constant 0 : index
    %c0_75 = arith.constant 0 : index
    %112 = vector.load %arg6[%c0_74, %c0_75] : memref<16x1xf32, #tpu.memory_space<vmem>>, vector<16x1xf32>
    %113 = vector.broadcast %112 : vector<16x1xf32> to vector<16x384xf32>
    %114 = arith.addf %111, %113 : vector<16x384xf32>
    %cst_76 = arith.constant 0.000000e+00 : f32
    %115 = vector.broadcast %cst_76 : f32 to vector<16x384xf32>
    %116 = arith.maximumf %114, %115 : vector<16x384xf32>
    %117 = arith.mulf %116, %3 : vector<16x384xf32>
    %c0_77 = arith.constant 0 : index
    %c128_78 = arith.constant 128 : index
    %118 = vector.load %arg10[%c0_77, %c128_78] : memref<16x640xf32, #tpu.memory_space<vmem>>, vector<16x384xf32>
    tpu.vector_store %arg10[%c0_77, %c128_78], %117 {strides = array<i32>} : memref<16x640xf32, #tpu.memory_space<vmem>>, vector<16x384xf32>,
    %cst_79 = arith.constant 0.000000e+00 : f32
    %119 = vector.broadcast %cst_79 : f32 to vector<8x384xf32>
    %c0_80 = arith.constant 0 : index
    %c0_81 = arith.constant 0 : index
    %c0_82 = arith.constant 0 : index
    %120 = vector.load %arg7[%c0_80, %c0_81, %c0_82] : memref<9x8x16xf32, #tpu.memory_space<vmem>>, vector<1x8x16xf32>
    %121 = vector.shape_cast %120 : vector<1x8x16xf32> to vector<8x16xf32>
    %c0_83 = arith.constant 0 : index
    %c109_84 = arith.constant 109 : index
    %122 = vector.load %arg10[%c0_83, %c109_84] : memref<16x640xf32, #tpu.memory_space<vmem>>, vector<16x384xf32>
    %cst_85 = arith.constant dense<0.000000e+00> : vector<8x384xf32>
    %123 = tpu.matmul %121, %122, %cst_85 {dimension_numbers = #tpu.dot_dimension_numbers<[1], [0], [0], [1], [0, 0, 1, 1], [], []>} : vector<8x16xf32>, vector<16x384xf32>, vector<8x384xf32> -> vector<8x384xf32>
    %124 = arith.addf %119, %123 : vector<8x384xf32>
    %c1_86 = arith.constant 1 : index
    %c0_87 = arith.constant 0 : index
    %c0_88 = arith.constant 0 : index
    %125 = vector.load %arg7[%c1_86, %c0_87, %c0_88] : memref<9x8x16xf32, #tpu.memory_space<vmem>>, vector<1x8x16xf32>
    %126 = vector.shape_cast %125 : vector<1x8x16xf32> to vector<8x16xf32>
    %c0_89 = arith.constant 0 : index
    %c110_90 = arith.constant 110 : index
    %127 = vector.load %arg10[%c0_89, %c110_90] : memref<16x640xf32, #tpu.memory_space<vmem>>, vector<16x384xf32>
    %cst_91 = arith.constant dense<0.000000e+00> : vector<8x384xf32>
    %128 = tpu.matmul %126, %127, %cst_91 {dimension_numbers = #tpu.dot_dimension_numbers<[1], [0], [0], [1], [0, 0, 1, 1], [], []>} : vector<8x16xf32>, vector<16x384xf32>, vector<8x384xf32> -> vector<8x384xf32>
    %129 = arith.addf %124, %128 : vector<8x384xf32>
    %c2_92 = arith.constant 2 : index
    %c0_93 = arith.constant 0 : index
    %c0_94 = arith.constant 0 : index
    %130 = vector.load %arg7[%c2_92, %c0_93, %c0_94] : memref<9x8x16xf32, #tpu.memory_space<vmem>>, vector<1x8x16xf32>
    %131 = vector.shape_cast %130 : vector<1x8x16xf32> to vector<8x16xf32>
    %c0_95 = arith.constant 0 : index
    %c111_96 = arith.constant 111 : index
    %132 = vector.load %arg10[%c0_95, %c111_96] : memref<16x640xf32, #tpu.memory_space<vmem>>, vector<16x384xf32>
    %cst_97 = arith.constant dense<0.000000e+00> : vector<8x384xf32>
    %133 = tpu.matmul %131, %132, %cst_97 {dimension_numbers = #tpu.dot_dimension_numbers<[1], [0], [0], [1], [0, 0, 1, 1], [], []>} : vector<8x16xf32>, vector<16x384xf32>, vector<8x384xf32> -> vector<8x384xf32>
    %134 = arith.addf %129, %133 : vector<8x384xf32>
    %c3_98 = arith.constant 3 : index
    %c0_99 = arith.constant 0 : index
    %c0_100 = arith.constant 0 : index
    %135 = vector.load %arg7[%c3_98, %c0_99, %c0_100] : memref<9x8x16xf32, #tpu.memory_space<vmem>>, vector<1x8x16xf32>
    %136 = vector.shape_cast %135 : vector<1x8x16xf32> to vector<8x16xf32>
    %c0_101 = arith.constant 0 : index
    %c127_102 = arith.constant 127 : index
    %137 = vector.load %arg10[%c0_101, %c127_102] : memref<16x640xf32, #tpu.memory_space<vmem>>, vector<16x384xf32>
    %cst_103 = arith.constant dense<0.000000e+00> : vector<8x384xf32>
    %138 = tpu.matmul %136, %137, %cst_103 {dimension_numbers = #tpu.dot_dimension_numbers<[1], [0], [0], [1], [0, 0, 1, 1], [], []>} : vector<8x16xf32>, vector<16x384xf32>, vector<8x384xf32> -> vector<8x384xf32>
    %139 = arith.addf %134, %138 : vector<8x384xf32>
    %c4_104 = arith.constant 4 : index
    %c0_105 = arith.constant 0 : index
    %c0_106 = arith.constant 0 : index
    %140 = vector.load %arg7[%c4_104, %c0_105, %c0_106] : memref<9x8x16xf32, #tpu.memory_space<vmem>>, vector<1x8x16xf32>
    %141 = vector.shape_cast %140 : vector<1x8x16xf32> to vector<8x16xf32>
    %c0_107 = arith.constant 0 : index
    %c128_108 = arith.constant 128 : index
    %142 = vector.load %arg10[%c0_107, %c128_108] : memref<16x640xf32, #tpu.memory_space<vmem>>, vector<16x384xf32>
    %cst_109 = arith.constant dense<0.000000e+00> : vector<8x384xf32>
    %143 = tpu.matmul %141, %142, %cst_109 {dimension_numbers = #tpu.dot_dimension_numbers<[1], [0], [0], [1], [0, 0, 1, 1], [], []>} : vector<8x16xf32>, vector<16x384xf32>, vector<8x384xf32> -> vector<8x384xf32>
    %144 = arith.addf %139, %143 : vector<8x384xf32>
    %c5_110 = arith.constant 5 : index
    %c0_111 = arith.constant 0 : index
    %c0_112 = arith.constant 0 : index
    %145 = vector.load %arg7[%c5_110, %c0_111, %c0_112] : memref<9x8x16xf32, #tpu.memory_space<vmem>>, vector<1x8x16xf32>
    %146 = vector.shape_cast %145 : vector<1x8x16xf32> to vector<8x16xf32>
    %c0_113 = arith.constant 0 : index
    %c129_114 = arith.constant 129 : index
    %147 = vector.load %arg10[%c0_113, %c129_114] : memref<16x640xf32, #tpu.memory_space<vmem>>, vector<16x384xf32>
    %cst_115 = arith.constant dense<0.000000e+00> : vector<8x384xf32>
    %148 = tpu.matmul %146, %147, %cst_115 {dimension_numbers = #tpu.dot_dimension_numbers<[1], [0], [0], [1], [0, 0, 1, 1], [], []>} : vector<8x16xf32>, vector<16x384xf32>, vector<8x384xf32> -> vector<8x384xf32>
    %149 = arith.addf %144, %148 : vector<8x384xf32>
    %c6_116 = arith.constant 6 : index
    %c0_117 = arith.constant 0 : index
    %c0_118 = arith.constant 0 : index
    %150 = vector.load %arg7[%c6_116, %c0_117, %c0_118] : memref<9x8x16xf32, #tpu.memory_space<vmem>>, vector<1x8x16xf32>
    %151 = vector.shape_cast %150 : vector<1x8x16xf32> to vector<8x16xf32>
    %c0_119 = arith.constant 0 : index
    %c145_120 = arith.constant 145 : index
    %152 = vector.load %arg10[%c0_119, %c145_120] : memref<16x640xf32, #tpu.memory_space<vmem>>, vector<16x384xf32>
    %cst_121 = arith.constant dense<0.000000e+00> : vector<8x384xf32>
    %153 = tpu.matmul %151, %152, %cst_121 {dimension_numbers = #tpu.dot_dimension_numbers<[1], [0], [0], [1], [0, 0, 1, 1], [], []>} : vector<8x16xf32>, vector<16x384xf32>, vector<8x384xf32> -> vector<8x384xf32>
    %154 = arith.addf %149, %153 : vector<8x384xf32>
    %c7_122 = arith.constant 7 : index
    %c0_123 = arith.constant 0 : index
    %c0_124 = arith.constant 0 : index
    %155 = vector.load %arg7[%c7_122, %c0_123, %c0_124] : memref<9x8x16xf32, #tpu.memory_space<vmem>>, vector<1x8x16xf32>
    %156 = vector.shape_cast %155 : vector<1x8x16xf32> to vector<8x16xf32>
    %c0_125 = arith.constant 0 : index
    %c146_126 = arith.constant 146 : index
    %157 = vector.load %arg10[%c0_125, %c146_126] : memref<16x640xf32, #tpu.memory_space<vmem>>, vector<16x384xf32>
    %cst_127 = arith.constant dense<0.000000e+00> : vector<8x384xf32>
    %158 = tpu.matmul %156, %157, %cst_127 {dimension_numbers = #tpu.dot_dimension_numbers<[1], [0], [0], [1], [0, 0, 1, 1], [], []>} : vector<8x16xf32>, vector<16x384xf32>, vector<8x384xf32> -> vector<8x384xf32>
    %159 = arith.addf %154, %158 : vector<8x384xf32>
    %c8_128 = arith.constant 8 : index
    %c0_129 = arith.constant 0 : index
    %c0_130 = arith.constant 0 : index
    %160 = vector.load %arg7[%c8_128, %c0_129, %c0_130] : memref<9x8x16xf32, #tpu.memory_space<vmem>>, vector<1x8x16xf32>
    %161 = vector.shape_cast %160 : vector<1x8x16xf32> to vector<8x16xf32>
    %c0_131 = arith.constant 0 : index
    %c147_132 = arith.constant 147 : index
    %162 = vector.load %arg10[%c0_131, %c147_132] : memref<16x640xf32, #tpu.memory_space<vmem>>, vector<16x384xf32>
    %cst_133 = arith.constant dense<0.000000e+00> : vector<8x384xf32>
    %163 = tpu.matmul %161, %162, %cst_133 {dimension_numbers = #tpu.dot_dimension_numbers<[1], [0], [0], [1], [0, 0, 1, 1], [], []>} : vector<8x16xf32>, vector<16x384xf32>, vector<8x384xf32> -> vector<8x384xf32>
    %164 = arith.addf %159, %163 : vector<8x384xf32>
    %c0_134 = arith.constant 0 : index
    %c0_135 = arith.constant 0 : index
    %165 = vector.load %arg8[%c0_134, %c0_135] : memref<8x1xf32, #tpu.memory_space<vmem>>, vector<8x1xf32>
    %166 = vector.extract_strided_slice %164 {offsets = [0, 0], sizes = [1, 384], strides = [1, 1]} : vector<8x384xf32> to vector<1x384xf32>
    %167 = vector.extract_strided_slice %165 {offsets = [0, 0], sizes = [1, 1], strides = [1, 1]} : vector<8x1xf32> to vector<1x1xf32>
    %168 = vector.broadcast %167 : vector<1x1xf32> to vector<1x384xf32>
    %169 = arith.addf %166, %168 : vector<1x384xf32>
    %cst_136 = arith.constant 0.000000e+00 : f32
    %170 = vector.broadcast %cst_136 : f32 to vector<1x384xf32>
    %171 = arith.maximumf %169, %170 : vector<1x384xf32>
    %172 = arith.mulf %171, %1 : vector<1x384xf32>
    %c0_137 = arith.constant 0 : index
    %c0_138 = arith.constant 0 : index
    %c0_139 = arith.constant 0 : index
    %173 = vector.load %arg9[%c0_137, %c0_138, %c0_139] : memref<1x1x384xf32, #tpu.memory_space<vmem>>, vector<1x1x384xf32>
    %174 = vector.shape_cast %173 : vector<1x1x384xf32> to vector<1x384xf32>
    %175 = vector.shape_cast %172 : vector<1x384xf32> to vector<1x1x384xf32>
    tpu.vector_store %arg9[%c0_137, %c0_138, %c0_139], %175 {strides = array<i32>} : memref<1x1x384xf32, #tpu.memory_space<vmem>>, vector<1x1x384xf32>,
    return
  }
  func.func @transform_0(%arg0: i32) -> (i32, i32, i32) {
    %c0_i32 = arith.constant 0 : i32
    %c0_i32_0 = arith.constant 0 : i32
    %c0_i32_1 = arith.constant 0 : i32
    return %arg0, %c0_i32, %c0_i32_0 : i32, i32, i32
  }
  func.func @transform_1(%arg0: i32) -> (i32, i32, i32) {
    %c0_i32 = arith.constant 0 : i32
    %c0_i32_0 = arith.constant 0 : i32
    %c0_i32_1 = arith.constant 0 : i32
    return %arg0, %c0_i32, %c0_i32_0 : i32, i32, i32
  }
  func.func @transform_2(%arg0: i32) -> (i32, i32) {
    %c0_i32 = arith.constant 0 : i32
    %c0_i32_0 = arith.constant 0 : i32
    %c0_i32_1 = arith.constant 0 : i32
    return %c0_i32, %c0_i32_0 : i32, i32
  }
  func.func @transform_3(%arg0: i32) -> (i32, i32) {
    %c0_i32 = arith.constant 0 : i32
    %c0_i32_0 = arith.constant 0 : i32
    %c0_i32_1 = arith.constant 0 : i32
    return %c0_i32, %c0_i32_0 : i32, i32
  }
  func.func @transform_4(%arg0: i32) -> (i32, i32, i32) {
    %c0_i32 = arith.constant 0 : i32
    %c0_i32_0 = arith.constant 0 : i32
    %c0_i32_1 = arith.constant 0 : i32
    %c0_i32_2 = arith.constant 0 : i32
    return %c0_i32, %c0_i32_0, %c0_i32_1 : i32, i32, i32
  }
  func.func @transform_5(%arg0: i32) -> (i32, i32) {
    %c0_i32 = arith.constant 0 : i32
    %c0_i32_0 = arith.constant 0 : i32
    %c0_i32_1 = arith.constant 0 : i32
    return %c0_i32, %c0_i32_0 : i32, i32
  }
  func.func @transform_6(%arg0: i32) -> (i32, i32, i32) {
    %c0_i32 = arith.constant 0 : i32
    %c0_i32_0 = arith.constant 0 : i32
    %c0_i32_1 = arith.constant 0 : i32
    %c0_i32_2 = arith.constant 0 : i32
    return %c0_i32, %c0_i32_0, %c0_i32_1 : i32, i32, i32
  }
  func.func @transform_7(%arg0: i32) -> (i32, i32) {
    %c0_i32 = arith.constant 0 : i32
    %c0_i32_0 = arith.constant 0 : i32
    %c0_i32_1 = arith.constant 0 : i32
    return %c0_i32, %c0_i32_0 : i32, i32
  }
  func.func @transform_8(%arg0: i32) -> (i32, i32, i32) {
    %c0_i32 = arith.constant 0 : i32
    %c0_i32_0 = arith.constant 0 : i32
    %c0_i32_1 = arith.constant 0 : i32
    return %arg0, %c0_i32, %c0_i32_0 : i32, i32, i32
  }
}

</mosaic_0001>

<llo_original>
// kernel: squeeze.5
$region0: #{squeeze.5}
  %s0 = inlined_call_operand.vmem [shape: f32[10,3,3], index: 0, kind: input, shape index: {}]
  %s1 = inlined_call_operand.vmem [shape: f32[10,9], index: 1, kind: output, shape index: {}]
  $region1: #{squeeze.5} parent=0
    #allocation0 [shape = 'u8[12288]{0}', space=vmem, size = 0x3000, scoped, tag = 'scoped mem for input reshape']
    %s3 = sshll.u32 1, 4
    %s4 = ssub.s32 %s3, 1
    %s5 = smul.addr 4, 2
    %s6 = scalar_lea.vmem %s0, %s5
    %v7 = vld [vmem:[%s6] sm:%s4]
    %s8 = scalar_lea.vmem [#allocation0], 16
    %9 = vst [vmem:[%s8] sm:%s4] %v7
    %s10 = scalar_lea.vmem %s0, 4
    %v11 = vld [vmem:[%s10] sm:%s4]
    %s12 = scalar_lea.vmem [#allocation0], 8
    %13 = vst [vmem:[%s12] sm:%s4] %v11
    %v14 = vld [vmem:[%s0] sm:%s4]
    %15 = vst [vmem:[#allocation0] sm:%s4] %v14
    %v16 = vld [vmem:[#allocation0] sm:$0x7]
    %vm17 = vcmask 80896
    %18 = vst.msk [vmem:[%s1] sm:$0x7] %vm17, %v16
    %s19 = scalar_lea.vmem [#allocation0], 8
    %v20 = vld [vmem:[%s19] sm:$0x7]
    %vm21 = vcmask 80896
    %s22 = scalar_lea.vmem %s1, 3
    %23 = vst.msk [vmem:[%s22] sm:$0x7] %vm21, %v20
    %s24 = scalar_lea.vmem [#allocation0], 16
    %v25 = vld [vmem:[%s24] sm:$0x7]
    %vm26 = vcmask 80896
    %s27 = scalar_lea.vmem %s1, 6
    %28 = vst.msk [vmem:[%s27] sm:$0x7] %vm26, %v25

// kernel: nc_conv2d_masked.1
$region0: #{nc_conv2d_masked.1}
  #allocation0 [shape = 'u32[]', space=smem, size = 0x4, offset = 0x4, fixed_abs, tag = 'smem constant byte address 0x4 - core index']
  #allocation1 [shape = 'u32[144,128]{1,0:T(1,128)}', space=vmem, size = 0x12000, scoped, tag = 'internal scratch']
  #allocation2 [shape = 'f32[16,640]{1,0:T(8,128)}', space=vmem, size = 0xa000, scoped, tag = 'scratch operand']
  %s0 = inlined_call_operand.vmem [shape: f32[2,1,384], index: 0, kind: input, shape index: {}]
  %s1 = inlined_call_operand.vmem [shape: f32[2,1,384], index: 1, kind: input, shape index: {}]
  %s2 = inlined_call_operand.vmem [shape: f32[16,9], index: 2, kind: input, shape index: {}]
  %s3 = inlined_call_operand.vmem [shape: f32[16,1], index: 3, kind: input, shape index: {}]
  %s4 = inlined_call_operand.vmem [shape: f32[9,16,16], index: 4, kind: input, shape index: {}]
  %s5 = inlined_call_operand.vmem [shape: f32[16,1], index: 5, kind: input, shape index: {}]
  %s6 = inlined_call_operand.vmem [shape: f32[9,8,16], index: 6, kind: input, shape index: {}]
  %s7 = inlined_call_operand.vmem [shape: f32[8,1], index: 7, kind: input, shape index: {}]
  %s8 = inlined_call_operand.vmem [shape: f32[2,1,384], index: 8, kind: output, shape index: {}]
  %s9 = sld [smem:[#allocation0]]
  $region65: #{nc_conv2d_masked.1} parent=0
    _
  %s11 = ssub.s32 1, %s9
  %s12 = scalar_select 0, %s11, %s9
  loop: start=0, step=1, limit=4
  $region2: #{nc_conv2d_masked.1} parent=0 // loop_pre_header
    _
  $region3: #{nc_conv2d_masked.1} parent=0 // loop_header
    %s14 = sphi 0, %s18
    %p15 = scmp.ge.s32.totalorder %s14, 4
    %s24 = sphi 0, %s26
    %s27 = sphi 0, %s24
    %s28 = sphi 0, %s27
    %s44 = sphi 0, %s28
    %s50 = sphi 0, %s52
    %s53 = sphi 0, %s50
    %s54 = sphi 0, %s53
    %s70 = sphi 0, %s54
    %s74 = sphi 0, %s74
    %s76 = sphi 0, %s74
    %s77 = sphi 0, %s76
    %s91 = sphi 0, %s77
    %s95 = sphi 0, %s95
    %s97 = sphi 0, %s95
    %s98 = sphi 0, %s97
    %s112 = sphi 0, %s98
    %s116 = sphi 0, %s116
    %s118 = sphi 0, %s116
    %s119 = sphi 0, %s118
    %s133 = sphi 0, %s119
    %s137 = sphi 0, %s137
    %s139 = sphi 0, %s137
    %s140 = sphi 0, %s139
    %s154 = sphi 0, %s140
    %s158 = sphi 0, %s158
    %s160 = sphi 0, %s158
    %s161 = sphi 0, %s160
    %s175 = sphi 0, %s161
    %s179 = sphi 0, %s179
    %s181 = sphi 0, %s179
    %s182 = sphi 0, %s181
    %s196 = sphi 0, %s182
    %s202 = sphi 0, %s204
    %s205 = sphi 0, %s202
    %s206 = sphi 0, %s205
    %s222 = sphi 0, %s206
  $region4: #{nc_conv2d_masked.1} parent=0 // loop_header_branch
    %17 = sbr.rel (%p15) target = $region8
  $region5: #{nc_conv2d_masked.1} parent=0 // loop_body
    %s19 = ssub.s32 %s14, 1
    %s20 = ssub.s32 %s14, 2
    %s21 = sadd.s32 %s14, 1
    %s22 = ssub.s32 %s14, %s21
    %p23 = scmp.eq.s32.totalorder %s22, 0
    %s25 = sadd.s32 %s24, 1
    %s26 = scalar_select %p23, %s24, %s25
    %p29 = pneg %p23
    %p30 = scmp.eq.s32.totalorder %s14, 1
    %p31 = por %p29, %p30
    %p32 = scmp.ne.s32.totalorder %s24, %s27
    %p33 = scmp.eq.s32.totalorder %s14, 0
    %p34 = por %p32, %p33
    %p35 = scmp.ne.s32.totalorder %s24, %s27
    %p36 = scmp.eq.s32.totalorder %s19, 1
    %p37 = por %p35, %p36
    %p38 = scmp.ne.s32.totalorder %s27, %s28
    %p39 = scmp.eq.s32.totalorder %s19, 0
    %p40 = por %p38, %p39
    %p41 = scmp.ne.s32.totalorder %s27, %s28
    %p42 = scmp.eq.s32.totalorder %s20, 1
    %p43 = por %p41, %p42
    %p45 = scmp.ne.s32.totalorder %s28, %s44
    %p46 = scmp.eq.s32.totalorder %s20, 0
    %p47 = por %p45, %p46
    %s48 = ssub.s32 %s14, %s21
    %p49 = scmp.eq.s32.totalorder %s48, 0
    %s51 = sadd.s32 %s50, 1
    %s52 = scalar_select %p49, %s50, %s51
    %p55 = pneg %p49
    %p56 = scmp.eq.s32.totalorder %s14, 1
    %p57 = por %p55, %p56
    %p58 = scmp.ne.s32.totalorder %s50, %s53
    %p59 = scmp.eq.s32.totalorder %s14, 0
    %p60 = por %p58, %p59
    %p61 = scmp.ne.s32.totalorder %s50, %s53
    %p62 = scmp.eq.s32.totalorder %s19, 1
    %p63 = por %p61, %p62
    %p64 = scmp.ne.s32.totalorder %s53, %s54
    %p65 = scmp.eq.s32.totalorder %s19, 0
    %p66 = por %p64, %p65
    %p67 = scmp.ne.s32.totalorder %s53, %s54
    %p68 = scmp.eq.s32.totalorder %s20, 1
    %p69 = por %p67, %p68
    %p71 = scmp.ne.s32.totalorder %s54, %s70
    %p72 = scmp.eq.s32.totalorder %s20, 0
    %p73 = por %p71, %p72
    %s75 = sadd.s32 %s74, 1
    %p78 = scmp.eq.s32.totalorder %s14, 1
    %p79 = scmp.ne.s32.totalorder %s74, %s76
    %p80 = scmp.eq.s32.totalorder %s14, 0
    %p81 = por %p79, %p80
    %p82 = scmp.ne.s32.totalorder %s74, %s76
    %p83 = scmp.eq.s32.totalorder %s19, 1
    %p84 = por %p82, %p83
    %p85 = scmp.ne.s32.totalorder %s76, %s77
    %p86 = scmp.eq.s32.totalorder %s19, 0
    %p87 = por %p85, %p86
    %p88 = scmp.ne.s32.totalorder %s76, %s77
    %p89 = scmp.eq.s32.totalorder %s20, 1
    %p90 = por %p88, %p89
    %p92 = scmp.ne.s32.totalorder %s77, %s91
    %p93 = scmp.eq.s32.totalorder %s20, 0
    %p94 = por %p92, %p93
    %s96 = sadd.s32 %s95, 1
    %p99 = scmp.eq.s32.totalorder %s14, 1
    %p100 = scmp.ne.s32.totalorder %s95, %s97
    %p101 = scmp.eq.s32.totalorder %s14, 0
    %p102 = por %p100, %p101
    %p103 = scmp.ne.s32.totalorder %s95, %s97
    %p104 = scmp.eq.s32.totalorder %s19, 1
    %p105 = por %p103, %p104
    %p106 = scmp.ne.s32.totalorder %s97, %s98
    %p107 = scmp.eq.s32.totalorder %s19, 0
    %p108 = por %p106, %p107
    %p109 = scmp.ne.s32.totalorder %s97, %s98
    %p110 = scmp.eq.s32.totalorder %s20, 1
    %p111 = por %p109, %p110
    %p113 = scmp.ne.s32.totalorder %s98, %s112
    %p114 = scmp.eq.s32.totalorder %s20, 0
    %p115 = por %p113, %p114
    %s117 = sadd.s32 %s116, 1
    %p120 = scmp.eq.s32.totalorder %s14, 1
    %p121 = scmp.ne.s32.totalorder %s116, %s118
    %p122 = scmp.eq.s32.totalorder %s14, 0
    %p123 = por %p121, %p122
    %p124 = scmp.ne.s32.totalorder %s116, %s118
    %p125 = scmp.eq.s32.totalorder %s19, 1
    %p126 = por %p124, %p125
    %p127 = scmp.ne.s32.totalorder %s118, %s119
    %p128 = scmp.eq.s32.totalorder %s19, 0
    %p129 = por %p127, %p128
    %p130 = scmp.ne.s32.totalorder %s118, %s119
    %p131 = scmp.eq.s32.totalorder %s20, 1
    %p132 = por %p130, %p131
    %p134 = scmp.ne.s32.totalorder %s119, %s133
    %p135 = scmp.eq.s32.totalorder %s20, 0
    %p136 = por %p134, %p135
    %s138 = sadd.s32 %s137, 1
    %p141 = scmp.eq.s32.totalorder %s14, 1
    %p142 = scmp.ne.s32.totalorder %s137, %s139
    %p143 = scmp.eq.s32.totalorder %s14, 0
    %p144 = por %p142, %p143
    %p145 = scmp.ne.s32.totalorder %s137, %s139
    %p146 = scmp.eq.s32.totalorder %s19, 1
    %p147 = por %p145, %p146
    %p148 = scmp.ne.s32.totalorder %s139, %s140
    %p149 = scmp.eq.s32.totalorder %s19, 0
    %p150 = por %p148, %p149
    %p151 = scmp.ne.s32.totalorder %s139, %s140
    %p152 = scmp.eq.s32.totalorder %s20, 1
    %p153 = por %p151, %p152
    %p155 = scmp.ne.s32.totalorder %s140, %s154
    %p156 = scmp.eq.s32.totalorder %s20, 0
    %p157 = por %p155, %p156
    %s159 = sadd.s32 %s158, 1
    %p162 = scmp.eq.s32.totalorder %s14, 1
    %p163 = scmp.ne.s32.totalorder %s158, %s160
    %p164 = scmp.eq.s32.totalorder %s14, 0
    %p165 = por %p163, %p164
    %p166 = scmp.ne.s32.totalorder %s158, %s160
    %p167 = scmp.eq.s32.totalorder %s19, 1
    %p168 = por %p166, %p167
    %p169 = scmp.ne.s32.totalorder %s160, %s161
    %p170 = scmp.eq.s32.totalorder %s19, 0
    %p171 = por %p169, %p170
    %p172 = scmp.ne.s32.totalorder %s160, %s161
    %p173 = scmp.eq.s32.totalorder %s20, 1
    %p174 = por %p172, %p173
    %p176 = scmp.ne.s32.totalorder %s161, %s175
    %p177 = scmp.eq.s32.totalorder %s20, 0
    %p178 = por %p176, %p177
    %s180 = sadd.s32 %s179, 1
    %p183 = scmp.eq.s32.totalorder %s14, 1
    %p184 = scmp.ne.s32.totalorder %s179, %s181
    %p185 = scmp.eq.s32.totalorder %s14, 0
    %p186 = por %p184, %p185
    %p187 = scmp.ne.s32.totalorder %s179, %s181
    %p188 = scmp.eq.s32.totalorder %s19, 1
    %p189 = por %p187, %p188
    %p190 = scmp.ne.s32.totalorder %s181, %s182
    %p191 = scmp.eq.s32.totalorder %s19, 0
    %p192 = por %p190, %p191
    %p193 = scmp.ne.s32.totalorder %s181, %s182
    %p194 = scmp.eq.s32.totalorder %s20, 1
    %p195 = por %p193, %p194
    %p197 = scmp.ne.s32.totalorder %s182, %s196
    %p198 = scmp.eq.s32.totalorder %s20, 0
    %p199 = por %p197, %p198
    %s200 = ssub.s32 %s14, %s21
    %p201 = scmp.eq.s32.totalorder %s200, 0
    %s203 = sadd.s32 %s202, 1
    %s204 = scalar_select %p201, %s202, %s203
    %p207 = pneg %p201
    %p208 = scmp.eq.s32.totalorder %s14, 1
    %p209 = por %p207, %p208
    %p210 = scmp.ne.s32.totalorder %s202, %s205
    %p211 = scmp.eq.s32.totalorder %s14, 0
    %p212 = por %p210, %p211
    %p213 = scmp.ne.s32.totalorder %s202, %s205
    %p214 = scmp.eq.s32.totalorder %s19, 1
    %p215 = por %p213, %p214
    %p216 = scmp.ne.s32.totalorder %s205, %s206
    %p217 = scmp.eq.s32.totalorder %s19, 0
    %p218 = por %p216, %p217
    %p219 = scmp.ne.s32.totalorder %s205, %s206
    %p220 = scmp.eq.s32.totalorder %s20, 1
    %p221 = por %p219, %p220
    %p223 = scmp.ne.s32.totalorder %s206, %s222
    %p224 = scmp.eq.s32.totalorder %s20, 0
    %p225 = por %p223, %p224
    %p226 = scmp.le.s32.totalorder 1, %s14
    %p227 = scmp.lt.s32.totalorder %s14, 3
    %p228 = pnand %p226, %p227
    %p229 = pneg %p228
    // Predicated region
    $region9: #{nc_conv2d_masked.1} parent=5 // pred_check
      _
    $region10: #{nc_conv2d_masked.1} parent=5 // pred_check_branch
      %231 = sbr.rel (%p228) target = $region12
    $region11: #{nc_conv2d_masked.1} parent=5 // pred_region
      %s232 = ssub.s32 %s14, 1
      // Predicated region
      $region13: #{nc_conv2d_masked.1} parent=11 // pred_check
        %p233 = pneg %p87
      $region14: #{nc_conv2d_masked.1} parent=11 // pred_check_branch
        %235 = sbr.rel (%p233) target = $region16
      $region15: #{nc_conv2d_masked.1} parent=11 // pred_region
        _
      $region16: #{nc_conv2d_masked.1} parent=11 // pred_fallthru
        _
      // Predicated region
      $region17: #{nc_conv2d_masked.1} parent=11 // pred_check
        %p236 = pneg %p108
      $region18: #{nc_conv2d_masked.1} parent=11 // pred_check_branch
        %238 = sbr.rel (%p236) target = $region20
      $region19: #{nc_conv2d_masked.1} parent=11 // pred_region
        _
      $region20: #{nc_conv2d_masked.1} parent=11 // pred_fallthru
        _
      // Predicated region
      $region21: #{nc_conv2d_masked.1} parent=11 // pred_check
        %p239 = pneg %p129
      $region22: #{nc_conv2d_masked.1} parent=11 // pred_check_branch
        %241 = sbr.rel (%p239) target = $region24
      $region23: #{nc_conv2d_masked.1} parent=11 // pred_region
        _
      $region24: #{nc_conv2d_masked.1} parent=11 // pred_fallthru
        _
      // Predicated region
      $region25: #{nc_conv2d_masked.1} parent=11 // pred_check
        %p242 = pneg %p150
      $region26: #{nc_conv2d_masked.1} parent=11 // pred_check_branch
        %244 = sbr.rel (%p242) target = $region28
      $region27: #{nc_conv2d_masked.1} parent=11 // pred_region
        _
      $region28: #{nc_conv2d_masked.1} parent=11 // pred_fallthru
        _
      // Predicated region
      $region29: #{nc_conv2d_masked.1} parent=11 // pred_check
        %p245 = pneg %p171
      $region30: #{nc_conv2d_masked.1} parent=11 // pred_check_branch
        %247 = sbr.rel (%p245) target = $region32
      $region31: #{nc_conv2d_masked.1} parent=11 // pred_region
        _
      $region32: #{nc_conv2d_masked.1} parent=11 // pred_fallthru
        _
      // Predicated region
      $region33: #{nc_conv2d_masked.1} parent=11 // pred_check
        %p248 = pneg %p192
      $region34: #{nc_conv2d_masked.1} parent=11 // pred_check_branch
        %250 = sbr.rel (%p248) target = $region36
      $region35: #{nc_conv2d_masked.1} parent=11 // pred_region
        _
      $region36: #{nc_conv2d_masked.1} parent=11 // pred_fallthru
        _
    $region12: #{nc_conv2d_masked.1} parent=5 // pred_fallthru
      _
    %p251 = scmp.lt.s32.totalorder %s14, 2
    // Predicated region
    $region37: #{nc_conv2d_masked.1} parent=5 // pred_check
      %p252 = pneg %p251
    $region38: #{nc_conv2d_masked.1} parent=5 // pred_check_branch
      %254 = sbr.rel (%p252) target = $region40
    $region39: #{nc_conv2d_masked.1} parent=5 // pred_region
      // Predicated region
      $region41: #{nc_conv2d_masked.1} parent=39 // pred_check
        %p255 = pneg %p34
      $region42: #{nc_conv2d_masked.1} parent=39 // pred_check_branch
        %257 = sbr.rel (%p255) target = $region44
      $region43: #{nc_conv2d_masked.1} parent=39 // pred_region
        %p258 = scmp.lt.s32.totalorder %s14, 1
        %s259 = scalar_select %p258, %s14, 1
        %s260 = smul.addr %s259, 3
        %s261 = scalar_lea.vmem %s0, %s260
      $region44: #{nc_conv2d_masked.1} parent=39 // pred_fallthru
        _
      // Predicated region
      $region45: #{nc_conv2d_masked.1} parent=39 // pred_check
        %p262 = pneg %p60
      $region46: #{nc_conv2d_masked.1} parent=39 // pred_check_branch
        %264 = sbr.rel (%p262) target = $region48
      $region47: #{nc_conv2d_masked.1} parent=39 // pred_region
        %p265 = scmp.lt.s32.totalorder %s14, 1
        %s266 = scalar_select %p265, %s14, 1
        %s267 = smul.addr %s266, 3
        %s268 = scalar_lea.vmem %s1, %s267
      $region48: #{nc_conv2d_masked.1} parent=39 // pred_fallthru
        _
    $region40: #{nc_conv2d_masked.1} parent=5 // pred_fallthru
      _
    %p269 = scmp.le.s32.totalorder 1, %s14
    %p270 = scmp.lt.s32.totalorder %s14, 3
    %p271 = pnand %p269, %p270
    %p272 = pneg %p271
    // Predicated region
    $region49: #{nc_conv2d_masked.1} parent=5 // pred_check
      _
    $region50: #{nc_conv2d_masked.1} parent=5 // pred_check_branch
      %274 = sbr.rel (%p271) target = $region52
    $region51: #{nc_conv2d_masked.1} parent=5 // pred_region
      %s275 = ssub.s32 %s14, 1
      %p276 = scmp.lt.s32.totalorder %s19, 1
      %s277 = scalar_select %p276, %s19, 1
      %s278 = smul.addr %s277, 3
      %s279 = scalar_lea.vmem %s0, %s278
      %p280 = pneg %p40
      %p281 = pneg %p37
      %p282 = scmp.lt.s32.totalorder %s19, 1
      %s283 = scalar_select %p282, %s19, 1
      %s284 = smul.addr %s283, 3
      %s285 = scalar_lea.vmem %s1, %s284
      %p286 = pneg %p66
      %p287 = pneg %p63
      %p288 = pneg %p87
      %p289 = pneg %p84
      %p290 = pneg %p108
      %p291 = pneg %p105
      %p292 = pneg %p129
      %p293 = pneg %p126
      %p294 = pneg %p150
      %p295 = pneg %p147
      %p296 = pneg %p171
      %p297 = pneg %p168
      %p298 = pneg %p192
      %p299 = pneg %p189
      %p300 = pneg %p218
      %p301 = pneg %p215
      %p302 = scmp.lt.s32.totalorder %s19, 1
      %s303 = scalar_select %p302, %s19, 1
      %s304 = smul.addr %s303, 3
      %s305 = scalar_lea.vmem %s8, %s304
      %p306 = scmp.lt.s32.totalorder %s19, 1
      %s307 = scalar_select %p306, %s19, 1
      %s308 = smul.addr %s307, 3
      %s309 = scalar_lea.vmem %s0, %s308
      %p310 = scmp.lt.s32.totalorder %s19, 1
      %s311 = scalar_select %p310, %s19, 1
      %s312 = smul.addr %s311, 3
      %s313 = scalar_lea.vmem %s1, %s312
      %p314 = scmp.lt.s32.totalorder %s19, 1
      %s315 = scalar_select %p314, %s19, 1
      %s316 = smul.addr %s315, 3
      %s317 = scalar_lea.vmem %s8, %s316
      %v318 = vld [vmem:[%s313] sm:$0x7]
      %v320 = vlaneseq
      %v321 = vshrl.u32 %v320, 7
      %v322 = vsub.s32 0, %v321
      %v323 = vrot.slane %v318, %v322
      %v324 = vlaneseq
      %v325 = vshrl.u32 %v324, 7
      %v326 = vsub.s32 1, %v325
      %v327 = vrot.slane %v318, %v326
      %v328 = vlaneseq
      %v329 = vshrl.u32 %v328, 7
      %v330 = vsub.s32 2, %v329
      %v331 = vrot.slane %v318, %v330
      %335 = vst [vmem:[#allocation2] sm:$0xff] 0.0
      %336 = vst [vmem:[#allocation2 + $0x28] sm:$0xff] 0.0
      %337 = vst [vmem:[#allocation2 + $0x20] sm:$0xff] 0.0
      %338 = vst [vmem:[#allocation2 + $0x48] sm:$0xff] 0.0
      %v339 = vld [vmem:[%s309] sm:$0x7]
      %v341 = vlaneseq
      %v342 = vshrl.u32 %v341, 7
      %v343 = vsub.s32 0, %v342
      %v344 = vrot.slane %v339, %v343
      %v345 = vlaneseq
      %v346 = vshrl.u32 %v345, 7
      %v347 = vsub.s32 1, %v346
      %v348 = vrot.slane %v339, %v347
      %v349 = vlaneseq
      %v350 = vshrl.u32 %v349, 7
      %v351 = vsub.s32 2, %v350
      %v352 = vrot.slane %v339, %v351
      %356 = vst [vmem:[#allocation2 + $0x8] sm:$0xff] %v344
      %357 = vst [vmem:[#allocation2 + $0x10] sm:$0xff] %v348
      %358 = vst [vmem:[#allocation2 + $0x18] sm:$0xff] %v352
      %359 = vst [vmem:[#allocation2 + $0x30] sm:$0xff] %v344
      %360 = vst [vmem:[#allocation2 + $0x38] sm:$0xff] %v348
      %361 = vst [vmem:[#allocation2 + $0x40] sm:$0xff] %v352
      %v362 = vld [vmem:[%s2] sm:$0xff]
      %v363 = vld [vmem:[%s2 + $0x8] sm:$0xff]
      %v364 = vld [vmem:[#allocation2] sm:$0xff]
      %v365 = vld [vmem:[#allocation2 + $0x8] sm:$0xff]
      %v366 = vld [vmem:[#allocation2 + $0x10] sm:$0xff]
      %v367 = vld [vmem:[#allocation2 + $0x18] sm:$0xff]
      %v368 = vld [vmem:[#allocation2 + $0x28] sm:$0xff]
      %v369 = vld [vmem:[#allocation2 + $0x30] sm:$0xff]
      %v370 = vld [vmem:[#allocation2 + $0x38] sm:$0xff]
      %v371 = vld [vmem:[#allocation2 + $0x40] sm:$0xff]
      %373 = vset.pattern.permute.xlu0 0
      %374 = vperm.xlu0 %373, %v362
      %v375 = vpop.permute.xlu0 %374
      %378 = vset.pattern.permute.xlu0 0
      %379 = vperm.xlu0 %378, %v363
      %v380 = vpop.permute.xlu0 %379
      %v382 = vmul.f32 %v375, %v364
      %v383 = vmul.f32 %v375, %v365
      %v384 = vmul.f32 %v375, %v366
      %v385 = vmul.f32 %v375, %v367
      %v386 = vmul.f32 %v380, %v368
      %v387 = vmul.f32 %v380, %v369
      %v388 = vmul.f32 %v380, %v370
      %v389 = vmul.f32 %v380, %v371
      %v390 = vadd.f32 %v382, 0.0
      %v391 = vadd.f32 %v383, 0.0
      %v392 = vadd.f32 %v384, 0.0
      %v393 = vadd.f32 %v385, 0.0
      %v394 = vadd.f32 %v386, 0.0
      %v395 = vadd.f32 %v387, 0.0
      %v396 = vadd.f32 %v388, 0.0
      %v397 = vadd.f32 %v389, 0.0
      %398 = vset.pattern.permute.xlu0 1
      %399 = vperm.xlu0 %398, %v362
      %v400 = vpop.permute.xlu0 %399
      %402 = vset.pattern.permute.xlu0 1
      %403 = vperm.xlu0 %402, %v363
      %v404 = vpop.permute.xlu0 %403
      %v406 = vmul.f32 %v400, %v364
      %v407 = vmul.f32 %v400, %v365
      %v408 = vmul.f32 %v400, %v366
      %v409 = vmul.f32 %v400, %v367
      %v410 = vmul.f32 %v404, %v368
      %v411 = vmul.f32 %v404, %v369
      %v412 = vmul.f32 %v404, %v370
      %v413 = vmul.f32 %v404, %v371
      %422 = vrot.lane.b32.xlu0 %v406, 127
      %v423 = vpop.permute.xlu0 %422
      %424 = vrot.lane.b32.xlu0 %v407, 127
      %v425 = vpop.permute.xlu0 %424
      %426 = vrot.lane.b32.xlu0 %v408, 127
      %v427 = vpop.permute.xlu0 %426
      %428 = vrot.lane.b32.xlu0 %v409, 127
      %v429 = vpop.permute.xlu0 %428
      %430 = vrot.lane.b32.xlu0 %v410, 127
      %v431 = vpop.permute.xlu0 %430
      %432 = vrot.lane.b32.xlu0 %v411, 127
      %v433 = vpop.permute.xlu0 %432
      %434 = vrot.lane.b32.xlu0 %v412, 127
      %v435 = vpop.permute.xlu0 %434
      %436 = vrot.lane.b32.xlu0 %v413, 127
      %v437 = vpop.permute.xlu0 %436
      %vm438 = vcmask 1039360
      %v439 = vsel %vm438, %v423, %v425
      %v440 = vsel %vm438, %v425, %v427
      %v441 = vsel %vm438, %v427, %v429
      %v442 = vsel %vm438, %v431, %v433
      %v443 = vsel %vm438, %v433, %v435
      %v444 = vsel %vm438, %v435, %v437
      %v453 = vadd.f32 %v390, %v439
      %v454 = vadd.f32 %v391, %v440
      %v455 = vadd.f32 %v392, %v441
      %v456 = vadd.f32 %v393, %v429
      %v457 = vadd.f32 %v394, %v442
      %v458 = vadd.f32 %v395, %v443
      %v459 = vadd.f32 %v396, %v444
      %v460 = vadd.f32 %v397, %v437
      %461 = vset.pattern.permute.xlu0 2
      %462 = vperm.xlu0 %461, %v362
      %v463 = vpop.permute.xlu0 %462
      %465 = vset.pattern.permute.xlu0 2
      %466 = vperm.xlu0 %465, %v363
      %v467 = vpop.permute.xlu0 %466
      %v469 = vmul.f32 %v463, %v364
      %v470 = vmul.f32 %v463, %v365
      %v471 = vmul.f32 %v463, %v366
      %v472 = vmul.f32 %v463, %v367
      %v473 = vmul.f32 %v467, %v368
      %v474 = vmul.f32 %v467, %v369
      %v475 = vmul.f32 %v467, %v370
      %v476 = vmul.f32 %v467, %v371
      %485 = vrot.lane.b32.xlu0 %v469, 126
      %v486 = vpop.permute.xlu0 %485
      %487 = vrot.lane.b32.xlu0 %v470, 126
      %v488 = vpop.permute.xlu0 %487
      %489 = vrot.lane.b32.xlu0 %v471, 126
      %v490 = vpop.permute.xlu0 %489
      %491 = vrot.lane.b32.xlu0 %v472, 126
      %v492 = vpop.permute.xlu0 %491
      %493 = vrot.lane.b32.xlu0 %v473, 126
      %v494 = vpop.permute.xlu0 %493
      %495 = vrot.lane.b32.xlu0 %v474, 126
      %v496 = vpop.permute.xlu0 %495
      %497 = vrot.lane.b32.xlu0 %v475, 126
      %v498 = vpop.permute.xlu0 %497
      %499 = vrot.lane.b32.xlu0 %v476, 126
      %v500 = vpop.permute.xlu0 %499
      %vm501 = vcmask 1031168
      %v502 = vsel %vm501, %v486, %v488
      %v503 = vsel %vm501, %v488, %v490
      %v504 = vsel %vm501, %v490, %v492
      %v505 = vsel %vm501, %v494, %v496
      %v506 = vsel %vm501, %v496, %v498
      %v507 = vsel %vm501, %v498, %v500
      %v516 = vadd.f32 %v453, %v502
      %v517 = vadd.f32 %v454, %v503
      %v518 = vadd.f32 %v455, %v504
      %v519 = vadd.f32 %v456, %v492
      %v520 = vadd.f32 %v457, %v505
      %v521 = vadd.f32 %v458, %v506
      %v522 = vadd.f32 %v459, %v507
      %v523 = vadd.f32 %v460, %v500
      %524 = vset.pattern.permute.xlu0 3
      %525 = vperm.xlu0 %524, %v362
      %v526 = vpop.permute.xlu0 %525
      %528 = vset.pattern.permute.xlu0 3
      %529 = vperm.xlu0 %528, %v363
      %v530 = vpop.permute.xlu0 %529
      %v532 = vmul.f32 %v526, %v364
      %v533 = vmul.f32 %v526, %v365
      %v534 = vmul.f32 %v526, %v366
      %v535 = vmul.f32 %v526, %v367
      %v536 = vmul.f32 %v530, %v368
      %v537 = vmul.f32 %v530, %v369
      %v538 = vmul.f32 %v530, %v370
      %v539 = vmul.f32 %v530, %v371
      %548 = vrot.lane.b32.xlu0 %v532, 110
      %v549 = vpop.permute.xlu0 %548
      %550 = vrot.lane.b32.xlu0 %v533, 110
      %v551 = vpop.permute.xlu0 %550
      %552 = vrot.lane.b32.xlu0 %v534, 110
      %v553 = vpop.permute.xlu0 %552
      %554 = vrot.lane.b32.xlu0 %v535, 110
      %v555 = vpop.permute.xlu0 %554
      %556 = vrot.lane.b32.xlu0 %v536, 110
      %v557 = vpop.permute.xlu0 %556
      %558 = vrot.lane.b32.xlu0 %v537, 110
      %v559 = vpop.permute.xlu0 %558
      %560 = vrot.lane.b32.xlu0 %v538, 110
      %v561 = vpop.permute.xlu0 %560
      %562 = vrot.lane.b32.xlu0 %v539, 110
      %v563 = vpop.permute.xlu0 %562
      %vm564 = vcmask 900096
      %v565 = vsel %vm564, %v549, %v551
      %v566 = vsel %vm564, %v551, %v553
      %v567 = vsel %vm564, %v553, %v555
      %v568 = vsel %vm564, %v557, %v559
      %v569 = vsel %vm564, %v559, %v561
      %v570 = vsel %vm564, %v561, %v563
      %v579 = vadd.f32 %v516, %v565
      %v580 = vadd.f32 %v517, %v566
      %v581 = vadd.f32 %v518, %v567
      %v582 = vadd.f32 %v519, %v555
      %v583 = vadd.f32 %v520, %v568
      %v584 = vadd.f32 %v521, %v569
      %v585 = vadd.f32 %v522, %v570
      %v586 = vadd.f32 %v523, %v563
      %587 = vset.pattern.permute.xlu0 4
      %588 = vperm.xlu0 %587, %v362
      %v589 = vpop.permute.xlu0 %588
      %591 = vset.pattern.permute.xlu0 4
      %592 = vperm.xlu0 %591, %v363
      %v593 = vpop.permute.xlu0 %592
      %v595 = vmul.f32 %v589, %v365
      %v596 = vmul.f32 %v589, %v366
      %v597 = vmul.f32 %v589, %v367
      %v598 = vmul.f32 %v593, %v369
      %v599 = vmul.f32 %v593, %v370
      %v600 = vmul.f32 %v593, %v371
      %607 = vrot.lane.b32.xlu0 %v595, 109
      %v608 = vpop.permute.xlu0 %607
      %609 = vrot.lane.b32.xlu0 %v596, 109
      %v610 = vpop.permute.xlu0 %609
      %611 = vrot.lane.b32.xlu0 %v597, 109
      %v612 = vpop.permute.xlu0 %611
      %613 = vrot.lane.b32.xlu0 %v598, 109
      %v614 = vpop.permute.xlu0 %613
      %615 = vrot.lane.b32.xlu0 %v599, 109
      %v616 = vpop.permute.xlu0 %615
      %617 = vrot.lane.b32.xlu0 %v600, 109
      %v618 = vpop.permute.xlu0 %617
      %vm619 = vcmask 891904
      %v620 = vsel %vm619, %v608, %v610
      %v621 = vsel %vm619, %v610, %v612
      %v622 = vsel %vm619, %v614, %v616
      %v623 = vsel %vm619, %v616, %v618
      %v632 = vadd.f32 %v579, %v608
      %v633 = vadd.f32 %v580, %v620
      %v634 = vadd.f32 %v581, %v621
      %v635 = vadd.f32 %v582, %v612
      %v636 = vadd.f32 %v583, %v614
      %v637 = vadd.f32 %v584, %v622
      %v638 = vadd.f32 %v585, %v623
      %v639 = vadd.f32 %v586, %v618
      %v640 = vld [vmem:[#allocation2 + $0x8] sm:$0xff]
      %v641 = vld [vmem:[#allocation2 + $0x10] sm:$0xff]
      %v642 = vld [vmem:[#allocation2 + $0x18] sm:$0xff]
      %v643 = vld [vmem:[#allocation2 + $0x20] sm:$0xff]
      %v644 = vld [vmem:[#allocation2 + $0x30] sm:$0xff]
      %v645 = vld [vmem:[#allocation2 + $0x38] sm:$0xff]
      %v646 = vld [vmem:[#allocation2 + $0x40] sm:$0xff]
      %v647 = vld [vmem:[#allocation2 + $0x48] sm:$0xff]
      %648 = vset.pattern.permute.xlu0 5
      %649 = vperm.xlu0 %648, %v362
      %v650 = vpop.permute.xlu0 %649
      %652 = vset.pattern.permute.xlu0 5
      %653 = vperm.xlu0 %652, %v363
      %v654 = vpop.permute.xlu0 %653
      %v656 = vmul.f32 %v650, %v640
      %v657 = vmul.f32 %v650, %v641
      %v658 = vmul.f32 %v650, %v642
      %v659 = vmul.f32 %v650, %v643
      %v660 = vmul.f32 %v654, %v644
      %v661 = vmul.f32 %v654, %v645
      %v662 = vmul.f32 %v654, %v646
      %v663 = vmul.f32 %v654, %v647
      %672 = vrot.lane.b32.xlu0 %v656, 108
      %v673 = vpop.permute.xlu0 %672
      %674 = vrot.lane.b32.xlu0 %v657, 108
      %v675 = vpop.permute.xlu0 %674
      %676 = vrot.lane.b32.xlu0 %v658, 108
      %v677 = vpop.permute.xlu0 %676
      %678 = vrot.lane.b32.xlu0 %v659, 108
      %v679 = vpop.permute.xlu0 %678
      %680 = vrot.lane.b32.xlu0 %v660, 108
      %v681 = vpop.permute.xlu0 %680
      %682 = vrot.lane.b32.xlu0 %v661, 108
      %v683 = vpop.permute.xlu0 %682
      %684 = vrot.lane.b32.xlu0 %v662, 108
      %v685 = vpop.permute.xlu0 %684
      %686 = vrot.lane.b32.xlu0 %v663, 108
      %v687 = vpop.permute.xlu0 %686
      %vm688 = vcmask 883712
      %v689 = vsel %vm688, %v673, %v675
      %v690 = vsel %vm688, %v675, %v677
      %v691 = vsel %vm688, %v677, %v679
      %v692 = vsel %vm688, %v681, %v683
      %v693 = vsel %vm688, %v683, %v685
      %v694 = vsel %vm688, %v685, %v687
      %v703 = vadd.f32 %v632, %v673
      %v704 = vadd.f32 %v633, %v689
      %v705 = vadd.f32 %v634, %v690
      %v706 = vadd.f32 %v635, %v691
      %v707 = vadd.f32 %v636, %v681
      %v708 = vadd.f32 %v637, %v692
      %v709 = vadd.f32 %v638, %v693
      %v710 = vadd.f32 %v639, %v694
      %711 = vset.pattern.permute.xlu0 6
      %712 = vperm.xlu0 %711, %v362
      %v713 = vpop.permute.xlu0 %712
      %715 = vset.pattern.permute.xlu0 6
      %716 = vperm.xlu0 %715, %v363
      %v717 = vpop.permute.xlu0 %716
      %v719 = vmul.f32 %v713, %v640
      %v720 = vmul.f32 %v713, %v641
      %v721 = vmul.f32 %v713, %v642
      %v722 = vmul.f32 %v713, %v643
      %v723 = vmul.f32 %v717, %v644
      %v724 = vmul.f32 %v717, %v645
      %v725 = vmul.f32 %v717, %v646
      %v726 = vmul.f32 %v717, %v647
      %735 = vrot.lane.b32.xlu0 %v719, 92
      %v736 = vpop.permute.xlu0 %735
      %737 = vrot.lane.b32.xlu0 %v720, 92
      %v738 = vpop.permute.xlu0 %737
      %739 = vrot.lane.b32.xlu0 %v721, 92
      %v740 = vpop.permute.xlu0 %739
      %741 = vrot.lane.b32.xlu0 %v722, 92
      %v742 = vpop.permute.xlu0 %741
      %743 = vrot.lane.b32.xlu0 %v723, 92
      %v744 = vpop.permute.xlu0 %743
      %745 = vrot.lane.b32.xlu0 %v724, 92
      %v746 = vpop.permute.xlu0 %745
      %747 = vrot.lane.b32.xlu0 %v725, 92
      %v748 = vpop.permute.xlu0 %747
      %749 = vrot.lane.b32.xlu0 %v726, 92
      %v750 = vpop.permute.xlu0 %749
      %vm751 = vcmask 752640
      %v752 = vsel %vm751, %v736, %v738
      %v753 = vsel %vm751, %v738, %v740
      %v754 = vsel %vm751, %v740, %v742
      %v755 = vsel %vm751, %v744, %v746
      %v756 = vsel %vm751, %v746, %v748
      %v757 = vsel %vm751, %v748, %v750
      %v766 = vadd.f32 %v703, %v736
      %v767 = vadd.f32 %v704, %v752
      %v768 = vadd.f32 %v705, %v753
      %v769 = vadd.f32 %v706, %v754
      %v770 = vadd.f32 %v707, %v744
      %v771 = vadd.f32 %v708, %v755
      %v772 = vadd.f32 %v709, %v756
      %v773 = vadd.f32 %v710, %v757
      %774 = vset.pattern.permute.xlu0 7
      %775 = vperm.xlu0 %774, %v362
      %v776 = vpop.permute.xlu0 %775
      %778 = vset.pattern.permute.xlu0 7
      %779 = vperm.xlu0 %778, %v363
      %v780 = vpop.permute.xlu0 %779
      %v782 = vmul.f32 %v776, %v640
      %v783 = vmul.f32 %v776, %v641
      %v784 = vmul.f32 %v776, %v642
      %v785 = vmul.f32 %v776, %v643
      %v786 = vmul.f32 %v780, %v644
      %v787 = vmul.f32 %v780, %v645
      %v788 = vmul.f32 %v780, %v646
      %v789 = vmul.f32 %v780, %v647
      %798 = vrot.lane.b32.xlu0 %v782, 91
      %v799 = vpop.permute.xlu0 %798
      %800 = vrot.lane.b32.xlu0 %v783, 91
      %v801 = vpop.permute.xlu0 %800
      %802 = vrot.lane.b32.xlu0 %v784, 91
      %v803 = vpop.permute.xlu0 %802
      %804 = vrot.lane.b32.xlu0 %v785, 91
      %v805 = vpop.permute.xlu0 %804
      %806 = vrot.lane.b32.xlu0 %v786, 91
      %v807 = vpop.permute.xlu0 %806
      %808 = vrot.lane.b32.xlu0 %v787, 91
      %v809 = vpop.permute.xlu0 %808
      %810 = vrot.lane.b32.xlu0 %v788, 91
      %v811 = vpop.permute.xlu0 %810
      %812 = vrot.lane.b32.xlu0 %v789, 91
      %v813 = vpop.permute.xlu0 %812
      %vm814 = vcmask 744448
      %v815 = vsel %vm814, %v799, %v801
      %v816 = vsel %vm814, %v801, %v803
      %v817 = vsel %vm814, %v803, %v805
      %v818 = vsel %vm814, %v807, %v809
      %v819 = vsel %vm814, %v809, %v811
      %v820 = vsel %vm814, %v811, %v813
      %v829 = vadd.f32 %v766, %v799
      %v830 = vadd.f32 %v767, %v815
      %v831 = vadd.f32 %v768, %v816
      %v832 = vadd.f32 %v769, %v817
      %v833 = vadd.f32 %v770, %v807
      %v834 = vadd.f32 %v771, %v818
      %v835 = vadd.f32 %v772, %v819
      %v836 = vadd.f32 %v773, %v820
      %837 = vset.pattern.permute.xlu0 8
      %838 = vperm.xlu0 %837, %v362
      %v839 = vpop.permute.xlu0 %838
      %841 = vset.pattern.permute.xlu0 8
      %842 = vperm.xlu0 %841, %v363
      %v843 = vpop.permute.xlu0 %842
      %v845 = vmul.f32 %v839, %v640
      %v846 = vmul.f32 %v839, %v641
      %v847 = vmul.f32 %v839, %v642
      %v848 = vmul.f32 %v839, %v643
      %v849 = vmul.f32 %v843, %v644
      %v850 = vmul.f32 %v843, %v645
      %v851 = vmul.f32 %v843, %v646
      %v852 = vmul.f32 %v843, %v647
      %861 = vrot.lane.b32.xlu0 %v845, 90
      %v862 = vpop.permute.xlu0 %861
      %863 = vrot.lane.b32.xlu0 %v846, 90
      %v864 = vpop.permute.xlu0 %863
      %865 = vrot.lane.b32.xlu0 %v847, 90
      %v866 = vpop.permute.xlu0 %865
      %867 = vrot.lane.b32.xlu0 %v848, 90
      %v868 = vpop.permute.xlu0 %867
      %869 = vrot.lane.b32.xlu0 %v849, 90
      %v870 = vpop.permute.xlu0 %869
      %871 = vrot.lane.b32.xlu0 %v850, 90
      %v872 = vpop.permute.xlu0 %871
      %873 = vrot.lane.b32.xlu0 %v851, 90
      %v874 = vpop.permute.xlu0 %873
      %875 = vrot.lane.b32.xlu0 %v852, 90
      %v876 = vpop.permute.xlu0 %875
      %vm877 = vcmask 736256
      %v878 = vsel %vm877, %v862, %v864
      %v879 = vsel %vm877, %v864, %v866
      %v880 = vsel %vm877, %v866, %v868
      %v881 = vsel %vm877, %v870, %v872
      %v882 = vsel %vm877, %v872, %v874
      %v883 = vsel %vm877, %v874, %v876
      %v892 = vadd.f32 %v829, %v862
      %v893 = vadd.f32 %v830, %v878
      %v894 = vadd.f32 %v831, %v879
      %v895 = vadd.f32 %v832, %v880
      %v896 = vadd.f32 %v833, %v870
      %v897 = vadd.f32 %v834, %v881
      %v898 = vadd.f32 %v835, %v882
      %v899 = vadd.f32 %v836, %v883
      %v900 = vld [vmem:[%s3] sm:$0xff]
      %v901 = vld [vmem:[%s3 + $0x8] sm:$0xff]
      %903 = vset.pattern.permute.xlu0 0
      %904 = vperm.xlu0 %903, %v900
      %v905 = vpop.permute.xlu0 %904
      %908 = vset.pattern.permute.xlu0 0
      %909 = vperm.xlu0 %908, %v901
      %v910 = vpop.permute.xlu0 %909
      %v912 = vadd.f32 %v892, %v905
      %v913 = vadd.f32 %v893, %v905
      %v914 = vadd.f32 %v894, %v905
      %v915 = vadd.f32 %v895, %v905
      %v916 = vadd.f32 %v896, %v910
      %v917 = vadd.f32 %v897, %v910
      %v918 = vadd.f32 %v898, %v910
      %v919 = vadd.f32 %v899, %v910
      %v920 = vmax.f32 %v912, 0.0
      %v921 = vmax.f32 %v913, 0.0
      %v922 = vmax.f32 %v914, 0.0
      %v923 = vmax.f32 %v915, 0.0
      %v924 = vmax.f32 %v916, 0.0
      %v925 = vmax.f32 %v917, 0.0
      %v926 = vmax.f32 %v918, 0.0
      %v927 = vmax.f32 %v919, 0.0
      %928 = vrot.lane.b32.xlu0 %v323, 109
      %v929 = vpop.permute.xlu0 %928
      %930 = vrot.lane.b32.xlu0 %v327, 109
      %v931 = vpop.permute.xlu0 %930
      %932 = vrot.lane.b32.xlu0 %v331, 109
      %v933 = vpop.permute.xlu0 %932
      %v934 = vsel %vm619, %v929, %v931
      %v935 = vsel %vm619, %v931, %v933
      %v940 = vmul.f32 %v920, %v929
      %v941 = vmul.f32 %v921, %v934
      %v942 = vmul.f32 %v922, %v935
      %v943 = vmul.f32 %v923, %v933
      %v944 = vmul.f32 %v924, %v929
      %v945 = vmul.f32 %v925, %v934
      %v946 = vmul.f32 %v926, %v935
      %v947 = vmul.f32 %v927, %v933
      %956 = vrot.lane.b32.xlu0 %v940, 19
      %v957 = vpop.permute.xlu0 %956
      %958 = vrot.lane.b32.xlu0 %v941, 19
      %v959 = vpop.permute.xlu0 %958
      %960 = vrot.lane.b32.xlu0 %v942, 19
      %v961 = vpop.permute.xlu0 %960
      %962 = vrot.lane.b32.xlu0 %v943, 19
      %v963 = vpop.permute.xlu0 %962
      %964 = vrot.lane.b32.xlu0 %v944, 19
      %v965 = vpop.permute.xlu0 %964
      %966 = vrot.lane.b32.xlu0 %v945, 19
      %v967 = vpop.permute.xlu0 %966
      %968 = vrot.lane.b32.xlu0 %v946, 19
      %v969 = vpop.permute.xlu0 %968
      %970 = vrot.lane.b32.xlu0 %v947, 19
      %v971 = vpop.permute.xlu0 %970
      %vm972 = vcmask 154624
      %v973 = vsel %vm972, %v957, %v959
      %v974 = vsel %vm972, %v959, %v961
      %v975 = vsel %vm972, %v961, %v963
      %v976 = vsel %vm972, %v965, %v967
      %v977 = vsel %vm972, %v967, %v969
      %v978 = vsel %vm972, %v969, %v971
      %985 = vst [vmem:[#allocation2 + $0x8] sm:$0xff] %v973
      %986 = vst [vmem:[#allocation2 + $0x10] sm:$0xff] %v974
      %987 = vst [vmem:[#allocation2 + $0x18] sm:$0xff] %v975
      %988 = vst [vmem:[#allocation2 + $0x30] sm:$0xff] %v976
      %989 = vst [vmem:[#allocation2 + $0x38] sm:$0xff] %v977
      %990 = vst [vmem:[#allocation2 + $0x40] sm:$0xff] %v978
      %v991 = vld [vmem:[%s4] sm:$0xff]
      %v992 = vld [vmem:[%s4 + $0x8] sm:$0xff]
      %v993 = vld [vmem:[#allocation2] sm:$0xff]
      %v994 = vld [vmem:[#allocation2 + $0x8] sm:$0xff]
      %v995 = vld [vmem:[#allocation2 + $0x10] sm:$0xff]
      %v996 = vld [vmem:[#allocation2 + $0x18] sm:$0xff]
      %v997 = vld [vmem:[#allocation2 + $0x28] sm:$0xff]
      %v998 = vld [vmem:[#allocation2 + $0x30] sm:$0xff]
      %v999 = vld [vmem:[#allocation2 + $0x38] sm:$0xff]
      %v1000 = vld [vmem:[#allocation2 + $0x40] sm:$0xff]
      %s1001 = scalar_lea.vmem %s4, 16
      %v1002 = vld [vmem:[%s1001] sm:$0xff]
      %v1003 = vld [vmem:[%s1001 + $0x8] sm:$0xff]
      %1012 = vrot.lane.b32.xlu0 %v993, 18
      %v1013 = vpop.permute.xlu0 %1012
      %1014 = vrot.lane.b32.xlu0 %v994, 18
      %v1015 = vpop.permute.xlu0 %1014
      %1016 = vrot.lane.b32.xlu0 %v995, 18
      %v1017 = vpop.permute.xlu0 %1016
      %1018 = vrot.lane.b32.xlu0 %v996, 18
      %v1019 = vpop.permute.xlu0 %1018
      %1020 = vrot.lane.b32.xlu0 %v997, 18
      %v1021 = vpop.permute.xlu0 %1020
      %1022 = vrot.lane.b32.xlu0 %v998, 18
      %v1023 = vpop.permute.xlu0 %1022
      %1024 = vrot.lane.b32.xlu0 %v999, 18
      %v1025 = vpop.permute.xlu0 %1024
      %1026 = vrot.lane.b32.xlu0 %v1000, 18
      %v1027 = vpop.permute.xlu0 %1026
      %vm1028 = vcmask 146432
      %v1029 = vsel %vm1028, %v1013, %v1015
      %v1030 = vsel %vm1028, %v1015, %v1017
      %v1031 = vsel %vm1028, %v1017, %v1019
      %v1032 = vsel %vm1028, %v1021, %v1023
      %v1033 = vsel %vm1028, %v1023, %v1025
      %v1034 = vsel %vm1028, %v1025, %v1027
      %vm1041 = vcmask 130048
      %v1043 = vsel %vm1041, %v1002, 0
      %v1046 = vsel %vm1041, %v1003, 0
      %1048 = vmatprep.subr.mxu0 0.0
      %1049 = vmatpush1.msra.mxu0 0.0
      %1050 = vmatprep.subr.mxu0 0.0
      %1051 = vmatpush1.msra.mxu0 0.0
      %1052 = vmatprep.subr.mxu0 0.0
      %1053 = vmatpush1.msra.mxu0 0.0
      %1054 = vmatprep.subr.mxu0 0.0
      %1055 = vmatpush1.msra.mxu0 0.0
      %1056 = vmatprep.subr.mxu0 0.0
      %1057 = vmatpush1.msra.mxu0 0.0
      %1058 = vmatprep.subr.mxu0 0.0
      %1059 = vmatpush1.msra.mxu0 0.0
      %1060 = vmatprep.subr.mxu0 0.0
      %1061 = vmatpush1.msra.mxu0 0.0
      %1062 = vmatprep.subr.mxu0 0.0
      %1063 = vmatpush1.msra.mxu0 0.0
      %1064 = vmatprep.subr.mxu0 0.0
      %1065 = vmatpush1.msra.mxu0 0.0
      %1066 = vmatprep.subr.mxu0 0.0
      %1067 = vmatpush1.msra.mxu0 0.0
      %1068 = vmatprep.subr.mxu0 0.0
      %1069 = vmatpush1.msra.mxu0 0.0
      %1070 = vmatprep.subr.mxu0 0.0
      %1071 = vmatpush1.msra.mxu0 0.0
      %1072 = vmatprep.subr.mxu0 0.0
      %1073 = vmatpush1.msra.mxu0 0.0
      %1074 = vmatprep.subr.mxu0 0.0
      %1075 = vmatpush1.msra.mxu0 0.0
      %1076 = vmatprep.subr.mxu0 %v1033
      %1077 = vmatpush1.msra.mxu0 %v1032
      %1078 = vmatprep.subr.mxu0 %v1030
      %1079 = vmatpush1.msra.mxu0 %v1029
      %1080 = vmatprep.subr.mxu0 0.0
      %1081 = vmatpush2.msra.mxu0 0.0
      %1082 = vmatprep.subr.mxu0 0.0
      %1083 = vmatpush2.msra.mxu0 0.0
      %1084 = vmatprep.subr.mxu0 0.0
      %1085 = vmatpush2.msra.mxu0 0.0
      %1086 = vmatprep.subr.mxu0 0.0
      %1087 = vmatpush2.msra.mxu0 0.0
      %1088 = vmatprep.subr.mxu0 0.0
      %1089 = vmatpush2.msra.mxu0 0.0
      %1090 = vmatprep.subr.mxu0 0.0
      %1091 = vmatpush2.msra.mxu0 0.0
      %1092 = vmatprep.subr.mxu0 0.0
      %1093 = vmatpush2.msra.mxu0 0.0
      %1094 = vmatprep.subr.mxu0 0.0
      %1095 = vmatpush2.msra.mxu0 0.0
      %1096 = vmatprep.subr.mxu0 0.0
      %1097 = vmatpush2.msra.mxu0 0.0
      %1098 = vmatprep.subr.mxu0 0.0
      %1099 = vmatpush2.msra.mxu0 0.0
      %1100 = vmatprep.subr.mxu0 0.0
      %1101 = vmatpush2.msra.mxu0 0.0
      %1102 = vmatprep.subr.mxu0 0.0
      %1103 = vmatpush2.msra.mxu0 0.0
      %1104 = vmatprep.subr.mxu0 0.0
      %1105 = vmatpush2.msra.mxu0 0.0
      %1106 = vmatprep.subr.mxu0 0.0
      %1107 = vmatpush2.msra.mxu0 0.0
      %1108 = vmatprep.subr.mxu0 0.0
      %1109 = vmatpush2.msra.mxu0 0.0
      %1110 = vmatprep.subr.mxu0 0.0
      %1111 = vmatpush2.msra.mxu0 0.0
      %1112 = vmatprep.mubr.f32.mxu0 0.0
      %1113 = vmatmul.mubr.f32.gmra.mxu0 %v1043
      %v1114 = vpop.f32.mrf.mxu0
      %v1115 = vadd.f32 0.0, %v1114
      %v1116 = vpop.f32.mrf.mxu0
      %v1117 = vadd.f32 0.0, %v1116
      %1118 = vmatprep.mubr.f32.mxu0 0.0
      %1119 = vmatmul.mubr.f32.gmra.mxu0 %v1046
      %v1120 = vpop.f32.mrf.mxu0
      %v1121 = vadd.f32 0.0, %v1120
      %v1122 = vpop.f32.mrf.mxu0
      %v1123 = vadd.f32 0.0, %v1122
      %1124 = vdwg.mxu0
      %1125 = vmatprep.subr.mxu0 0.0
      %1126 = vmatpush1.msra.mxu0 0.0
      %1127 = vmatprep.subr.mxu0 0.0
      %1128 = vmatpush1.msra.mxu0 0.0
      %1129 = vmatprep.subr.mxu0 0.0
      %1130 = vmatpush1.msra.mxu0 0.0
      %1131 = vmatprep.subr.mxu0 0.0
      %1132 = vmatpush1.msra.mxu0 0.0
      %1133 = vmatprep.subr.mxu0 0.0
      %1134 = vmatpush1.msra.mxu0 0.0
      %1135 = vmatprep.subr.mxu0 0.0
      %1136 = vmatpush1.msra.mxu0 0.0
      %1137 = vmatprep.subr.mxu0 0.0
      %1138 = vmatpush1.msra.mxu0 0.0
      %1139 = vmatprep.subr.mxu0 0.0
      %1140 = vmatpush1.msra.mxu0 0.0
      %1141 = vmatprep.subr.mxu0 0.0
      %1142 = vmatpush1.msra.mxu0 0.0
      %1143 = vmatprep.subr.mxu0 0.0
      %1144 = vmatpush1.msra.mxu0 0.0
      %1145 = vmatprep.subr.mxu0 0.0
      %1146 = vmatpush1.msra.mxu0 0.0
      %1147 = vmatprep.subr.mxu0 0.0
      %1148 = vmatpush1.msra.mxu0 0.0
      %1149 = vmatprep.subr.mxu0 0.0
      %1150 = vmatpush1.msra.mxu0 0.0
      %1151 = vmatprep.subr.mxu0 0.0
      %1152 = vmatpush1.msra.mxu0 0.0
      %1153 = vmatprep.subr.mxu0 0.0
      %1154 = vmatpush1.msra.mxu0 %v1034
      %1155 = vmatprep.subr.mxu0 0.0
      %1156 = vmatpush1.msra.mxu0 %v1031
      %1157 = vmatprep.subr.mxu0 0.0
      %1158 = vmatpush2.msra.mxu0 0.0
      %1159 = vmatprep.subr.mxu0 0.0
      %1160 = vmatpush2.msra.mxu0 0.0
      %1161 = vmatprep.subr.mxu0 0.0
      %1162 = vmatpush2.msra.mxu0 0.0
      %1163 = vmatprep.subr.mxu0 0.0
      %1164 = vmatpush2.msra.mxu0 0.0
      %1165 = vmatprep.subr.mxu0 0.0
      %1166 = vmatpush2.msra.mxu0 0.0
      %1167 = vmatprep.subr.mxu0 0.0
      %1168 = vmatpush2.msra.mxu0 0.0
      %1169 = vmatprep.subr.mxu0 0.0
      %1170 = vmatpush2.msra.mxu0 0.0
      %1171 = vmatprep.subr.mxu0 0.0
      %1172 = vmatpush2.msra.mxu0 0.0
      %1173 = vmatprep.subr.mxu0 0.0
      %1174 = vmatpush2.msra.mxu0 0.0
      %1175 = vmatprep.subr.mxu0 0.0
      %1176 = vmatpush2.msra.mxu0 0.0
      %1177 = vmatprep.subr.mxu0 0.0
      %1178 = vmatpush2.msra.mxu0 0.0
      %1179 = vmatprep.subr.mxu0 0.0
      %1180 = vmatpush2.msra.mxu0 0.0
      %1181 = vmatprep.subr.mxu0 0.0
      %1182 = vmatpush2.msra.mxu0 0.0
      %1183 = vmatprep.subr.mxu0 0.0
      %1184 = vmatpush2.msra.mxu0 0.0
      %1185 = vmatprep.subr.mxu0 0.0
      %1186 = vmatpush2.msra.mxu0 0.0
      %1187 = vmatprep.subr.mxu0 0.0
      %1188 = vmatpush2.msra.mxu0 0.0
      %1189 = vmatprep.mubr.f32.mxu0 0.0
      %1190 = vmatmul.mubr.f32.gmra.mxu0 %v1043
      %v1191 = vpop.f32.mrf.mxu0
      %v1192 = vadd.f32 0.0, %v1191
      %v1193 = vpop.f32.mrf.mxu0
      %1194 = vmatprep.mubr.f32.mxu0 0.0
      %1195 = vmatmul.mubr.f32.gmra.mxu0 %v1046
      %v1196 = vpop.f32.mrf.mxu0
      %v1197 = vadd.f32 0.0, %v1196
      %v1198 = vpop.f32.mrf.mxu0
      %1199 = vdwg.mxu0
      %1200 = vrot.lane.b32.xlu0 %v993, 19
      %v1201 = vpop.permute.xlu0 %1200
      %1202 = vrot.lane.b32.xlu0 %v994, 19
      %v1203 = vpop.permute.xlu0 %1202
      %1204 = vrot.lane.b32.xlu0 %v995, 19
      %v1205 = vpop.permute.xlu0 %1204
      %1206 = vrot.lane.b32.xlu0 %v996, 19
      %v1207 = vpop.permute.xlu0 %1206
      %1208 = vrot.lane.b32.xlu0 %v997, 19
      %v1209 = vpop.permute.xlu0 %1208
      %1210 = vrot.lane.b32.xlu0 %v998, 19
      %v1211 = vpop.permute.xlu0 %1210
      %1212 = vrot.lane.b32.xlu0 %v999, 19
      %v1213 = vpop.permute.xlu0 %1212
      %1214 = vrot.lane.b32.xlu0 %v1000, 19
      %v1215 = vpop.permute.xlu0 %1214
      %v1216 = vsel %vm972, %v1201, %v1203
      %v1217 = vsel %vm972, %v1203, %v1205
      %v1218 = vsel %vm972, %v1205, %v1207
      %v1219 = vsel %vm972, %v1209, %v1211
      %v1220 = vsel %vm972, %v1211, %v1213
      %v1221 = vsel %vm972, %v1213, %v1215
      %v1229 = vsel %vm1041, %v991, 0
      %v1232 = vsel %vm1041, %v992, 0
      %1234 = vmatprep.subr.mxu0 0.0
      %1235 = vmatpush1.msra.mxu0 0.0
      %1236 = vmatprep.subr.mxu0 0.0
      %1237 = vmatpush1.msra.mxu0 0.0
      %1238 = vmatprep.subr.mxu0 0.0
      %1239 = vmatpush1.msra.mxu0 0.0
      %1240 = vmatprep.subr.mxu0 0.0
      %1241 = vmatpush1.msra.mxu0 0.0
      %1242 = vmatprep.subr.mxu0 0.0
      %1243 = vmatpush1.msra.mxu0 0.0
      %1244 = vmatprep.subr.mxu0 0.0
      %1245 = vmatpush1.msra.mxu0 0.0
      %1246 = vmatprep.subr.mxu0 0.0
      %1247 = vmatpush1.msra.mxu0 0.0
      %1248 = vmatprep.subr.mxu0 0.0
      %1249 = vmatpush1.msra.mxu0 0.0
      %1250 = vmatprep.subr.mxu0 0.0
      %1251 = vmatpush1.msra.mxu0 0.0
      %1252 = vmatprep.subr.mxu0 0.0
      %1253 = vmatpush1.msra.mxu0 0.0
      %1254 = vmatprep.subr.mxu0 0.0
      %1255 = vmatpush1.msra.mxu0 0.0
      %1256 = vmatprep.subr.mxu0 0.0
      %1257 = vmatpush1.msra.mxu0 0.0
      %1258 = vmatprep.subr.mxu0 0.0
      %1259 = vmatpush1.msra.mxu0 0.0
      %1260 = vmatprep.subr.mxu0 0.0
      %1261 = vmatpush1.msra.mxu0 0.0
      %1262 = vmatprep.subr.mxu0 %v1220
      %1263 = vmatpush1.msra.mxu0 %v1219
      %1264 = vmatprep.subr.mxu0 %v1217
      %1265 = vmatpush1.msra.mxu0 %v1216
      %1266 = vmatprep.subr.mxu0 0.0
      %1267 = vmatpush2.msra.mxu0 0.0
      %1268 = vmatprep.subr.mxu0 0.0
      %1269 = vmatpush2.msra.mxu0 0.0
      %1270 = vmatprep.subr.mxu0 0.0
      %1271 = vmatpush2.msra.mxu0 0.0
      %1272 = vmatprep.subr.mxu0 0.0
      %1273 = vmatpush2.msra.mxu0 0.0
      %1274 = vmatprep.subr.mxu0 0.0
      %1275 = vmatpush2.msra.mxu0 0.0
      %1276 = vmatprep.subr.mxu0 0.0
      %1277 = vmatpush2.msra.mxu0 0.0
      %1278 = vmatprep.subr.mxu0 0.0
      %1279 = vmatpush2.msra.mxu0 0.0
      %1280 = vmatprep.subr.mxu0 0.0
      %1281 = vmatpush2.msra.mxu0 0.0
      %1282 = vmatprep.subr.mxu0 0.0
      %1283 = vmatpush2.msra.mxu0 0.0
      %1284 = vmatprep.subr.mxu0 0.0
      %1285 = vmatpush2.msra.mxu0 0.0
      %1286 = vmatprep.subr.mxu0 0.0
      %1287 = vmatpush2.msra.mxu0 0.0
      %1288 = vmatprep.subr.mxu0 0.0
      %1289 = vmatpush2.msra.mxu0 0.0
      %1290 = vmatprep.subr.mxu0 0.0
      %1291 = vmatpush2.msra.mxu0 0.0
      %1292 = vmatprep.subr.mxu0 0.0
      %1293 = vmatpush2.msra.mxu0 0.0
      %1294 = vmatprep.subr.mxu0 0.0
      %1295 = vmatpush2.msra.mxu0 0.0
      %1296 = vmatprep.subr.mxu0 0.0
      %1297 = vmatpush2.msra.mxu0 0.0
      %1298 = vmatprep.mubr.f32.mxu0 0.0
      %1299 = vmatmul.mubr.f32.gmra.mxu0 %v1229
      %v1300 = vpop.f32.mrf.mxu0
      %v1301 = vadd.f32 %v1115, %v1300
      %v1302 = vpop.f32.mrf.mxu0
      %v1303 = vadd.f32 %v1117, %v1302
      %1304 = vmatprep.mubr.f32.mxu0 0.0
      %1305 = vmatmul.mubr.f32.gmra.mxu0 %v1232
      %v1306 = vpop.f32.mrf.mxu0
      %v1307 = vadd.f32 %v1121, %v1306
      %v1308 = vpop.f32.mrf.mxu0
      %v1309 = vadd.f32 %v1123, %v1308
      %1310 = vdwg.mxu0
      %1311 = vmatprep.subr.mxu0 0.0
      %1312 = vmatpush1.msra.mxu0 0.0
      %1313 = vmatprep.subr.mxu0 0.0
      %1314 = vmatpush1.msra.mxu0 0.0
      %1315 = vmatprep.subr.mxu0 0.0
      %1316 = vmatpush1.msra.mxu0 0.0
      %1317 = vmatprep.subr.mxu0 0.0
      %1318 = vmatpush1.msra.mxu0 0.0
      %1319 = vmatprep.subr.mxu0 0.0
      %1320 = vmatpush1.msra.mxu0 0.0
      %1321 = vmatprep.subr.mxu0 0.0
      %1322 = vmatpush1.msra.mxu0 0.0
      %1323 = vmatprep.subr.mxu0 0.0
      %1324 = vmatpush1.msra.mxu0 0.0
      %1325 = vmatprep.subr.mxu0 0.0
      %1326 = vmatpush1.msra.mxu0 0.0
      %1327 = vmatprep.subr.mxu0 0.0
      %1328 = vmatpush1.msra.mxu0 0.0
      %1329 = vmatprep.subr.mxu0 0.0
      %1330 = vmatpush1.msra.mxu0 0.0
      %1331 = vmatprep.subr.mxu0 0.0
      %1332 = vmatpush1.msra.mxu0 0.0
      %1333 = vmatprep.subr.mxu0 0.0
      %1334 = vmatpush1.msra.mxu0 0.0
      %1335 = vmatprep.subr.mxu0 0.0
      %1336 = vmatpush1.msra.mxu0 0.0
      %1337 = vmatprep.subr.mxu0 0.0
      %1338 = vmatpush1.msra.mxu0 0.0
      %1339 = vmatprep.subr.mxu0 0.0
      %1340 = vmatpush1.msra.mxu0 %v1221
      %1341 = vmatprep.subr.mxu0 0.0
      %1342 = vmatpush1.msra.mxu0 %v1218
      %1343 = vmatprep.subr.mxu0 0.0
      %1344 = vmatpush2.msra.mxu0 0.0
      %1345 = vmatprep.subr.mxu0 0.0
      %1346 = vmatpush2.msra.mxu0 0.0
      %1347 = vmatprep.subr.mxu0 0.0
      %1348 = vmatpush2.msra.mxu0 0.0
      %1349 = vmatprep.subr.mxu0 0.0
      %1350 = vmatpush2.msra.mxu0 0.0
      %1351 = vmatprep.subr.mxu0 0.0
      %1352 = vmatpush2.msra.mxu0 0.0
      %1353 = vmatprep.subr.mxu0 0.0
      %1354 = vmatpush2.msra.mxu0 0.0
      %1355 = vmatprep.subr.mxu0 0.0
      %1356 = vmatpush2.msra.mxu0 0.0
      %1357 = vmatprep.subr.mxu0 0.0
      %1358 = vmatpush2.msra.mxu0 0.0
      %1359 = vmatprep.subr.mxu0 0.0
      %1360 = vmatpush2.msra.mxu0 0.0
      %1361 = vmatprep.subr.mxu0 0.0
      %1362 = vmatpush2.msra.mxu0 0.0
      %1363 = vmatprep.subr.mxu0 0.0
      %1364 = vmatpush2.msra.mxu0 0.0
      %1365 = vmatprep.subr.mxu0 0.0
      %1366 = vmatpush2.msra.mxu0 0.0
      %1367 = vmatprep.subr.mxu0 0.0
      %1368 = vmatpush2.msra.mxu0 0.0
      %1369 = vmatprep.subr.mxu0 0.0
      %1370 = vmatpush2.msra.mxu0 0.0
      %1371 = vmatprep.subr.mxu0 0.0
      %1372 = vmatpush2.msra.mxu0 0.0
      %1373 = vmatprep.subr.mxu0 0.0
      %1374 = vmatpush2.msra.mxu0 0.0
      %1375 = vmatprep.mubr.f32.mxu0 0.0
      %1376 = vmatmul.mubr.f32.gmra.mxu0 %v1229
      %v1377 = vpop.f32.mrf.mxu0
      %v1378 = vadd.f32 %v1192, %v1377
      %v1379 = vpop.f32.mrf.mxu0
      %1380 = vmatprep.mubr.f32.mxu0 0.0
      %1381 = vmatmul.mubr.f32.gmra.mxu0 %v1232
      %v1382 = vpop.f32.mrf.mxu0
      %v1383 = vadd.f32 %v1197, %v1382
      %v1384 = vpop.f32.mrf.mxu0
      %1385 = vdwg.mxu0
      %s1386 = scalar_lea.vmem %s4, 32
      %v1387 = vld [vmem:[%s1386] sm:$0xff]
      %v1388 = vld [vmem:[%s1386 + $0x8] sm:$0xff]
      %1389 = vrot.lane.b32.xlu0 %v993, 17
      %v1390 = vpop.permute.xlu0 %1389
      %1391 = vrot.lane.b32.xlu0 %v994, 17
      %v1392 = vpop.permute.xlu0 %1391
      %1393 = vrot.lane.b32.xlu0 %v995, 17
      %v1394 = vpop.permute.xlu0 %1393
      %1395 = vrot.lane.b32.xlu0 %v996, 17
      %v1396 = vpop.permute.xlu0 %1395
      %1397 = vrot.lane.b32.xlu0 %v997, 17
      %v1398 = vpop.permute.xlu0 %1397
      %1399 = vrot.lane.b32.xlu0 %v998, 17
      %v1400 = vpop.permute.xlu0 %1399
      %1401 = vrot.lane.b32.xlu0 %v999, 17
      %v1402 = vpop.permute.xlu0 %1401
      %1403 = vrot.lane.b32.xlu0 %v1000, 17
      %v1404 = vpop.permute.xlu0 %1403
      %vm1405 = vcmask 138240
      %v1406 = vsel %vm1405, %v1390, %v1392
      %v1407 = vsel %vm1405, %v1392, %v1394
      %v1408 = vsel %vm1405, %v1394, %v1396
      %v1409 = vsel %vm1405, %v1398, %v1400
      %v1410 = vsel %vm1405, %v1400, %v1402
      %v1411 = vsel %vm1405, %v1402, %v1404
      %v1419 = vsel %vm1041, %v1387, 0
      %v1422 = vsel %vm1041, %v1388, 0
      %1424 = vmatprep.subr.mxu0 0.0
      %1425 = vmatpush1.msra.mxu0 0.0
      %1426 = vmatprep.subr.mxu0 0.0
      %1427 = vmatpush1.msra.mxu0 0.0
      %1428 = vmatprep.subr.mxu0 0.0
      %1429 = vmatpush1.msra.mxu0 0.0
      %1430 = vmatprep.subr.mxu0 0.0
      %1431 = vmatpush1.msra.mxu0 0.0
      %1432 = vmatprep.subr.mxu0 0.0
      %1433 = vmatpush1.msra.mxu0 0.0
      %1434 = vmatprep.subr.mxu0 0.0
      %1435 = vmatpush1.msra.mxu0 0.0
      %1436 = vmatprep.subr.mxu0 0.0
      %1437 = vmatpush1.msra.mxu0 0.0
      %1438 = vmatprep.subr.mxu0 0.0
      %1439 = vmatpush1.msra.mxu0 0.0
      %1440 = vmatprep.subr.mxu0 0.0
      %1441 = vmatpush1.msra.mxu0 0.0
      %1442 = vmatprep.subr.mxu0 0.0
      %1443 = vmatpush1.msra.mxu0 0.0
      %1444 = vmatprep.subr.mxu0 0.0
      %1445 = vmatpush1.msra.mxu0 0.0
      %1446 = vmatprep.subr.mxu0 0.0
      %1447 = vmatpush1.msra.mxu0 0.0
      %1448 = vmatprep.subr.mxu0 0.0
      %1449 = vmatpush1.msra.mxu0 0.0
      %1450 = vmatprep.subr.mxu0 0.0
      %1451 = vmatpush1.msra.mxu0 0.0
      %1452 = vmatprep.subr.mxu0 %v1410
      %1453 = vmatpush1.msra.mxu0 %v1409
      %1454 = vmatprep.subr.mxu0 %v1407
      %1455 = vmatpush1.msra.mxu0 %v1406
      %1456 = vmatprep.subr.mxu0 0.0
      %1457 = vmatpush2.msra.mxu0 0.0
      %1458 = vmatprep.subr.mxu0 0.0
      %1459 = vmatpush2.msra.mxu0 0.0
      %1460 = vmatprep.subr.mxu0 0.0
      %1461 = vmatpush2.msra.mxu0 0.0
      %1462 = vmatprep.subr.mxu0 0.0
      %1463 = vmatpush2.msra.mxu0 0.0
      %1464 = vmatprep.subr.mxu0 0.0
      %1465 = vmatpush2.msra.mxu0 0.0
      %1466 = vmatprep.subr.mxu0 0.0
      %1467 = vmatpush2.msra.mxu0 0.0
      %1468 = vmatprep.subr.mxu0 0.0
      %1469 = vmatpush2.msra.mxu0 0.0
      %1470 = vmatprep.subr.mxu0 0.0
      %1471 = vmatpush2.msra.mxu0 0.0
      %1472 = vmatprep.subr.mxu0 0.0
      %1473 = vmatpush2.msra.mxu0 0.0
      %1474 = vmatprep.subr.mxu0 0.0
      %1475 = vmatpush2.msra.mxu0 0.0
      %1476 = vmatprep.subr.mxu0 0.0
      %1477 = vmatpush2.msra.mxu0 0.0
      %1478 = vmatprep.subr.mxu0 0.0
      %1479 = vmatpush2.msra.mxu0 0.0
      %1480 = vmatprep.subr.mxu0 0.0
      %1481 = vmatpush2.msra.mxu0 0.0
      %1482 = vmatprep.subr.mxu0 0.0
      %1483 = vmatpush2.msra.mxu0 0.0
      %1484 = vmatprep.subr.mxu0 0.0
      %1485 = vmatpush2.msra.mxu0 0.0
      %1486 = vmatprep.subr.mxu0 0.0
      %1487 = vmatpush2.msra.mxu0 0.0
      %1488 = vmatprep.mubr.f32.mxu0 0.0
      %1489 = vmatmul.mubr.f32.gmra.mxu0 %v1419
      %v1490 = vpop.f32.mrf.mxu0
      %v1491 = vadd.f32 0.0, %v1490
      %v1492 = vpop.f32.mrf.mxu0
      %v1493 = vadd.f32 0.0, %v1492
      %1494 = vmatprep.mubr.f32.mxu0 0.0
      %1495 = vmatmul.mubr.f32.gmra.mxu0 %v1422
      %v1496 = vpop.f32.mrf.mxu0
      %v1497 = vadd.f32 0.0, %v1496
      %v1498 = vpop.f32.mrf.mxu0
      %v1499 = vadd.f32 0.0, %v1498
      %1500 = vdwg.mxu0
      %1501 = vmatprep.subr.mxu0 0.0
      %1502 = vmatpush1.msra.mxu0 0.0
      %1503 = vmatprep.subr.mxu0 0.0
      %1504 = vmatpush1.msra.mxu0 0.0
      %1505 = vmatprep.subr.mxu0 0.0
      %1506 = vmatpush1.msra.mxu0 0.0
      %1507 = vmatprep.subr.mxu0 0.0
      %1508 = vmatpush1.msra.mxu0 0.0
      %1509 = vmatprep.subr.mxu0 0.0
      %1510 = vmatpush1.msra.mxu0 0.0
      %1511 = vmatprep.subr.mxu0 0.0
      %1512 = vmatpush1.msra.mxu0 0.0
      %1513 = vmatprep.subr.mxu0 0.0
      %1514 = vmatpush1.msra.mxu0 0.0
      %1515 = vmatprep.subr.mxu0 0.0
      %1516 = vmatpush1.msra.mxu0 0.0
      %1517 = vmatprep.subr.mxu0 0.0
      %1518 = vmatpush1.msra.mxu0 0.0
      %1519 = vmatprep.subr.mxu0 0.0
      %1520 = vmatpush1.msra.mxu0 0.0
      %1521 = vmatprep.subr.mxu0 0.0
      %1522 = vmatpush1.msra.mxu0 0.0
      %1523 = vmatprep.subr.mxu0 0.0
      %1524 = vmatpush1.msra.mxu0 0.0
      %1525 = vmatprep.subr.mxu0 0.0
      %1526 = vmatpush1.msra.mxu0 0.0
      %1527 = vmatprep.subr.mxu0 0.0
      %1528 = vmatpush1.msra.mxu0 0.0
      %1529 = vmatprep.subr.mxu0 0.0
      %1530 = vmatpush1.msra.mxu0 %v1411
      %1531 = vmatprep.subr.mxu0 0.0
      %1532 = vmatpush1.msra.mxu0 %v1408
      %1533 = vmatprep.subr.mxu0 0.0
      %1534 = vmatpush2.msra.mxu0 0.0
      %1535 = vmatprep.subr.mxu0 0.0
      %1536 = vmatpush2.msra.mxu0 0.0
      %1537 = vmatprep.subr.mxu0 0.0
      %1538 = vmatpush2.msra.mxu0 0.0
      %1539 = vmatprep.subr.mxu0 0.0
      %1540 = vmatpush2.msra.mxu0 0.0
      %1541 = vmatprep.subr.mxu0 0.0
      %1542 = vmatpush2.msra.mxu0 0.0
      %1543 = vmatprep.subr.mxu0 0.0
      %1544 = vmatpush2.msra.mxu0 0.0
      %1545 = vmatprep.subr.mxu0 0.0
      %1546 = vmatpush2.msra.mxu0 0.0
      %1547 = vmatprep.subr.mxu0 0.0
      %1548 = vmatpush2.msra.mxu0 0.0
      %1549 = vmatprep.subr.mxu0 0.0
      %1550 = vmatpush2.msra.mxu0 0.0
      %1551 = vmatprep.subr.mxu0 0.0
      %1552 = vmatpush2.msra.mxu0 0.0
      %1553 = vmatprep.subr.mxu0 0.0
      %1554 = vmatpush2.msra.mxu0 0.0
      %1555 = vmatprep.subr.mxu0 0.0
      %1556 = vmatpush2.msra.mxu0 0.0
      %1557 = vmatprep.subr.mxu0 0.0
      %1558 = vmatpush2.msra.mxu0 0.0
      %1559 = vmatprep.subr.mxu0 0.0
      %1560 = vmatpush2.msra.mxu0 0.0
      %1561 = vmatprep.subr.mxu0 0.0
      %1562 = vmatpush2.msra.mxu0 0.0
      %1563 = vmatprep.subr.mxu0 0.0
      %1564 = vmatpush2.msra.mxu0 0.0
      %1565 = vmatprep.mubr.f32.mxu0 0.0
      %1566 = vmatmul.mubr.f32.gmra.mxu0 %v1419
      %v1567 = vpop.f32.mrf.mxu0
      %v1568 = vadd.f32 0.0, %v1567
      %v1569 = vpop.f32.mrf.mxu0
      %1570 = vmatprep.mubr.f32.mxu0 0.0
      %1571 = vmatmul.mubr.f32.gmra.mxu0 %v1422
      %v1572 = vpop.f32.mrf.mxu0
      %v1573 = vadd.f32 0.0, %v1572
      %v1574 = vpop.f32.mrf.mxu0
      %1575 = vdwg.mxu0
      %v1576 = vadd.f32 %v1301, %v1491
      %v1577 = vadd.f32 %v1303, %v1493
      %v1578 = vadd.f32 %v1378, %v1568
      %v1579 = vadd.f32 %v1307, %v1497
      %v1580 = vadd.f32 %v1309, %v1499
      %v1581 = vadd.f32 %v1383, %v1573
      %s1582 = scalar_lea.vmem %s4, 48
      %v1583 = vld [vmem:[%s1582] sm:$0xff]
      %v1584 = vld [vmem:[%s1582 + $0x8] sm:$0xff]
      %1585 = vrot.lane.b32.xlu0 %v993, 1
      %v1586 = vpop.permute.xlu0 %1585
      %1587 = vrot.lane.b32.xlu0 %v994, 1
      %v1588 = vpop.permute.xlu0 %1587
      %1589 = vrot.lane.b32.xlu0 %v995, 1
      %v1590 = vpop.permute.xlu0 %1589
      %1591 = vrot.lane.b32.xlu0 %v996, 1
      %v1592 = vpop.permute.xlu0 %1591
      %1593 = vrot.lane.b32.xlu0 %v997, 1
      %v1594 = vpop.permute.xlu0 %1593
      %1595 = vrot.lane.b32.xlu0 %v998, 1
      %v1596 = vpop.permute.xlu0 %1595
      %1597 = vrot.lane.b32.xlu0 %v999, 1
      %v1598 = vpop.permute.xlu0 %1597
      %1599 = vrot.lane.b32.xlu0 %v1000, 1
      %v1600 = vpop.permute.xlu0 %1599
      %vm1601 = vcmask 7168
      %v1602 = vsel %vm1601, %v1586, %v1588
      %v1603 = vsel %vm1601, %v1588, %v1590
      %v1604 = vsel %vm1601, %v1590, %v1592
      %v1605 = vsel %vm1601, %v1594, %v1596
      %v1606 = vsel %vm1601, %v1596, %v1598
      %v1607 = vsel %vm1601, %v1598, %v1600
      %v1615 = vsel %vm1041, %v1583, 0
      %v1618 = vsel %vm1041, %v1584, 0
      %1620 = vmatprep.subr.mxu0 0.0
      %1621 = vmatpush1.msra.mxu0 0.0
      %1622 = vmatprep.subr.mxu0 0.0
      %1623 = vmatpush1.msra.mxu0 0.0
      %1624 = vmatprep.subr.mxu0 0.0
      %1625 = vmatpush1.msra.mxu0 0.0
      %1626 = vmatprep.subr.mxu0 0.0
      %1627 = vmatpush1.msra.mxu0 0.0
      %1628 = vmatprep.subr.mxu0 0.0
      %1629 = vmatpush1.msra.mxu0 0.0
      %1630 = vmatprep.subr.mxu0 0.0
      %1631 = vmatpush1.msra.mxu0 0.0
      %1632 = vmatprep.subr.mxu0 0.0
      %1633 = vmatpush1.msra.mxu0 0.0
      %1634 = vmatprep.subr.mxu0 0.0
      %1635 = vmatpush1.msra.mxu0 0.0
      %1636 = vmatprep.subr.mxu0 0.0
      %1637 = vmatpush1.msra.mxu0 0.0
      %1638 = vmatprep.subr.mxu0 0.0
      %1639 = vmatpush1.msra.mxu0 0.0
      %1640 = vmatprep.subr.mxu0 0.0
      %1641 = vmatpush1.msra.mxu0 0.0
      %1642 = vmatprep.subr.mxu0 0.0
      %1643 = vmatpush1.msra.mxu0 0.0
      %1644 = vmatprep.subr.mxu0 0.0
      %1645 = vmatpush1.msra.mxu0 0.0
      %1646 = vmatprep.subr.mxu0 0.0
      %1647 = vmatpush1.msra.mxu0 0.0
      %1648 = vmatprep.subr.mxu0 %v1606
      %1649 = vmatpush1.msra.mxu0 %v1605
      %1650 = vmatprep.subr.mxu0 %v1603
      %1651 = vmatpush1.msra.mxu0 %v1602
      %1652 = vmatprep.subr.mxu0 0.0
      %1653 = vmatpush2.msra.mxu0 0.0
      %1654 = vmatprep.subr.mxu0 0.0
      %1655 = vmatpush2.msra.mxu0 0.0
      %1656 = vmatprep.subr.mxu0 0.0
      %1657 = vmatpush2.msra.mxu0 0.0
      %1658 = vmatprep.subr.mxu0 0.0
      %1659 = vmatpush2.msra.mxu0 0.0
      %1660 = vmatprep.subr.mxu0 0.0
      %1661 = vmatpush2.msra.mxu0 0.0
      %1662 = vmatprep.subr.mxu0 0.0
      %1663 = vmatpush2.msra.mxu0 0.0
      %1664 = vmatprep.subr.mxu0 0.0
      %1665 = vmatpush2.msra.mxu0 0.0
      %1666 = vmatprep.subr.mxu0 0.0
      %1667 = vmatpush2.msra.mxu0 0.0
      %1668 = vmatprep.subr.mxu0 0.0
      %1669 = vmatpush2.msra.mxu0 0.0
      %1670 = vmatprep.subr.mxu0 0.0
      %1671 = vmatpush2.msra.mxu0 0.0
      %1672 = vmatprep.subr.mxu0 0.0
      %1673 = vmatpush2.msra.mxu0 0.0
      %1674 = vmatprep.subr.mxu0 0.0
      %1675 = vmatpush2.msra.mxu0 0.0
      %1676 = vmatprep.subr.mxu0 0.0
      %1677 = vmatpush2.msra.mxu0 0.0
      %1678 = vmatprep.subr.mxu0 0.0
      %1679 = vmatpush2.msra.mxu0 0.0
      %1680 = vmatprep.subr.mxu0 0.0
      %1681 = vmatpush2.msra.mxu0 0.0
      %1682 = vmatprep.subr.mxu0 0.0
      %1683 = vmatpush2.msra.mxu0 0.0
      %1684 = vmatprep.mubr.f32.mxu0 0.0
      %1685 = vmatmul.mubr.f32.gmra.mxu0 %v1615
      %v1686 = vpop.f32.mrf.mxu0
      %v1687 = vadd.f32 0.0, %v1686
      %v1688 = vpop.f32.mrf.mxu0
      %v1689 = vadd.f32 0.0, %v1688
      %1690 = vmatprep.mubr.f32.mxu0 0.0
      %1691 = vmatmul.mubr.f32.gmra.mxu0 %v1618
      %v1692 = vpop.f32.mrf.mxu0
      %v1693 = vadd.f32 0.0, %v1692
      %v1694 = vpop.f32.mrf.mxu0
      %v1695 = vadd.f32 0.0, %v1694
      %1696 = vdwg.mxu0
      %1697 = vmatprep.subr.mxu0 0.0
      %1698 = vmatpush1.msra.mxu0 0.0
      %1699 = vmatprep.subr.mxu0 0.0
      %1700 = vmatpush1.msra.mxu0 0.0
      %1701 = vmatprep.subr.mxu0 0.0
      %1702 = vmatpush1.msra.mxu0 0.0
      %1703 = vmatprep.subr.mxu0 0.0
      %1704 = vmatpush1.msra.mxu0 0.0
      %1705 = vmatprep.subr.mxu0 0.0
      %1706 = vmatpush1.msra.mxu0 0.0
      %1707 = vmatprep.subr.mxu0 0.0
      %1708 = vmatpush1.msra.mxu0 0.0
      %1709 = vmatprep.subr.mxu0 0.0
      %1710 = vmatpush1.msra.mxu0 0.0
      %1711 = vmatprep.subr.mxu0 0.0
      %1712 = vmatpush1.msra.mxu0 0.0
      %1713 = vmatprep.subr.mxu0 0.0
      %1714 = vmatpush1.msra.mxu0 0.0
      %1715 = vmatprep.subr.mxu0 0.0
      %1716 = vmatpush1.msra.mxu0 0.0
      %1717 = vmatprep.subr.mxu0 0.0
      %1718 = vmatpush1.msra.mxu0 0.0
      %1719 = vmatprep.subr.mxu0 0.0
      %1720 = vmatpush1.msra.mxu0 0.0
      %1721 = vmatprep.subr.mxu0 0.0
      %1722 = vmatpush1.msra.mxu0 0.0
      %1723 = vmatprep.subr.mxu0 0.0
      %1724 = vmatpush1.msra.mxu0 0.0
      %1725 = vmatprep.subr.mxu0 0.0
      %1726 = vmatpush1.msra.mxu0 %v1607
      %1727 = vmatprep.subr.mxu0 0.0
      %1728 = vmatpush1.msra.mxu0 %v1604
      %1729 = vmatprep.subr.mxu0 0.0
      %1730 = vmatpush2.msra.mxu0 0.0
      %1731 = vmatprep.subr.mxu0 0.0
      %1732 = vmatpush2.msra.mxu0 0.0
      %1733 = vmatprep.subr.mxu0 0.0
      %1734 = vmatpush2.msra.mxu0 0.0
      %1735 = vmatprep.subr.mxu0 0.0
      %1736 = vmatpush2.msra.mxu0 0.0
      %1737 = vmatprep.subr.mxu0 0.0
      %1738 = vmatpush2.msra.mxu0 0.0
      %1739 = vmatprep.subr.mxu0 0.0
      %1740 = vmatpush2.msra.mxu0 0.0
      %1741 = vmatprep.subr.mxu0 0.0
      %1742 = vmatpush2.msra.mxu0 0.0
      %1743 = vmatprep.subr.mxu0 0.0
      %1744 = vmatpush2.msra.mxu0 0.0
      %1745 = vmatprep.subr.mxu0 0.0
      %1746 = vmatpush2.msra.mxu0 0.0
      %1747 = vmatprep.subr.mxu0 0.0
      %1748 = vmatpush2.msra.mxu0 0.0
      %1749 = vmatprep.subr.mxu0 0.0
      %1750 = vmatpush2.msra.mxu0 0.0
      %1751 = vmatprep.subr.mxu0 0.0
      %1752 = vmatpush2.msra.mxu0 0.0
      %1753 = vmatprep.subr.mxu0 0.0
      %1754 = vmatpush2.msra.mxu0 0.0
      %1755 = vmatprep.subr.mxu0 0.0
      %1756 = vmatpush2.msra.mxu0 0.0
      %1757 = vmatprep.subr.mxu0 0.0
      %1758 = vmatpush2.msra.mxu0 0.0
      %1759 = vmatprep.subr.mxu0 0.0
      %1760 = vmatpush2.msra.mxu0 0.0
      %1761 = vmatprep.mubr.f32.mxu0 0.0
      %1762 = vmatmul.mubr.f32.gmra.mxu0 %v1615
      %v1763 = vpop.f32.mrf.mxu0
      %v1764 = vadd.f32 0.0, %v1763
      %v1765 = vpop.f32.mrf.mxu0
      %1766 = vmatprep.mubr.f32.mxu0 0.0
      %1767 = vmatmul.mubr.f32.gmra.mxu0 %v1618
      %v1768 = vpop.f32.mrf.mxu0
      %v1769 = vadd.f32 0.0, %v1768
      %v1770 = vpop.f32.mrf.mxu0
      %1771 = vdwg.mxu0
      %v1772 = vadd.f32 %v1576, %v1687
      %v1773 = vadd.f32 %v1577, %v1689
      %v1774 = vadd.f32 %v1578, %v1764
      %v1775 = vadd.f32 %v1579, %v1693
      %v1776 = vadd.f32 %v1580, %v1695
      %v1777 = vadd.f32 %v1581, %v1769
      %s1778 = scalar_lea.vmem %s4, 64
      %v1779 = vld [vmem:[%s1778] sm:$0xff]
      %v1780 = vld [vmem:[%s1778 + $0x8] sm:$0xff]
      %v1782 = vsel %vm1041, %v1779, 0
      %v1785 = vsel %vm1041, %v1780, 0
      %1787 = vmatprep.subr.mxu0 0.0
      %1788 = vmatpush1.msra.mxu0 0.0
      %1789 = vmatprep.subr.mxu0 0.0
      %1790 = vmatpush1.msra.mxu0 0.0
      %1791 = vmatprep.subr.mxu0 0.0
      %1792 = vmatpush1.msra.mxu0 0.0
      %1793 = vmatprep.subr.mxu0 0.0
      %1794 = vmatpush1.msra.mxu0 0.0
      %1795 = vmatprep.subr.mxu0 0.0
      %1796 = vmatpush1.msra.mxu0 0.0
      %1797 = vmatprep.subr.mxu0 0.0
      %1798 = vmatpush1.msra.mxu0 0.0
      %1799 = vmatprep.subr.mxu0 0.0
      %1800 = vmatpush1.msra.mxu0 0.0
      %1801 = vmatprep.subr.mxu0 0.0
      %1802 = vmatpush1.msra.mxu0 0.0
      %1803 = vmatprep.subr.mxu0 0.0
      %1804 = vmatpush1.msra.mxu0 0.0
      %1805 = vmatprep.subr.mxu0 0.0
      %1806 = vmatpush1.msra.mxu0 0.0
      %1807 = vmatprep.subr.mxu0 0.0
      %1808 = vmatpush1.msra.mxu0 0.0
      %1809 = vmatprep.subr.mxu0 0.0
      %1810 = vmatpush1.msra.mxu0 0.0
      %1811 = vmatprep.subr.mxu0 0.0
      %1812 = vmatpush1.msra.mxu0 0.0
      %1813 = vmatprep.subr.mxu0 0.0
      %1814 = vmatpush1.msra.mxu0 0.0
      %1815 = vmatprep.subr.mxu0 %v999
      %1816 = vmatpush1.msra.mxu0 %v998
      %1817 = vmatprep.subr.mxu0 %v995
      %1818 = vmatpush1.msra.mxu0 %v994
      %1819 = vmatprep.subr.mxu0 0.0
      %1820 = vmatpush2.msra.mxu0 0.0
      %1821 = vmatprep.subr.mxu0 0.0
      %1822 = vmatpush2.msra.mxu0 0.0
      %1823 = vmatprep.subr.mxu0 0.0
      %1824 = vmatpush2.msra.mxu0 0.0
      %1825 = vmatprep.subr.mxu0 0.0
      %1826 = vmatpush2.msra.mxu0 0.0
      %1827 = vmatprep.subr.mxu0 0.0
      %1828 = vmatpush2.msra.mxu0 0.0
      %1829 = vmatprep.subr.mxu0 0.0
      %1830 = vmatpush2.msra.mxu0 0.0
      %1831 = vmatprep.subr.mxu0 0.0
      %1832 = vmatpush2.msra.mxu0 0.0
      %1833 = vmatprep.subr.mxu0 0.0
      %1834 = vmatpush2.msra.mxu0 0.0
      %1835 = vmatprep.subr.mxu0 0.0
      %1836 = vmatpush2.msra.mxu0 0.0
      %1837 = vmatprep.subr.mxu0 0.0
      %1838 = vmatpush2.msra.mxu0 0.0
      %1839 = vmatprep.subr.mxu0 0.0
      %1840 = vmatpush2.msra.mxu0 0.0
      %1841 = vmatprep.subr.mxu0 0.0
      %1842 = vmatpush2.msra.mxu0 0.0
      %1843 = vmatprep.subr.mxu0 0.0
      %1844 = vmatpush2.msra.mxu0 0.0
      %1845 = vmatprep.subr.mxu0 0.0
      %1846 = vmatpush2.msra.mxu0 0.0
      %1847 = vmatprep.subr.mxu0 0.0
      %1848 = vmatpush2.msra.mxu0 0.0
      %1849 = vmatprep.subr.mxu0 0.0
      %1850 = vmatpush2.msra.mxu0 0.0
      %1851 = vmatprep.mubr.f32.mxu0 0.0
      %1852 = vmatmul.mubr.f32.gmra.mxu0 %v1782
      %v1853 = vpop.f32.mrf.mxu0
      %v1854 = vadd.f32 0.0, %v1853
      %v1855 = vpop.f32.mrf.mxu0
      %v1856 = vadd.f32 0.0, %v1855
      %1857 = vmatprep.mubr.f32.mxu0 0.0
      %1858 = vmatmul.mubr.f32.gmra.mxu0 %v1785
      %v1859 = vpop.f32.mrf.mxu0
      %v1860 = vadd.f32 0.0, %v1859
      %v1861 = vpop.f32.mrf.mxu0
      %v1862 = vadd.f32 0.0, %v1861
      %1863 = vdwg.mxu0
      %1864 = vmatprep.subr.mxu0 0.0
      %1865 = vmatpush1.msra.mxu0 0.0
      %1866 = vmatprep.subr.mxu0 0.0
      %1867 = vmatpush1.msra.mxu0 0.0
      %1868 = vmatprep.subr.mxu0 0.0
      %1869 = vmatpush1.msra.mxu0 0.0
      %1870 = vmatprep.subr.mxu0 0.0
      %1871 = vmatpush1.msra.mxu0 0.0
      %1872 = vmatprep.subr.mxu0 0.0
      %1873 = vmatpush1.msra.mxu0 0.0
      %1874 = vmatprep.subr.mxu0 0.0
      %1875 = vmatpush1.msra.mxu0 0.0
      %1876 = vmatprep.subr.mxu0 0.0
      %1877 = vmatpush1.msra.mxu0 0.0
      %1878 = vmatprep.subr.mxu0 0.0
      %1879 = vmatpush1.msra.mxu0 0.0
      %1880 = vmatprep.subr.mxu0 0.0
      %1881 = vmatpush1.msra.mxu0 0.0
      %1882 = vmatprep.subr.mxu0 0.0
      %1883 = vmatpush1.msra.mxu0 0.0
      %1884 = vmatprep.subr.mxu0 0.0
      %1885 = vmatpush1.msra.mxu0 0.0
      %1886 = vmatprep.subr.mxu0 0.0
      %1887 = vmatpush1.msra.mxu0 0.0
      %1888 = vmatprep.subr.mxu0 0.0
      %1889 = vmatpush1.msra.mxu0 0.0
      %1890 = vmatprep.subr.mxu0 0.0
      %1891 = vmatpush1.msra.mxu0 0.0
      %1892 = vmatprep.subr.mxu0 0.0
      %1893 = vmatpush1.msra.mxu0 %v1000
      %1894 = vmatprep.subr.mxu0 0.0
      %1895 = vmatpush1.msra.mxu0 %v996
      %1896 = vmatprep.subr.mxu0 0.0
      %1897 = vmatpush2.msra.mxu0 0.0
      %1898 = vmatprep.subr.mxu0 0.0
      %1899 = vmatpush2.msra.mxu0 0.0
      %1900 = vmatprep.subr.mxu0 0.0
      %1901 = vmatpush2.msra.mxu0 0.0
      %1902 = vmatprep.subr.mxu0 0.0
      %1903 = vmatpush2.msra.mxu0 0.0
      %1904 = vmatprep.subr.mxu0 0.0
      %1905 = vmatpush2.msra.mxu0 0.0
      %1906 = vmatprep.subr.mxu0 0.0
      %1907 = vmatpush2.msra.mxu0 0.0
      %1908 = vmatprep.subr.mxu0 0.0
      %1909 = vmatpush2.msra.mxu0 0.0
      %1910 = vmatprep.subr.mxu0 0.0
      %1911 = vmatpush2.msra.mxu0 0.0
      %1912 = vmatprep.subr.mxu0 0.0
      %1913 = vmatpush2.msra.mxu0 0.0
      %1914 = vmatprep.subr.mxu0 0.0
      %1915 = vmatpush2.msra.mxu0 0.0
      %1916 = vmatprep.subr.mxu0 0.0
      %1917 = vmatpush2.msra.mxu0 0.0
      %1918 = vmatprep.subr.mxu0 0.0
      %1919 = vmatpush2.msra.mxu0 0.0
      %1920 = vmatprep.subr.mxu0 0.0
      %1921 = vmatpush2.msra.mxu0 0.0
      %1922 = vmatprep.subr.mxu0 0.0
      %1923 = vmatpush2.msra.mxu0 0.0
      %1924 = vmatprep.subr.mxu0 0.0
      %1925 = vmatpush2.msra.mxu0 0.0
      %1926 = vmatprep.subr.mxu0 0.0
      %1927 = vmatpush2.msra.mxu0 0.0
      %1928 = vmatprep.mubr.f32.mxu0 0.0
      %1929 = vmatmul.mubr.f32.gmra.mxu0 %v1782
      %v1930 = vpop.f32.mrf.mxu0
      %v1931 = vadd.f32 0.0, %v1930
      %v1932 = vpop.f32.mrf.mxu0
      %1933 = vmatprep.mubr.f32.mxu0 0.0
      %1934 = vmatmul.mubr.f32.gmra.mxu0 %v1785
      %v1935 = vpop.f32.mrf.mxu0
      %v1936 = vadd.f32 0.0, %v1935
      %v1937 = vpop.f32.mrf.mxu0
      %1938 = vdwg.mxu0
      %v1939 = vadd.f32 %v1772, %v1854
      %v1940 = vadd.f32 %v1773, %v1856
      %v1941 = vadd.f32 %v1774, %v1931
      %v1942 = vadd.f32 %v1775, %v1860
      %v1943 = vadd.f32 %v1776, %v1862
      %v1944 = vadd.f32 %v1777, %v1936
      %s1945 = scalar_lea.vmem %s4, 80
      %v1946 = vld [vmem:[%s1945] sm:$0xff]
      %v1947 = vld [vmem:[%s1945 + $0x8] sm:$0xff]
      %v1948 = vld [vmem:[#allocation2 + $0x8] sm:$0xff]
      %v1949 = vld [vmem:[#allocation2 + $0x10] sm:$0xff]
      %v1950 = vld [vmem:[#allocation2 + $0x18] sm:$0xff]
      %v1951 = vld [vmem:[#allocation2 + $0x20] sm:$0xff]
      %v1952 = vld [vmem:[#allocation2 + $0x30] sm:$0xff]
      %v1953 = vld [vmem:[#allocation2 + $0x38] sm:$0xff]
      %v1954 = vld [vmem:[#allocation2 + $0x40] sm:$0xff]
      %v1955 = vld [vmem:[#allocation2 + $0x48] sm:$0xff]
      %1964 = vrot.lane.b32.xlu0 %v1948, 127
      %v1965 = vpop.permute.xlu0 %1964
      %1966 = vrot.lane.b32.xlu0 %v1949, 127
      %v1967 = vpop.permute.xlu0 %1966
      %1968 = vrot.lane.b32.xlu0 %v1950, 127
      %v1969 = vpop.permute.xlu0 %1968
      %1970 = vrot.lane.b32.xlu0 %v1951, 127
      %v1971 = vpop.permute.xlu0 %1970
      %1972 = vrot.lane.b32.xlu0 %v1952, 127
      %v1973 = vpop.permute.xlu0 %1972
      %1974 = vrot.lane.b32.xlu0 %v1953, 127
      %v1975 = vpop.permute.xlu0 %1974
      %1976 = vrot.lane.b32.xlu0 %v1954, 127
      %v1977 = vpop.permute.xlu0 %1976
      %1978 = vrot.lane.b32.xlu0 %v1955, 127
      %v1979 = vpop.permute.xlu0 %1978
      %v1980 = vsel %vm438, %v1965, %v1967
      %v1981 = vsel %vm438, %v1967, %v1969
      %v1982 = vsel %vm438, %v1969, %v1971
      %v1983 = vsel %vm438, %v1973, %v1975
      %v1984 = vsel %vm438, %v1975, %v1977
      %v1985 = vsel %vm438, %v1977, %v1979
      %v1993 = vsel %vm1041, %v1946, 0
      %v1996 = vsel %vm1041, %v1947, 0
      %1998 = vmatprep.subr.mxu0 0.0
      %1999 = vmatpush1.msra.mxu0 0.0
      %2000 = vmatprep.subr.mxu0 0.0
      %2001 = vmatpush1.msra.mxu0 0.0
      %2002 = vmatprep.subr.mxu0 0.0
      %2003 = vmatpush1.msra.mxu0 0.0
      %2004 = vmatprep.subr.mxu0 0.0
      %2005 = vmatpush1.msra.mxu0 0.0
      %2006 = vmatprep.subr.mxu0 0.0
      %2007 = vmatpush1.msra.mxu0 0.0
      %2008 = vmatprep.subr.mxu0 0.0
      %2009 = vmatpush1.msra.mxu0 0.0
      %2010 = vmatprep.subr.mxu0 0.0
      %2011 = vmatpush1.msra.mxu0 0.0
      %2012 = vmatprep.subr.mxu0 0.0
      %2013 = vmatpush1.msra.mxu0 0.0
      %2014 = vmatprep.subr.mxu0 0.0
      %2015 = vmatpush1.msra.mxu0 0.0
      %2016 = vmatprep.subr.mxu0 0.0
      %2017 = vmatpush1.msra.mxu0 0.0
      %2018 = vmatprep.subr.mxu0 0.0
      %2019 = vmatpush1.msra.mxu0 0.0
      %2020 = vmatprep.subr.mxu0 0.0
      %2021 = vmatpush1.msra.mxu0 0.0
      %2022 = vmatprep.subr.mxu0 0.0
      %2023 = vmatpush1.msra.mxu0 0.0
      %2024 = vmatprep.subr.mxu0 0.0
      %2025 = vmatpush1.msra.mxu0 0.0
      %2026 = vmatprep.subr.mxu0 %v1984
      %2027 = vmatpush1.msra.mxu0 %v1983
      %2028 = vmatprep.subr.mxu0 %v1981
      %2029 = vmatpush1.msra.mxu0 %v1980
      %2030 = vmatprep.subr.mxu0 0.0
      %2031 = vmatpush2.msra.mxu0 0.0
      %2032 = vmatprep.subr.mxu0 0.0
      %2033 = vmatpush2.msra.mxu0 0.0
      %2034 = vmatprep.subr.mxu0 0.0
      %2035 = vmatpush2.msra.mxu0 0.0
      %2036 = vmatprep.subr.mxu0 0.0
      %2037 = vmatpush2.msra.mxu0 0.0
      %2038 = vmatprep.subr.mxu0 0.0
      %2039 = vmatpush2.msra.mxu0 0.0
      %2040 = vmatprep.subr.mxu0 0.0
      %2041 = vmatpush2.msra.mxu0 0.0
      %2042 = vmatprep.subr.mxu0 0.0
      %2043 = vmatpush2.msra.mxu0 0.0
      %2044 = vmatprep.subr.mxu0 0.0
      %2045 = vmatpush2.msra.mxu0 0.0
      %2046 = vmatprep.subr.mxu0 0.0
      %2047 = vmatpush2.msra.mxu0 0.0
      %2048 = vmatprep.subr.mxu0 0.0
      %2049 = vmatpush2.msra.mxu0 0.0
      %2050 = vmatprep.subr.mxu0 0.0
      %2051 = vmatpush2.msra.mxu0 0.0
      %2052 = vmatprep.subr.mxu0 0.0
      %2053 = vmatpush2.msra.mxu0 0.0
      %2054 = vmatprep.subr.mxu0 0.0
      %2055 = vmatpush2.msra.mxu0 0.0
      %2056 = vmatprep.subr.mxu0 0.0
      %2057 = vmatpush2.msra.mxu0 0.0
      %2058 = vmatprep.subr.mxu0 0.0
      %2059 = vmatpush2.msra.mxu0 0.0
      %2060 = vmatprep.subr.mxu0 0.0
      %2061 = vmatpush2.msra.mxu0 0.0
      %2062 = vmatprep.mubr.f32.mxu0 0.0
      %2063 = vmatmul.mubr.f32.gmra.mxu0 %v1993
      %v2064 = vpop.f32.mrf.mxu0
      %v2065 = vadd.f32 0.0, %v2064
      %v2066 = vpop.f32.mrf.mxu0
      %v2067 = vadd.f32 0.0, %v2066
      %2068 = vmatprep.mubr.f32.mxu0 0.0
      %2069 = vmatmul.mubr.f32.gmra.mxu0 %v1996
      %v2070 = vpop.f32.mrf.mxu0
      %v2071 = vadd.f32 0.0, %v2070
      %v2072 = vpop.f32.mrf.mxu0
      %v2073 = vadd.f32 0.0, %v2072
      %2074 = vdwg.mxu0
      %2075 = vmatprep.subr.mxu0 0.0
      %2076 = vmatpush1.msra.mxu0 0.0
      %2077 = vmatprep.subr.mxu0 0.0
      %2078 = vmatpush1.msra.mxu0 0.0
      %2079 = vmatprep.subr.mxu0 0.0
      %2080 = vmatpush1.msra.mxu0 0.0
      %2081 = vmatprep.subr.mxu0 0.0
      %2082 = vmatpush1.msra.mxu0 0.0
      %2083 = vmatprep.subr.mxu0 0.0
      %2084 = vmatpush1.msra.mxu0 0.0
      %2085 = vmatprep.subr.mxu0 0.0
      %2086 = vmatpush1.msra.mxu0 0.0
      %2087 = vmatprep.subr.mxu0 0.0
      %2088 = vmatpush1.msra.mxu0 0.0
      %2089 = vmatprep.subr.mxu0 0.0
      %2090 = vmatpush1.msra.mxu0 0.0
      %2091 = vmatprep.subr.mxu0 0.0
      %2092 = vmatpush1.msra.mxu0 0.0
      %2093 = vmatprep.subr.mxu0 0.0
      %2094 = vmatpush1.msra.mxu0 0.0
      %2095 = vmatprep.subr.mxu0 0.0
      %2096 = vmatpush1.msra.mxu0 0.0
      %2097 = vmatprep.subr.mxu0 0.0
      %2098 = vmatpush1.msra.mxu0 0.0
      %2099 = vmatprep.subr.mxu0 0.0
      %2100 = vmatpush1.msra.mxu0 0.0
      %2101 = vmatprep.subr.mxu0 0.0
      %2102 = vmatpush1.msra.mxu0 0.0
      %2103 = vmatprep.subr.mxu0 0.0
      %2104 = vmatpush1.msra.mxu0 %v1985
      %2105 = vmatprep.subr.mxu0 0.0
      %2106 = vmatpush1.msra.mxu0 %v1982
      %2107 = vmatprep.subr.mxu0 0.0
      %2108 = vmatpush2.msra.mxu0 0.0
      %2109 = vmatprep.subr.mxu0 0.0
      %2110 = vmatpush2.msra.mxu0 0.0
      %2111 = vmatprep.subr.mxu0 0.0
      %2112 = vmatpush2.msra.mxu0 0.0
      %2113 = vmatprep.subr.mxu0 0.0
      %2114 = vmatpush2.msra.mxu0 0.0
      %2115 = vmatprep.subr.mxu0 0.0
      %2116 = vmatpush2.msra.mxu0 0.0
      %2117 = vmatprep.subr.mxu0 0.0
      %2118 = vmatpush2.msra.mxu0 0.0
      %2119 = vmatprep.subr.mxu0 0.0
      %2120 = vmatpush2.msra.mxu0 0.0
      %2121 = vmatprep.subr.mxu0 0.0
      %2122 = vmatpush2.msra.mxu0 0.0
      %2123 = vmatprep.subr.mxu0 0.0
      %2124 = vmatpush2.msra.mxu0 0.0
      %2125 = vmatprep.subr.mxu0 0.0
      %2126 = vmatpush2.msra.mxu0 0.0
      %2127 = vmatprep.subr.mxu0 0.0
      %2128 = vmatpush2.msra.mxu0 0.0
      %2129 = vmatprep.subr.mxu0 0.0
      %2130 = vmatpush2.msra.mxu0 0.0
      %2131 = vmatprep.subr.mxu0 0.0
      %2132 = vmatpush2.msra.mxu0 0.0
      %2133 = vmatprep.subr.mxu0 0.0
      %2134 = vmatpush2.msra.mxu0 0.0
      %2135 = vmatprep.subr.mxu0 0.0
      %2136 = vmatpush2.msra.mxu0 0.0
      %2137 = vmatprep.subr.mxu0 0.0
      %2138 = vmatpush2.msra.mxu0 0.0
      %2139 = vmatprep.mubr.f32.mxu0 0.0
      %2140 = vmatmul.mubr.f32.gmra.mxu0 %v1993
      %v2141 = vpop.f32.mrf.mxu0
      %v2142 = vadd.f32 0.0, %v2141
      %v2143 = vpop.f32.mrf.mxu0
      %2144 = vmatprep.mubr.f32.mxu0 0.0
      %2145 = vmatmul.mubr.f32.gmra.mxu0 %v1996
      %v2146 = vpop.f32.mrf.mxu0
      %v2147 = vadd.f32 0.0, %v2146
      %v2148 = vpop.f32.mrf.mxu0
      %2149 = vdwg.mxu0
      %v2150 = vadd.f32 %v1939, %v2065
      %v2151 = vadd.f32 %v1940, %v2067
      %v2152 = vadd.f32 %v1941, %v2142
      %v2153 = vadd.f32 %v1942, %v2071
      %v2154 = vadd.f32 %v1943, %v2073
      %v2155 = vadd.f32 %v1944, %v2147
      %s2156 = scalar_lea.vmem %s4, 96
      %v2157 = vld [vmem:[%s2156] sm:$0xff]
      %v2158 = vld [vmem:[%s2156 + $0x8] sm:$0xff]
      %2159 = vrot.lane.b32.xlu0 %v1948, 111
      %v2160 = vpop.permute.xlu0 %2159
      %2161 = vrot.lane.b32.xlu0 %v1949, 111
      %v2162 = vpop.permute.xlu0 %2161
      %2163 = vrot.lane.b32.xlu0 %v1950, 111
      %v2164 = vpop.permute.xlu0 %2163
      %2165 = vrot.lane.b32.xlu0 %v1951, 111
      %v2166 = vpop.permute.xlu0 %2165
      %2167 = vrot.lane.b32.xlu0 %v1952, 111
      %v2168 = vpop.permute.xlu0 %2167
      %2169 = vrot.lane.b32.xlu0 %v1953, 111
      %v2170 = vpop.permute.xlu0 %2169
      %2171 = vrot.lane.b32.xlu0 %v1954, 111
      %v2172 = vpop.permute.xlu0 %2171
      %2173 = vrot.lane.b32.xlu0 %v1955, 111
      %v2174 = vpop.permute.xlu0 %2173
      %vm2175 = vcmask 908288
      %v2176 = vsel %vm2175, %v2160, %v2162
      %v2177 = vsel %vm2175, %v2162, %v2164
      %v2178 = vsel %vm2175, %v2164, %v2166
      %v2179 = vsel %vm2175, %v2168, %v2170
      %v2180 = vsel %vm2175, %v2170, %v2172
      %v2181 = vsel %vm2175, %v2172, %v2174
      %v2189 = vsel %vm1041, %v2157, 0
      %v2192 = vsel %vm1041, %v2158, 0
      %2194 = vmatprep.subr.mxu0 0.0
      %2195 = vmatpush1.msra.mxu0 0.0
      %2196 = vmatprep.subr.mxu0 0.0
      %2197 = vmatpush1.msra.mxu0 0.0
      %2198 = vmatprep.subr.mxu0 0.0
      %2199 = vmatpush1.msra.mxu0 0.0
      %2200 = vmatprep.subr.mxu0 0.0
      %2201 = vmatpush1.msra.mxu0 0.0
      %2202 = vmatprep.subr.mxu0 0.0
      %2203 = vmatpush1.msra.mxu0 0.0
      %2204 = vmatprep.subr.mxu0 0.0
      %2205 = vmatpush1.msra.mxu0 0.0
      %2206 = vmatprep.subr.mxu0 0.0
      %2207 = vmatpush1.msra.mxu0 0.0
      %2208 = vmatprep.subr.mxu0 0.0
      %2209 = vmatpush1.msra.mxu0 0.0
      %2210 = vmatprep.subr.mxu0 0.0
      %2211 = vmatpush1.msra.mxu0 0.0
      %2212 = vmatprep.subr.mxu0 0.0
      %2213 = vmatpush1.msra.mxu0 0.0
      %2214 = vmatprep.subr.mxu0 0.0
      %2215 = vmatpush1.msra.mxu0 0.0
      %2216 = vmatprep.subr.mxu0 0.0
      %2217 = vmatpush1.msra.mxu0 0.0
      %2218 = vmatprep.subr.mxu0 0.0
      %2219 = vmatpush1.msra.mxu0 0.0
      %2220 = vmatprep.subr.mxu0 0.0
      %2221 = vmatpush1.msra.mxu0 0.0
      %2222 = vmatprep.subr.mxu0 %v2180
      %2223 = vmatpush1.msra.mxu0 %v2179
      %2224 = vmatprep.subr.mxu0 %v2177
      %2225 = vmatpush1.msra.mxu0 %v2176
      %2226 = vmatprep.subr.mxu0 0.0
      %2227 = vmatpush2.msra.mxu0 0.0
      %2228 = vmatprep.subr.mxu0 0.0
      %2229 = vmatpush2.msra.mxu0 0.0
      %2230 = vmatprep.subr.mxu0 0.0
      %2231 = vmatpush2.msra.mxu0 0.0
      %2232 = vmatprep.subr.mxu0 0.0
      %2233 = vmatpush2.msra.mxu0 0.0
      %2234 = vmatprep.subr.mxu0 0.0
      %2235 = vmatpush2.msra.mxu0 0.0
      %2236 = vmatprep.subr.mxu0 0.0
      %2237 = vmatpush2.msra.mxu0 0.0
      %2238 = vmatprep.subr.mxu0 0.0
      %2239 = vmatpush2.msra.mxu0 0.0
      %2240 = vmatprep.subr.mxu0 0.0
      %2241 = vmatpush2.msra.mxu0 0.0
      %2242 = vmatprep.subr.mxu0 0.0
      %2243 = vmatpush2.msra.mxu0 0.0
      %2244 = vmatprep.subr.mxu0 0.0
      %2245 = vmatpush2.msra.mxu0 0.0
      %2246 = vmatprep.subr.mxu0 0.0
      %2247 = vmatpush2.msra.mxu0 0.0
      %2248 = vmatprep.subr.mxu0 0.0
      %2249 = vmatpush2.msra.mxu0 0.0
      %2250 = vmatprep.subr.mxu0 0.0
      %2251 = vmatpush2.msra.mxu0 0.0
      %2252 = vmatprep.subr.mxu0 0.0
      %2253 = vmatpush2.msra.mxu0 0.0
      %2254 = vmatprep.subr.mxu0 0.0
      %2255 = vmatpush2.msra.mxu0 0.0
      %2256 = vmatprep.subr.mxu0 0.0
      %2257 = vmatpush2.msra.mxu0 0.0
      %2258 = vmatprep.mubr.f32.mxu0 0.0
      %2259 = vmatmul.mubr.f32.gmra.mxu0 %v2189
      %v2260 = vpop.f32.mrf.mxu0
      %v2261 = vadd.f32 0.0, %v2260
      %v2262 = vpop.f32.mrf.mxu0
      %v2263 = vadd.f32 0.0, %v2262
      %2264 = vmatprep.mubr.f32.mxu0 0.0
      %2265 = vmatmul.mubr.f32.gmra.mxu0 %v2192
      %v2266 = vpop.f32.mrf.mxu0
      %v2267 = vadd.f32 0.0, %v2266
      %v2268 = vpop.f32.mrf.mxu0
      %v2269 = vadd.f32 0.0, %v2268
      %2270 = vdwg.mxu0
      %2271 = vmatprep.subr.mxu0 0.0
      %2272 = vmatpush1.msra.mxu0 0.0
      %2273 = vmatprep.subr.mxu0 0.0
      %2274 = vmatpush1.msra.mxu0 0.0
      %2275 = vmatprep.subr.mxu0 0.0
      %2276 = vmatpush1.msra.mxu0 0.0
      %2277 = vmatprep.subr.mxu0 0.0
      %2278 = vmatpush1.msra.mxu0 0.0
      %2279 = vmatprep.subr.mxu0 0.0
      %2280 = vmatpush1.msra.mxu0 0.0
      %2281 = vmatprep.subr.mxu0 0.0
      %2282 = vmatpush1.msra.mxu0 0.0
      %2283 = vmatprep.subr.mxu0 0.0
      %2284 = vmatpush1.msra.mxu0 0.0
      %2285 = vmatprep.subr.mxu0 0.0
      %2286 = vmatpush1.msra.mxu0 0.0
      %2287 = vmatprep.subr.mxu0 0.0
      %2288 = vmatpush1.msra.mxu0 0.0
      %2289 = vmatprep.subr.mxu0 0.0
      %2290 = vmatpush1.msra.mxu0 0.0
      %2291 = vmatprep.subr.mxu0 0.0
      %2292 = vmatpush1.msra.mxu0 0.0
      %2293 = vmatprep.subr.mxu0 0.0
      %2294 = vmatpush1.msra.mxu0 0.0
      %2295 = vmatprep.subr.mxu0 0.0
      %2296 = vmatpush1.msra.mxu0 0.0
      %2297 = vmatprep.subr.mxu0 0.0
      %2298 = vmatpush1.msra.mxu0 0.0
      %2299 = vmatprep.subr.mxu0 0.0
      %2300 = vmatpush1.msra.mxu0 %v2181
      %2301 = vmatprep.subr.mxu0 0.0
      %2302 = vmatpush1.msra.mxu0 %v2178
      %2303 = vmatprep.subr.mxu0 0.0
      %2304 = vmatpush2.msra.mxu0 0.0
      %2305 = vmatprep.subr.mxu0 0.0
      %2306 = vmatpush2.msra.mxu0 0.0
      %2307 = vmatprep.subr.mxu0 0.0
      %2308 = vmatpush2.msra.mxu0 0.0
      %2309 = vmatprep.subr.mxu0 0.0
      %2310 = vmatpush2.msra.mxu0 0.0
      %2311 = vmatprep.subr.mxu0 0.0
      %2312 = vmatpush2.msra.mxu0 0.0
      %2313 = vmatprep.subr.mxu0 0.0
      %2314 = vmatpush2.msra.mxu0 0.0
      %2315 = vmatprep.subr.mxu0 0.0
      %2316 = vmatpush2.msra.mxu0 0.0
      %2317 = vmatprep.subr.mxu0 0.0
      %2318 = vmatpush2.msra.mxu0 0.0
      %2319 = vmatprep.subr.mxu0 0.0
      %2320 = vmatpush2.msra.mxu0 0.0
      %2321 = vmatprep.subr.mxu0 0.0
      %2322 = vmatpush2.msra.mxu0 0.0
      %2323 = vmatprep.subr.mxu0 0.0
      %2324 = vmatpush2.msra.mxu0 0.0
      %2325 = vmatprep.subr.mxu0 0.0
      %2326 = vmatpush2.msra.mxu0 0.0
      %2327 = vmatprep.subr.mxu0 0.0
      %2328 = vmatpush2.msra.mxu0 0.0
      %2329 = vmatprep.subr.mxu0 0.0
      %2330 = vmatpush2.msra.mxu0 0.0
      %2331 = vmatprep.subr.mxu0 0.0
      %2332 = vmatpush2.msra.mxu0 0.0
      %2333 = vmatprep.subr.mxu0 0.0
      %2334 = vmatpush2.msra.mxu0 0.0
      %2335 = vmatprep.mubr.f32.mxu0 0.0
      %2336 = vmatmul.mubr.f32.gmra.mxu0 %v2189
      %v2337 = vpop.f32.mrf.mxu0
      %v2338 = vadd.f32 0.0, %v2337
      %v2339 = vpop.f32.mrf.mxu0
      %2340 = vmatprep.mubr.f32.mxu0 0.0
      %2341 = vmatmul.mubr.f32.gmra.mxu0 %v2192
      %v2342 = vpop.f32.mrf.mxu0
      %v2343 = vadd.f32 0.0, %v2342
      %v2344 = vpop.f32.mrf.mxu0
      %2345 = vdwg.mxu0
      %v2346 = vadd.f32 %v2150, %v2261
      %v2347 = vadd.f32 %v2151, %v2263
      %v2348 = vadd.f32 %v2152, %v2338
      %v2349 = vadd.f32 %v2153, %v2267
      %v2350 = vadd.f32 %v2154, %v2269
      %v2351 = vadd.f32 %v2155, %v2343
      %s2352 = scalar_lea.vmem %s4, 112
      %v2353 = vld [vmem:[%s2352] sm:$0xff]
      %v2354 = vld [vmem:[%s2352 + $0x8] sm:$0xff]
      %2355 = vrot.lane.b32.xlu0 %v1948, 110
      %v2356 = vpop.permute.xlu0 %2355
      %2357 = vrot.lane.b32.xlu0 %v1949, 110
      %v2358 = vpop.permute.xlu0 %2357
      %2359 = vrot.lane.b32.xlu0 %v1950, 110
      %v2360 = vpop.permute.xlu0 %2359
      %2361 = vrot.lane.b32.xlu0 %v1951, 110
      %v2362 = vpop.permute.xlu0 %2361
      %2363 = vrot.lane.b32.xlu0 %v1952, 110
      %v2364 = vpop.permute.xlu0 %2363
      %2365 = vrot.lane.b32.xlu0 %v1953, 110
      %v2366 = vpop.permute.xlu0 %2365
      %2367 = vrot.lane.b32.xlu0 %v1954, 110
      %v2368 = vpop.permute.xlu0 %2367
      %2369 = vrot.lane.b32.xlu0 %v1955, 110
      %v2370 = vpop.permute.xlu0 %2369
      %v2371 = vsel %vm564, %v2356, %v2358
      %v2372 = vsel %vm564, %v2358, %v2360
      %v2373 = vsel %vm564, %v2360, %v2362
      %v2374 = vsel %vm564, %v2364, %v2366
      %v2375 = vsel %vm564, %v2366, %v2368
      %v2376 = vsel %vm564, %v2368, %v2370
      %v2384 = vsel %vm1041, %v2353, 0
      %v2387 = vsel %vm1041, %v2354, 0
      %2389 = vmatprep.subr.mxu0 0.0
      %2390 = vmatpush1.msra.mxu0 0.0
      %2391 = vmatprep.subr.mxu0 0.0
      %2392 = vmatpush1.msra.mxu0 0.0
      %2393 = vmatprep.subr.mxu0 0.0
      %2394 = vmatpush1.msra.mxu0 0.0
      %2395 = vmatprep.subr.mxu0 0.0
      %2396 = vmatpush1.msra.mxu0 0.0
      %2397 = vmatprep.subr.mxu0 0.0
      %2398 = vmatpush1.msra.mxu0 0.0
      %2399 = vmatprep.subr.mxu0 0.0
      %2400 = vmatpush1.msra.mxu0 0.0
      %2401 = vmatprep.subr.mxu0 0.0
      %2402 = vmatpush1.msra.mxu0 0.0
      %2403 = vmatprep.subr.mxu0 0.0
      %2404 = vmatpush1.msra.mxu0 0.0
      %2405 = vmatprep.subr.mxu0 0.0
      %2406 = vmatpush1.msra.mxu0 0.0
      %2407 = vmatprep.subr.mxu0 0.0
      %2408 = vmatpush1.msra.mxu0 0.0
      %2409 = vmatprep.subr.mxu0 0.0
      %2410 = vmatpush1.msra.mxu0 0.0
      %2411 = vmatprep.subr.mxu0 0.0
      %2412 = vmatpush1.msra.mxu0 0.0
      %2413 = vmatprep.subr.mxu0 0.0
      %2414 = vmatpush1.msra.mxu0 0.0
      %2415 = vmatprep.subr.mxu0 0.0
      %2416 = vmatpush1.msra.mxu0 0.0
      %2417 = vmatprep.subr.mxu0 %v2375
      %2418 = vmatpush1.msra.mxu0 %v2374
      %2419 = vmatprep.subr.mxu0 %v2372
      %2420 = vmatpush1.msra.mxu0 %v2371
      %2421 = vmatprep.subr.mxu0 0.0
      %2422 = vmatpush2.msra.mxu0 0.0
      %2423 = vmatprep.subr.mxu0 0.0
      %2424 = vmatpush2.msra.mxu0 0.0
      %2425 = vmatprep.subr.mxu0 0.0
      %2426 = vmatpush2.msra.mxu0 0.0
      %2427 = vmatprep.subr.mxu0 0.0
      %2428 = vmatpush2.msra.mxu0 0.0
      %2429 = vmatprep.subr.mxu0 0.0
      %2430 = vmatpush2.msra.mxu0 0.0
      %2431 = vmatprep.subr.mxu0 0.0
      %2432 = vmatpush2.msra.mxu0 0.0
      %2433 = vmatprep.subr.mxu0 0.0
      %2434 = vmatpush2.msra.mxu0 0.0
      %2435 = vmatprep.subr.mxu0 0.0
      %2436 = vmatpush2.msra.mxu0 0.0
      %2437 = vmatprep.subr.mxu0 0.0
      %2438 = vmatpush2.msra.mxu0 0.0
      %2439 = vmatprep.subr.mxu0 0.0
      %2440 = vmatpush2.msra.mxu0 0.0
      %2441 = vmatprep.subr.mxu0 0.0
      %2442 = vmatpush2.msra.mxu0 0.0
      %2443 = vmatprep.subr.mxu0 0.0
      %2444 = vmatpush2.msra.mxu0 0.0
      %2445 = vmatprep.subr.mxu0 0.0
      %2446 = vmatpush2.msra.mxu0 0.0
      %2447 = vmatprep.subr.mxu0 0.0
      %2448 = vmatpush2.msra.mxu0 0.0
      %2449 = vmatprep.subr.mxu0 0.0
      %2450 = vmatpush2.msra.mxu0 0.0
      %2451 = vmatprep.subr.mxu0 0.0
      %2452 = vmatpush2.msra.mxu0 0.0
      %2453 = vmatprep.mubr.f32.mxu0 0.0
      %2454 = vmatmul.mubr.f32.gmra.mxu0 %v2384
      %v2455 = vpop.f32.mrf.mxu0
      %v2456 = vadd.f32 0.0, %v2455
      %v2457 = vpop.f32.mrf.mxu0
      %v2458 = vadd.f32 0.0, %v2457
      %2459 = vmatprep.mubr.f32.mxu0 0.0
      %2460 = vmatmul.mubr.f32.gmra.mxu0 %v2387
      %v2461 = vpop.f32.mrf.mxu0
      %v2462 = vadd.f32 0.0, %v2461
      %v2463 = vpop.f32.mrf.mxu0
      %v2464 = vadd.f32 0.0, %v2463
      %2465 = vdwg.mxu0
      %2466 = vmatprep.subr.mxu0 0.0
      %2467 = vmatpush1.msra.mxu0 0.0
      %2468 = vmatprep.subr.mxu0 0.0
      %2469 = vmatpush1.msra.mxu0 0.0
      %2470 = vmatprep.subr.mxu0 0.0
      %2471 = vmatpush1.msra.mxu0 0.0
      %2472 = vmatprep.subr.mxu0 0.0
      %2473 = vmatpush1.msra.mxu0 0.0
      %2474 = vmatprep.subr.mxu0 0.0
      %2475 = vmatpush1.msra.mxu0 0.0
      %2476 = vmatprep.subr.mxu0 0.0
      %2477 = vmatpush1.msra.mxu0 0.0
      %2478 = vmatprep.subr.mxu0 0.0
      %2479 = vmatpush1.msra.mxu0 0.0
      %2480 = vmatprep.subr.mxu0 0.0
      %2481 = vmatpush1.msra.mxu0 0.0
      %2482 = vmatprep.subr.mxu0 0.0
      %2483 = vmatpush1.msra.mxu0 0.0
      %2484 = vmatprep.subr.mxu0 0.0
      %2485 = vmatpush1.msra.mxu0 0.0
      %2486 = vmatprep.subr.mxu0 0.0
      %2487 = vmatpush1.msra.mxu0 0.0
      %2488 = vmatprep.subr.mxu0 0.0
      %2489 = vmatpush1.msra.mxu0 0.0
      %2490 = vmatprep.subr.mxu0 0.0
      %2491 = vmatpush1.msra.mxu0 0.0
      %2492 = vmatprep.subr.mxu0 0.0
      %2493 = vmatpush1.msra.mxu0 0.0
      %2494 = vmatprep.subr.mxu0 0.0
      %2495 = vmatpush1.msra.mxu0 %v2376
      %2496 = vmatprep.subr.mxu0 0.0
      %2497 = vmatpush1.msra.mxu0 %v2373
      %2498 = vmatprep.subr.mxu0 0.0
      %2499 = vmatpush2.msra.mxu0 0.0
      %2500 = vmatprep.subr.mxu0 0.0
      %2501 = vmatpush2.msra.mxu0 0.0
      %2502 = vmatprep.subr.mxu0 0.0
      %2503 = vmatpush2.msra.mxu0 0.0
      %2504 = vmatprep.subr.mxu0 0.0
      %2505 = vmatpush2.msra.mxu0 0.0
      %2506 = vmatprep.subr.mxu0 0.0
      %2507 = vmatpush2.msra.mxu0 0.0
      %2508 = vmatprep.subr.mxu0 0.0
      %2509 = vmatpush2.msra.mxu0 0.0
      %2510 = vmatprep.subr.mxu0 0.0
      %2511 = vmatpush2.msra.mxu0 0.0
      %2512 = vmatprep.subr.mxu0 0.0
      %2513 = vmatpush2.msra.mxu0 0.0
      %2514 = vmatprep.subr.mxu0 0.0
      %2515 = vmatpush2.msra.mxu0 0.0
      %2516 = vmatprep.subr.mxu0 0.0
      %2517 = vmatpush2.msra.mxu0 0.0
      %2518 = vmatprep.subr.mxu0 0.0
      %2519 = vmatpush2.msra.mxu0 0.0
      %2520 = vmatprep.subr.mxu0 0.0
      %2521 = vmatpush2.msra.mxu0 0.0
      %2522 = vmatprep.subr.mxu0 0.0
      %2523 = vmatpush2.msra.mxu0 0.0
      %2524 = vmatprep.subr.mxu0 0.0
      %2525 = vmatpush2.msra.mxu0 0.0
      %2526 = vmatprep.subr.mxu0 0.0
      %2527 = vmatpush2.msra.mxu0 0.0
      %2528 = vmatprep.subr.mxu0 0.0
      %2529 = vmatpush2.msra.mxu0 0.0
      %2530 = vmatprep.mubr.f32.mxu0 0.0
      %2531 = vmatmul.mubr.f32.gmra.mxu0 %v2384
      %v2532 = vpop.f32.mrf.mxu0
      %v2533 = vadd.f32 0.0, %v2532
      %v2534 = vpop.f32.mrf.mxu0
      %2535 = vmatprep.mubr.f32.mxu0 0.0
      %2536 = vmatmul.mubr.f32.gmra.mxu0 %v2387
      %v2537 = vpop.f32.mrf.mxu0
      %v2538 = vadd.f32 0.0, %v2537
      %v2539 = vpop.f32.mrf.mxu0
      %2540 = vdwg.mxu0
      %v2541 = vadd.f32 %v2346, %v2456
      %v2542 = vadd.f32 %v2347, %v2458
      %v2543 = vadd.f32 %v2348, %v2533
      %v2544 = vadd.f32 %v2349, %v2462
      %v2545 = vadd.f32 %v2350, %v2464
      %v2546 = vadd.f32 %v2351, %v2538
      %s2547 = scalar_lea.vmem %s4, 128
      %v2548 = vld [vmem:[%s2547] sm:$0xff]
      %v2549 = vld [vmem:[%s2547 + $0x8] sm:$0xff]
      %2550 = vrot.lane.b32.xlu0 %v1948, 109
      %v2551 = vpop.permute.xlu0 %2550
      %2552 = vrot.lane.b32.xlu0 %v1949, 109
      %v2553 = vpop.permute.xlu0 %2552
      %2554 = vrot.lane.b32.xlu0 %v1950, 109
      %v2555 = vpop.permute.xlu0 %2554
      %2556 = vrot.lane.b32.xlu0 %v1951, 109
      %v2557 = vpop.permute.xlu0 %2556
      %2558 = vrot.lane.b32.xlu0 %v1952, 109
      %v2559 = vpop.permute.xlu0 %2558
      %2560 = vrot.lane.b32.xlu0 %v1953, 109
      %v2561 = vpop.permute.xlu0 %2560
      %2562 = vrot.lane.b32.xlu0 %v1954, 109
      %v2563 = vpop.permute.xlu0 %2562
      %2564 = vrot.lane.b32.xlu0 %v1955, 109
      %v2565 = vpop.permute.xlu0 %2564
      %v2566 = vsel %vm619, %v2551, %v2553
      %v2567 = vsel %vm619, %v2553, %v2555
      %v2568 = vsel %vm619, %v2555, %v2557
      %v2569 = vsel %vm619, %v2559, %v2561
      %v2570 = vsel %vm619, %v2561, %v2563
      %v2571 = vsel %vm619, %v2563, %v2565
      %v2579 = vsel %vm1041, %v2548, 0
      %v2582 = vsel %vm1041, %v2549, 0
      %2584 = vmatprep.subr.mxu0 0.0
      %2585 = vmatpush1.msra.mxu0 0.0
      %2586 = vmatprep.subr.mxu0 0.0
      %2587 = vmatpush1.msra.mxu0 0.0
      %2588 = vmatprep.subr.mxu0 0.0
      %2589 = vmatpush1.msra.mxu0 0.0
      %2590 = vmatprep.subr.mxu0 0.0
      %2591 = vmatpush1.msra.mxu0 0.0
      %2592 = vmatprep.subr.mxu0 0.0
      %2593 = vmatpush1.msra.mxu0 0.0
      %2594 = vmatprep.subr.mxu0 0.0
      %2595 = vmatpush1.msra.mxu0 0.0
      %2596 = vmatprep.subr.mxu0 0.0
      %2597 = vmatpush1.msra.mxu0 0.0
      %2598 = vmatprep.subr.mxu0 0.0
      %2599 = vmatpush1.msra.mxu0 0.0
      %2600 = vmatprep.subr.mxu0 0.0
      %2601 = vmatpush1.msra.mxu0 0.0
      %2602 = vmatprep.subr.mxu0 0.0
      %2603 = vmatpush1.msra.mxu0 0.0
      %2604 = vmatprep.subr.mxu0 0.0
      %2605 = vmatpush1.msra.mxu0 0.0
      %2606 = vmatprep.subr.mxu0 0.0
      %2607 = vmatpush1.msra.mxu0 0.0
      %2608 = vmatprep.subr.mxu0 0.0
      %2609 = vmatpush1.msra.mxu0 0.0
      %2610 = vmatprep.subr.mxu0 0.0
      %2611 = vmatpush1.msra.mxu0 0.0
      %2612 = vmatprep.subr.mxu0 %v2570
      %2613 = vmatpush1.msra.mxu0 %v2569
      %2614 = vmatprep.subr.mxu0 %v2567
      %2615 = vmatpush1.msra.mxu0 %v2566
      %2616 = vmatprep.subr.mxu0 0.0
      %2617 = vmatpush2.msra.mxu0 0.0
      %2618 = vmatprep.subr.mxu0 0.0
      %2619 = vmatpush2.msra.mxu0 0.0
      %2620 = vmatprep.subr.mxu0 0.0
      %2621 = vmatpush2.msra.mxu0 0.0
      %2622 = vmatprep.subr.mxu0 0.0
      %2623 = vmatpush2.msra.mxu0 0.0
      %2624 = vmatprep.subr.mxu0 0.0
      %2625 = vmatpush2.msra.mxu0 0.0
      %2626 = vmatprep.subr.mxu0 0.0
      %2627 = vmatpush2.msra.mxu0 0.0
      %2628 = vmatprep.subr.mxu0 0.0
      %2629 = vmatpush2.msra.mxu0 0.0
      %2630 = vmatprep.subr.mxu0 0.0
      %2631 = vmatpush2.msra.mxu0 0.0
      %2632 = vmatprep.subr.mxu0 0.0
      %2633 = vmatpush2.msra.mxu0 0.0
      %2634 = vmatprep.subr.mxu0 0.0
      %2635 = vmatpush2.msra.mxu0 0.0
      %2636 = vmatprep.subr.mxu0 0.0
      %2637 = vmatpush2.msra.mxu0 0.0
      %2638 = vmatprep.subr.mxu0 0.0
      %2639 = vmatpush2.msra.mxu0 0.0
      %2640 = vmatprep.subr.mxu0 0.0
      %2641 = vmatpush2.msra.mxu0 0.0
      %2642 = vmatprep.subr.mxu0 0.0
      %2643 = vmatpush2.msra.mxu0 0.0
      %2644 = vmatprep.subr.mxu0 0.0
      %2645 = vmatpush2.msra.mxu0 0.0
      %2646 = vmatprep.subr.mxu0 0.0
      %2647 = vmatpush2.msra.mxu0 0.0
      %2648 = vmatprep.mubr.f32.mxu0 0.0
      %2649 = vmatmul.mubr.f32.gmra.mxu0 %v2579
      %v2650 = vpop.f32.mrf.mxu0
      %v2651 = vadd.f32 0.0, %v2650
      %v2652 = vpop.f32.mrf.mxu0
      %v2653 = vadd.f32 0.0, %v2652
      %2654 = vmatprep.mubr.f32.mxu0 0.0
      %2655 = vmatmul.mubr.f32.gmra.mxu0 %v2582
      %v2656 = vpop.f32.mrf.mxu0
      %v2657 = vadd.f32 0.0, %v2656
      %v2658 = vpop.f32.mrf.mxu0
      %v2659 = vadd.f32 0.0, %v2658
      %2660 = vdwg.mxu0
      %2661 = vmatprep.subr.mxu0 0.0
      %2662 = vmatpush1.msra.mxu0 0.0
      %2663 = vmatprep.subr.mxu0 0.0
      %2664 = vmatpush1.msra.mxu0 0.0
      %2665 = vmatprep.subr.mxu0 0.0
      %2666 = vmatpush1.msra.mxu0 0.0
      %2667 = vmatprep.subr.mxu0 0.0
      %2668 = vmatpush1.msra.mxu0 0.0
      %2669 = vmatprep.subr.mxu0 0.0
      %2670 = vmatpush1.msra.mxu0 0.0
      %2671 = vmatprep.subr.mxu0 0.0
      %2672 = vmatpush1.msra.mxu0 0.0
      %2673 = vmatprep.subr.mxu0 0.0
      %2674 = vmatpush1.msra.mxu0 0.0
      %2675 = vmatprep.subr.mxu0 0.0
      %2676 = vmatpush1.msra.mxu0 0.0
      %2677 = vmatprep.subr.mxu0 0.0
      %2678 = vmatpush1.msra.mxu0 0.0
      %2679 = vmatprep.subr.mxu0 0.0
      %2680 = vmatpush1.msra.mxu0 0.0
      %2681 = vmatprep.subr.mxu0 0.0
      %2682 = vmatpush1.msra.mxu0 0.0
      %2683 = vmatprep.subr.mxu0 0.0
      %2684 = vmatpush1.msra.mxu0 0.0
      %2685 = vmatprep.subr.mxu0 0.0
      %2686 = vmatpush1.msra.mxu0 0.0
      %2687 = vmatprep.subr.mxu0 0.0
      %2688 = vmatpush1.msra.mxu0 0.0
      %2689 = vmatprep.subr.mxu0 0.0
      %2690 = vmatpush1.msra.mxu0 %v2571
      %2691 = vmatprep.subr.mxu0 0.0
      %2692 = vmatpush1.msra.mxu0 %v2568
      %2693 = vmatprep.subr.mxu0 0.0
      %2694 = vmatpush2.msra.mxu0 0.0
      %2695 = vmatprep.subr.mxu0 0.0
      %2696 = vmatpush2.msra.mxu0 0.0
      %2697 = vmatprep.subr.mxu0 0.0
      %2698 = vmatpush2.msra.mxu0 0.0
      %2699 = vmatprep.subr.mxu0 0.0
      %2700 = vmatpush2.msra.mxu0 0.0
      %2701 = vmatprep.subr.mxu0 0.0
      %2702 = vmatpush2.msra.mxu0 0.0
      %2703 = vmatprep.subr.mxu0 0.0
      %2704 = vmatpush2.msra.mxu0 0.0
      %2705 = vmatprep.subr.mxu0 0.0
      %2706 = vmatpush2.msra.mxu0 0.0
      %2707 = vmatprep.subr.mxu0 0.0
      %2708 = vmatpush2.msra.mxu0 0.0
      %2709 = vmatprep.subr.mxu0 0.0
      %2710 = vmatpush2.msra.mxu0 0.0
      %2711 = vmatprep.subr.mxu0 0.0
      %2712 = vmatpush2.msra.mxu0 0.0
      %2713 = vmatprep.subr.mxu0 0.0
      %2714 = vmatpush2.msra.mxu0 0.0
      %2715 = vmatprep.subr.mxu0 0.0
      %2716 = vmatpush2.msra.mxu0 0.0
      %2717 = vmatprep.subr.mxu0 0.0
      %2718 = vmatpush2.msra.mxu0 0.0
      %2719 = vmatprep.subr.mxu0 0.0
      %2720 = vmatpush2.msra.mxu0 0.0
      %2721 = vmatprep.subr.mxu0 0.0
      %2722 = vmatpush2.msra.mxu0 0.0
      %2723 = vmatprep.subr.mxu0 0.0
      %2724 = vmatpush2.msra.mxu0 0.0
      %2725 = vmatprep.mubr.f32.mxu0 0.0
      %2726 = vmatmul.mubr.f32.gmra.mxu0 %v2579
      %v2727 = vpop.f32.mrf.mxu0
      %v2728 = vadd.f32 0.0, %v2727
      %v2729 = vpop.f32.mrf.mxu0
      %2730 = vmatprep.mubr.f32.mxu0 0.0
      %2731 = vmatmul.mubr.f32.gmra.mxu0 %v2582
      %v2732 = vpop.f32.mrf.mxu0
      %v2733 = vadd.f32 0.0, %v2732
      %v2734 = vpop.f32.mrf.mxu0
      %2735 = vdwg.mxu0
      %v2736 = vadd.f32 %v2541, %v2651
      %v2737 = vadd.f32 %v2542, %v2653
      %v2738 = vadd.f32 %v2543, %v2728
      %v2739 = vadd.f32 %v2544, %v2657
      %v2740 = vadd.f32 %v2545, %v2659
      %v2741 = vadd.f32 %v2546, %v2733
      %v2742 = vld [vmem:[%s5] sm:$0xff]
      %v2743 = vld [vmem:[%s5 + $0x8] sm:$0xff]
      %2745 = vset.pattern.permute.xlu0 0
      %2746 = vperm.xlu0 %2745, %v2742
      %v2747 = vpop.permute.xlu0 %2746
      %2750 = vset.pattern.permute.xlu0 0
      %2751 = vperm.xlu0 %2750, %v2743
      %v2752 = vpop.permute.xlu0 %2751
      %v2754 = vadd.f32 %v2736, %v2747
      %v2755 = vadd.f32 %v2737, %v2747
      %v2756 = vadd.f32 %v2738, %v2747
      %v2757 = vadd.f32 %v2739, %v2752
      %v2758 = vadd.f32 %v2740, %v2752
      %v2759 = vadd.f32 %v2741, %v2752
      %v2760 = vmax.f32 %v2754, 0.0
      %v2761 = vmax.f32 %v2755, 0.0
      %v2762 = vmax.f32 %v2756, 0.0
      %v2763 = vmax.f32 %v2757, 0.0
      %v2764 = vmax.f32 %v2758, 0.0
      %v2765 = vmax.f32 %v2759, 0.0
      %v2766 = vmul.f32 %v2760, %v323
      %v2767 = vmul.f32 %v2761, %v327
      %v2768 = vmul.f32 %v2762, %v331
      %v2769 = vmul.f32 %v2763, %v323
      %v2770 = vmul.f32 %v2764, %v327
      %v2771 = vmul.f32 %v2765, %v331
      %2772 = vst [vmem:[#allocation2 + $0x8] sm:$0xff] %v2766
      %2773 = vst [vmem:[#allocation2 + $0x10] sm:$0xff] %v2767
      %2774 = vst [vmem:[#allocation2 + $0x18] sm:$0xff] %v2768
      %2775 = vst [vmem:[#allocation2 + $0x30] sm:$0xff] %v2769
      %2776 = vst [vmem:[#allocation2 + $0x38] sm:$0xff] %v2770
      %2777 = vst [vmem:[#allocation2 + $0x40] sm:$0xff] %v2771
      %v2778 = vld [vmem:[%s6] sm:$0xff]
      %v2779 = vld [vmem:[#allocation2] sm:$0xff]
      %v2780 = vld [vmem:[#allocation2 + $0x8] sm:$0xff]
      %v2781 = vld [vmem:[#allocation2 + $0x10] sm:$0xff]
      %v2782 = vld [vmem:[#allocation2 + $0x18] sm:$0xff]
      %v2783 = vld [vmem:[#allocation2 + $0x28] sm:$0xff]
      %v2784 = vld [vmem:[#allocation2 + $0x30] sm:$0xff]
      %v2785 = vld [vmem:[#allocation2 + $0x38] sm:$0xff]
      %v2786 = vld [vmem:[#allocation2 + $0x40] sm:$0xff]
      %s2787 = scalar_lea.vmem %s6, 8
      %v2788 = vld [vmem:[%s2787] sm:$0xff]
      %2797 = vrot.lane.b32.xlu0 %v2779, 18
      %v2798 = vpop.permute.xlu0 %2797
      %2799 = vrot.lane.b32.xlu0 %v2780, 18
      %v2800 = vpop.permute.xlu0 %2799
      %2801 = vrot.lane.b32.xlu0 %v2781, 18
      %v2802 = vpop.permute.xlu0 %2801
      %2803 = vrot.lane.b32.xlu0 %v2782, 18
      %v2804 = vpop.permute.xlu0 %2803
      %2805 = vrot.lane.b32.xlu0 %v2783, 18
      %v2806 = vpop.permute.xlu0 %2805
      %2807 = vrot.lane.b32.xlu0 %v2784, 18
      %v2808 = vpop.permute.xlu0 %2807
      %2809 = vrot.lane.b32.xlu0 %v2785, 18
      %v2810 = vpop.permute.xlu0 %2809
      %2811 = vrot.lane.b32.xlu0 %v2786, 18
      %v2812 = vpop.permute.xlu0 %2811
      %v2813 = vsel %vm1028, %v2798, %v2800
      %v2814 = vsel %vm1028, %v2800, %v2802
      %v2815 = vsel %vm1028, %v2802, %v2804
      %v2816 = vsel %vm1028, %v2806, %v2808
      %v2817 = vsel %vm1028, %v2808, %v2810
      %v2818 = vsel %vm1028, %v2810, %v2812
      %v2826 = vsel %vm1041, %v2788, 0
      %2828 = vmatprep.subr.mxu0 0.0
      %2829 = vmatpush1.msra.mxu0 0.0
      %2830 = vmatprep.subr.mxu0 0.0
      %2831 = vmatpush1.msra.mxu0 0.0
      %2832 = vmatprep.subr.mxu0 0.0
      %2833 = vmatpush1.msra.mxu0 0.0
      %2834 = vmatprep.subr.mxu0 0.0
      %2835 = vmatpush1.msra.mxu0 0.0
      %2836 = vmatprep.subr.mxu0 0.0
      %2837 = vmatpush1.msra.mxu0 0.0
      %2838 = vmatprep.subr.mxu0 0.0
      %2839 = vmatpush1.msra.mxu0 0.0
      %2840 = vmatprep.subr.mxu0 0.0
      %2841 = vmatpush1.msra.mxu0 0.0
      %2842 = vmatprep.subr.mxu0 0.0
      %2843 = vmatpush1.msra.mxu0 0.0
      %2844 = vmatprep.subr.mxu0 0.0
      %2845 = vmatpush1.msra.mxu0 0.0
      %2846 = vmatprep.subr.mxu0 0.0
      %2847 = vmatpush1.msra.mxu0 0.0
      %2848 = vmatprep.subr.mxu0 0.0
      %2849 = vmatpush1.msra.mxu0 0.0
      %2850 = vmatprep.subr.mxu0 0.0
      %2851 = vmatpush1.msra.mxu0 0.0
      %2852 = vmatprep.subr.mxu0 0.0
      %2853 = vmatpush1.msra.mxu0 0.0
      %2854 = vmatprep.subr.mxu0 0.0
      %2855 = vmatpush1.msra.mxu0 0.0
      %2856 = vmatprep.subr.mxu0 %v2817
      %2857 = vmatpush1.msra.mxu0 %v2816
      %2858 = vmatprep.subr.mxu0 %v2814
      %2859 = vmatpush1.msra.mxu0 %v2813
      %2860 = vmatprep.subr.mxu0 0.0
      %2861 = vmatpush2.msra.mxu0 0.0
      %2862 = vmatprep.subr.mxu0 0.0
      %2863 = vmatpush2.msra.mxu0 0.0
      %2864 = vmatprep.subr.mxu0 0.0
      %2865 = vmatpush2.msra.mxu0 0.0
      %2866 = vmatprep.subr.mxu0 0.0
      %2867 = vmatpush2.msra.mxu0 0.0
      %2868 = vmatprep.subr.mxu0 0.0
      %2869 = vmatpush2.msra.mxu0 0.0
      %2870 = vmatprep.subr.mxu0 0.0
      %2871 = vmatpush2.msra.mxu0 0.0
      %2872 = vmatprep.subr.mxu0 0.0
      %2873 = vmatpush2.msra.mxu0 0.0
      %2874 = vmatprep.subr.mxu0 0.0
      %2875 = vmatpush2.msra.mxu0 0.0
      %2876 = vmatprep.subr.mxu0 0.0
      %2877 = vmatpush2.msra.mxu0 0.0
      %2878 = vmatprep.subr.mxu0 0.0
      %2879 = vmatpush2.msra.mxu0 0.0
      %2880 = vmatprep.subr.mxu0 0.0
      %2881 = vmatpush2.msra.mxu0 0.0
      %2882 = vmatprep.subr.mxu0 0.0
      %2883 = vmatpush2.msra.mxu0 0.0
      %2884 = vmatprep.subr.mxu0 0.0
      %2885 = vmatpush2.msra.mxu0 0.0
      %2886 = vmatprep.subr.mxu0 0.0
      %2887 = vmatpush2.msra.mxu0 0.0
      %2888 = vmatprep.subr.mxu0 0.0
      %2889 = vmatpush2.msra.mxu0 0.0
      %2890 = vmatprep.subr.mxu0 0.0
      %2891 = vmatpush2.msra.mxu0 0.0
      %2892 = vmatprep.mubr.f32.mxu0 0.0
      %2893 = vmatmul.mubr.f32.gmra.mxu0 %v2826
      %v2894 = vpop.f32.mrf.mxu0
      %v2895 = vadd.f32 0.0, %v2894
      %v2896 = vpop.f32.mrf.mxu0
      %v2897 = vadd.f32 0.0, %v2896
      %2898 = vdwg.mxu0
      %2899 = vmatprep.subr.mxu0 0.0
      %2900 = vmatpush1.msra.mxu0 0.0
      %2901 = vmatprep.subr.mxu0 0.0
      %2902 = vmatpush1.msra.mxu0 0.0
      %2903 = vmatprep.subr.mxu0 0.0
      %2904 = vmatpush1.msra.mxu0 0.0
      %2905 = vmatprep.subr.mxu0 0.0
      %2906 = vmatpush1.msra.mxu0 0.0
      %2907 = vmatprep.subr.mxu0 0.0
      %2908 = vmatpush1.msra.mxu0 0.0
      %2909 = vmatprep.subr.mxu0 0.0
      %2910 = vmatpush1.msra.mxu0 0.0
      %2911 = vmatprep.subr.mxu0 0.0
      %2912 = vmatpush1.msra.mxu0 0.0
      %2913 = vmatprep.subr.mxu0 0.0
      %2914 = vmatpush1.msra.mxu0 0.0
      %2915 = vmatprep.subr.mxu0 0.0
      %2916 = vmatpush1.msra.mxu0 0.0
      %2917 = vmatprep.subr.mxu0 0.0
      %2918 = vmatpush1.msra.mxu0 0.0
      %2919 = vmatprep.subr.mxu0 0.0
      %2920 = vmatpush1.msra.mxu0 0.0
      %2921 = vmatprep.subr.mxu0 0.0
      %2922 = vmatpush1.msra.mxu0 0.0
      %2923 = vmatprep.subr.mxu0 0.0
      %2924 = vmatpush1.msra.mxu0 0.0
      %2925 = vmatprep.subr.mxu0 0.0
      %2926 = vmatpush1.msra.mxu0 0.0
      %2927 = vmatprep.subr.mxu0 0.0
      %2928 = vmatpush1.msra.mxu0 %v2818
      %2929 = vmatprep.subr.mxu0 0.0
      %2930 = vmatpush1.msra.mxu0 %v2815
      %2931 = vmatprep.subr.mxu0 0.0
      %2932 = vmatpush2.msra.mxu0 0.0
      %2933 = vmatprep.subr.mxu0 0.0
      %2934 = vmatpush2.msra.mxu0 0.0
      %2935 = vmatprep.subr.mxu0 0.0
      %2936 = vmatpush2.msra.mxu0 0.0
      %2937 = vmatprep.subr.mxu0 0.0
      %2938 = vmatpush2.msra.mxu0 0.0
      %2939 = vmatprep.subr.mxu0 0.0
      %2940 = vmatpush2.msra.mxu0 0.0
      %2941 = vmatprep.subr.mxu0 0.0
      %2942 = vmatpush2.msra.mxu0 0.0
      %2943 = vmatprep.subr.mxu0 0.0
      %2944 = vmatpush2.msra.mxu0 0.0
      %2945 = vmatprep.subr.mxu0 0.0
      %2946 = vmatpush2.msra.mxu0 0.0
      %2947 = vmatprep.subr.mxu0 0.0
      %2948 = vmatpush2.msra.mxu0 0.0
      %2949 = vmatprep.subr.mxu0 0.0
      %2950 = vmatpush2.msra.mxu0 0.0
      %2951 = vmatprep.subr.mxu0 0.0
      %2952 = vmatpush2.msra.mxu0 0.0
      %2953 = vmatprep.subr.mxu0 0.0
      %2954 = vmatpush2.msra.mxu0 0.0
      %2955 = vmatprep.subr.mxu0 0.0
      %2956 = vmatpush2.msra.mxu0 0.0
      %2957 = vmatprep.subr.mxu0 0.0
      %2958 = vmatpush2.msra.mxu0 0.0
      %2959 = vmatprep.subr.mxu0 0.0
      %2960 = vmatpush2.msra.mxu0 0.0
      %2961 = vmatprep.subr.mxu0 0.0
      %2962 = vmatpush2.msra.mxu0 0.0
      %2963 = vmatprep.mubr.f32.mxu0 0.0
      %2964 = vmatmul.mubr.f32.gmra.mxu0 %v2826
      %v2965 = vpop.f32.mrf.mxu0
      %v2966 = vadd.f32 0.0, %v2965
      %v2967 = vpop.f32.mrf.mxu0
      %2968 = vdwg.mxu0
      %2969 = vrot.lane.b32.xlu0 %v2779, 19
      %v2970 = vpop.permute.xlu0 %2969
      %2971 = vrot.lane.b32.xlu0 %v2780, 19
      %v2972 = vpop.permute.xlu0 %2971
      %2973 = vrot.lane.b32.xlu0 %v2781, 19
      %v2974 = vpop.permute.xlu0 %2973
      %2975 = vrot.lane.b32.xlu0 %v2782, 19
      %v2976 = vpop.permute.xlu0 %2975
      %2977 = vrot.lane.b32.xlu0 %v2783, 19
      %v2978 = vpop.permute.xlu0 %2977
      %2979 = vrot.lane.b32.xlu0 %v2784, 19
      %v2980 = vpop.permute.xlu0 %2979
      %2981 = vrot.lane.b32.xlu0 %v2785, 19
      %v2982 = vpop.permute.xlu0 %2981
      %2983 = vrot.lane.b32.xlu0 %v2786, 19
      %v2984 = vpop.permute.xlu0 %2983
      %v2985 = vsel %vm972, %v2970, %v2972
      %v2986 = vsel %vm972, %v2972, %v2974
      %v2987 = vsel %vm972, %v2974, %v2976
      %v2988 = vsel %vm972, %v2978, %v2980
      %v2989 = vsel %vm972, %v2980, %v2982
      %v2990 = vsel %vm972, %v2982, %v2984
      %v2998 = vsel %vm1041, %v2778, 0
      %3000 = vmatprep.subr.mxu0 0.0
      %3001 = vmatpush1.msra.mxu0 0.0
      %3002 = vmatprep.subr.mxu0 0.0
      %3003 = vmatpush1.msra.mxu0 0.0
      %3004 = vmatprep.subr.mxu0 0.0
      %3005 = vmatpush1.msra.mxu0 0.0
      %3006 = vmatprep.subr.mxu0 0.0
      %3007 = vmatpush1.msra.mxu0 0.0
      %3008 = vmatprep.subr.mxu0 0.0
      %3009 = vmatpush1.msra.mxu0 0.0
      %3010 = vmatprep.subr.mxu0 0.0
      %3011 = vmatpush1.msra.mxu0 0.0
      %3012 = vmatprep.subr.mxu0 0.0
      %3013 = vmatpush1.msra.mxu0 0.0
      %3014 = vmatprep.subr.mxu0 0.0
      %3015 = vmatpush1.msra.mxu0 0.0
      %3016 = vmatprep.subr.mxu0 0.0
      %3017 = vmatpush1.msra.mxu0 0.0
      %3018 = vmatprep.subr.mxu0 0.0
      %3019 = vmatpush1.msra.mxu0 0.0
      %3020 = vmatprep.subr.mxu0 0.0
      %3021 = vmatpush1.msra.mxu0 0.0
      %3022 = vmatprep.subr.mxu0 0.0
      %3023 = vmatpush1.msra.mxu0 0.0
      %3024 = vmatprep.subr.mxu0 0.0
      %3025 = vmatpush1.msra.mxu0 0.0
      %3026 = vmatprep.subr.mxu0 0.0
      %3027 = vmatpush1.msra.mxu0 0.0
      %3028 = vmatprep.subr.mxu0 %v2989
      %3029 = vmatpush1.msra.mxu0 %v2988
      %3030 = vmatprep.subr.mxu0 %v2986
      %3031 = vmatpush1.msra.mxu0 %v2985
      %3032 = vmatprep.subr.mxu0 0.0
      %3033 = vmatpush2.msra.mxu0 0.0
      %3034 = vmatprep.subr.mxu0 0.0
      %3035 = vmatpush2.msra.mxu0 0.0
      %3036 = vmatprep.subr.mxu0 0.0
      %3037 = vmatpush2.msra.mxu0 0.0
      %3038 = vmatprep.subr.mxu0 0.0
      %3039 = vmatpush2.msra.mxu0 0.0
      %3040 = vmatprep.subr.mxu0 0.0
      %3041 = vmatpush2.msra.mxu0 0.0
      %3042 = vmatprep.subr.mxu0 0.0
      %3043 = vmatpush2.msra.mxu0 0.0
      %3044 = vmatprep.subr.mxu0 0.0
      %3045 = vmatpush2.msra.mxu0 0.0
      %3046 = vmatprep.subr.mxu0 0.0
      %3047 = vmatpush2.msra.mxu0 0.0
      %3048 = vmatprep.subr.mxu0 0.0
      %3049 = vmatpush2.msra.mxu0 0.0
      %3050 = vmatprep.subr.mxu0 0.0
      %3051 = vmatpush2.msra.mxu0 0.0
      %3052 = vmatprep.subr.mxu0 0.0
      %3053 = vmatpush2.msra.mxu0 0.0
      %3054 = vmatprep.subr.mxu0 0.0
      %3055 = vmatpush2.msra.mxu0 0.0
      %3056 = vmatprep.subr.mxu0 0.0
      %3057 = vmatpush2.msra.mxu0 0.0
      %3058 = vmatprep.subr.mxu0 0.0
      %3059 = vmatpush2.msra.mxu0 0.0
      %3060 = vmatprep.subr.mxu0 0.0
      %3061 = vmatpush2.msra.mxu0 0.0
      %3062 = vmatprep.subr.mxu0 0.0
      %3063 = vmatpush2.msra.mxu0 0.0
      %3064 = vmatprep.mubr.f32.mxu0 0.0
      %3065 = vmatmul.mubr.f32.gmra.mxu0 %v2998
      %v3066 = vpop.f32.mrf.mxu0
      %v3067 = vadd.f32 %v2895, %v3066
      %v3068 = vpop.f32.mrf.mxu0
      %v3069 = vadd.f32 %v2897, %v3068
      %3070 = vdwg.mxu0
      %3071 = vmatprep.subr.mxu0 0.0
      %3072 = vmatpush1.msra.mxu0 0.0
      %3073 = vmatprep.subr.mxu0 0.0
      %3074 = vmatpush1.msra.mxu0 0.0
      %3075 = vmatprep.subr.mxu0 0.0
      %3076 = vmatpush1.msra.mxu0 0.0
      %3077 = vmatprep.subr.mxu0 0.0
      %3078 = vmatpush1.msra.mxu0 0.0
      %3079 = vmatprep.subr.mxu0 0.0
      %3080 = vmatpush1.msra.mxu0 0.0
      %3081 = vmatprep.subr.mxu0 0.0
      %3082 = vmatpush1.msra.mxu0 0.0
      %3083 = vmatprep.subr.mxu0 0.0
      %3084 = vmatpush1.msra.mxu0 0.0
      %3085 = vmatprep.subr.mxu0 0.0
      %3086 = vmatpush1.msra.mxu0 0.0
      %3087 = vmatprep.subr.mxu0 0.0
      %3088 = vmatpush1.msra.mxu0 0.0
      %3089 = vmatprep.subr.mxu0 0.0
      %3090 = vmatpush1.msra.mxu0 0.0
      %3091 = vmatprep.subr.mxu0 0.0
      %3092 = vmatpush1.msra.mxu0 0.0
      %3093 = vmatprep.subr.mxu0 0.0
      %3094 = vmatpush1.msra.mxu0 0.0
      %3095 = vmatprep.subr.mxu0 0.0
      %3096 = vmatpush1.msra.mxu0 0.0
      %3097 = vmatprep.subr.mxu0 0.0
      %3098 = vmatpush1.msra.mxu0 0.0
      %3099 = vmatprep.subr.mxu0 0.0
      %3100 = vmatpush1.msra.mxu0 %v2990
      %3101 = vmatprep.subr.mxu0 0.0
      %3102 = vmatpush1.msra.mxu0 %v2987
      %3103 = vmatprep.subr.mxu0 0.0
      %3104 = vmatpush2.msra.mxu0 0.0
      %3105 = vmatprep.subr.mxu0 0.0
      %3106 = vmatpush2.msra.mxu0 0.0
      %3107 = vmatprep.subr.mxu0 0.0
      %3108 = vmatpush2.msra.mxu0 0.0
      %3109 = vmatprep.subr.mxu0 0.0
      %3110 = vmatpush2.msra.mxu0 0.0
      %3111 = vmatprep.subr.mxu0 0.0
      %3112 = vmatpush2.msra.mxu0 0.0
      %3113 = vmatprep.subr.mxu0 0.0
      %3114 = vmatpush2.msra.mxu0 0.0
      %3115 = vmatprep.subr.mxu0 0.0
      %3116 = vmatpush2.msra.mxu0 0.0
      %3117 = vmatprep.subr.mxu0 0.0
      %3118 = vmatpush2.msra.mxu0 0.0
      %3119 = vmatprep.subr.mxu0 0.0
      %3120 = vmatpush2.msra.mxu0 0.0
      %3121 = vmatprep.subr.mxu0 0.0
      %3122 = vmatpush2.msra.mxu0 0.0
      %3123 = vmatprep.subr.mxu0 0.0
      %3124 = vmatpush2.msra.mxu0 0.0
      %3125 = vmatprep.subr.mxu0 0.0
      %3126 = vmatpush2.msra.mxu0 0.0
      %3127 = vmatprep.subr.mxu0 0.0
      %3128 = vmatpush2.msra.mxu0 0.0
      %3129 = vmatprep.subr.mxu0 0.0
      %3130 = vmatpush2.msra.mxu0 0.0
      %3131 = vmatprep.subr.mxu0 0.0
      %3132 = vmatpush2.msra.mxu0 0.0
      %3133 = vmatprep.subr.mxu0 0.0
      %3134 = vmatpush2.msra.mxu0 0.0
      %3135 = vmatprep.mubr.f32.mxu0 0.0
      %3136 = vmatmul.mubr.f32.gmra.mxu0 %v2998
      %v3137 = vpop.f32.mrf.mxu0
      %v3138 = vadd.f32 %v2966, %v3137
      %v3139 = vpop.f32.mrf.mxu0
      %3140 = vdwg.mxu0
      %s3141 = scalar_lea.vmem %s6, 16
      %v3142 = vld [vmem:[%s3141] sm:$0xff]
      %3143 = vrot.lane.b32.xlu0 %v2779, 17
      %v3144 = vpop.permute.xlu0 %3143
      %3145 = vrot.lane.b32.xlu0 %v2780, 17
      %v3146 = vpop.permute.xlu0 %3145
      %3147 = vrot.lane.b32.xlu0 %v2781, 17
      %v3148 = vpop.permute.xlu0 %3147
      %3149 = vrot.lane.b32.xlu0 %v2782, 17
      %v3150 = vpop.permute.xlu0 %3149
      %3151 = vrot.lane.b32.xlu0 %v2783, 17
      %v3152 = vpop.permute.xlu0 %3151
      %3153 = vrot.lane.b32.xlu0 %v2784, 17
      %v3154 = vpop.permute.xlu0 %3153
      %3155 = vrot.lane.b32.xlu0 %v2785, 17
      %v3156 = vpop.permute.xlu0 %3155
      %3157 = vrot.lane.b32.xlu0 %v2786, 17
      %v3158 = vpop.permute.xlu0 %3157
      %v3159 = vsel %vm1405, %v3144, %v3146
      %v3160 = vsel %vm1405, %v3146, %v3148
      %v3161 = vsel %vm1405, %v3148, %v3150
      %v3162 = vsel %vm1405, %v3152, %v3154
      %v3163 = vsel %vm1405, %v3154, %v3156
      %v3164 = vsel %vm1405, %v3156, %v3158
      %v3172 = vsel %vm1041, %v3142, 0
      %3174 = vmatprep.subr.mxu0 0.0
      %3175 = vmatpush1.msra.mxu0 0.0
      %3176 = vmatprep.subr.mxu0 0.0
      %3177 = vmatpush1.msra.mxu0 0.0
      %3178 = vmatprep.subr.mxu0 0.0
      %3179 = vmatpush1.msra.mxu0 0.0
      %3180 = vmatprep.subr.mxu0 0.0
      %3181 = vmatpush1.msra.mxu0 0.0
      %3182 = vmatprep.subr.mxu0 0.0
      %3183 = vmatpush1.msra.mxu0 0.0
      %3184 = vmatprep.subr.mxu0 0.0
      %3185 = vmatpush1.msra.mxu0 0.0
      %3186 = vmatprep.subr.mxu0 0.0
      %3187 = vmatpush1.msra.mxu0 0.0
      %3188 = vmatprep.subr.mxu0 0.0
      %3189 = vmatpush1.msra.mxu0 0.0
      %3190 = vmatprep.subr.mxu0 0.0
      %3191 = vmatpush1.msra.mxu0 0.0
      %3192 = vmatprep.subr.mxu0 0.0
      %3193 = vmatpush1.msra.mxu0 0.0
      %3194 = vmatprep.subr.mxu0 0.0
      %3195 = vmatpush1.msra.mxu0 0.0
      %3196 = vmatprep.subr.mxu0 0.0
      %3197 = vmatpush1.msra.mxu0 0.0
      %3198 = vmatprep.subr.mxu0 0.0
      %3199 = vmatpush1.msra.mxu0 0.0
      %3200 = vmatprep.subr.mxu0 0.0
      %3201 = vmatpush1.msra.mxu0 0.0
      %3202 = vmatprep.subr.mxu0 %v3163
      %3203 = vmatpush1.msra.mxu0 %v3162
      %3204 = vmatprep.subr.mxu0 %v3160
      %3205 = vmatpush1.msra.mxu0 %v3159
      %3206 = vmatprep.subr.mxu0 0.0
      %3207 = vmatpush2.msra.mxu0 0.0
      %3208 = vmatprep.subr.mxu0 0.0
      %3209 = vmatpush2.msra.mxu0 0.0
      %3210 = vmatprep.subr.mxu0 0.0
      %3211 = vmatpush2.msra.mxu0 0.0
      %3212 = vmatprep.subr.mxu0 0.0
      %3213 = vmatpush2.msra.mxu0 0.0
      %3214 = vmatprep.subr.mxu0 0.0
      %3215 = vmatpush2.msra.mxu0 0.0
      %3216 = vmatprep.subr.mxu0 0.0
      %3217 = vmatpush2.msra.mxu0 0.0
      %3218 = vmatprep.subr.mxu0 0.0
      %3219 = vmatpush2.msra.mxu0 0.0
      %3220 = vmatprep.subr.mxu0 0.0
      %3221 = vmatpush2.msra.mxu0 0.0
      %3222 = vmatprep.subr.mxu0 0.0
      %3223 = vmatpush2.msra.mxu0 0.0
      %3224 = vmatprep.subr.mxu0 0.0
      %3225 = vmatpush2.msra.mxu0 0.0
      %3226 = vmatprep.subr.mxu0 0.0
      %3227 = vmatpush2.msra.mxu0 0.0
      %3228 = vmatprep.subr.mxu0 0.0
      %3229 = vmatpush2.msra.mxu0 0.0
      %3230 = vmatprep.subr.mxu0 0.0
      %3231 = vmatpush2.msra.mxu0 0.0
      %3232 = vmatprep.subr.mxu0 0.0
      %3233 = vmatpush2.msra.mxu0 0.0
      %3234 = vmatprep.subr.mxu0 0.0
      %3235 = vmatpush2.msra.mxu0 0.0
      %3236 = vmatprep.subr.mxu0 0.0
      %3237 = vmatpush2.msra.mxu0 0.0
      %3238 = vmatprep.mubr.f32.mxu0 0.0
      %3239 = vmatmul.mubr.f32.gmra.mxu0 %v3172
      %v3240 = vpop.f32.mrf.mxu0
      %v3241 = vadd.f32 0.0, %v3240
      %v3242 = vpop.f32.mrf.mxu0
      %v3243 = vadd.f32 0.0, %v3242
      %3244 = vdwg.mxu0
      %3245 = vmatprep.subr.mxu0 0.0
      %3246 = vmatpush1.msra.mxu0 0.0
      %3247 = vmatprep.subr.mxu0 0.0
      %3248 = vmatpush1.msra.mxu0 0.0
      %3249 = vmatprep.subr.mxu0 0.0
      %3250 = vmatpush1.msra.mxu0 0.0
      %3251 = vmatprep.subr.mxu0 0.0
      %3252 = vmatpush1.msra.mxu0 0.0
      %3253 = vmatprep.subr.mxu0 0.0
      %3254 = vmatpush1.msra.mxu0 0.0
      %3255 = vmatprep.subr.mxu0 0.0
      %3256 = vmatpush1.msra.mxu0 0.0
      %3257 = vmatprep.subr.mxu0 0.0
      %3258 = vmatpush1.msra.mxu0 0.0
      %3259 = vmatprep.subr.mxu0 0.0
      %3260 = vmatpush1.msra.mxu0 0.0
      %3261 = vmatprep.subr.mxu0 0.0
      %3262 = vmatpush1.msra.mxu0 0.0
      %3263 = vmatprep.subr.mxu0 0.0
      %3264 = vmatpush1.msra.mxu0 0.0
      %3265 = vmatprep.subr.mxu0 0.0
      %3266 = vmatpush1.msra.mxu0 0.0
      %3267 = vmatprep.subr.mxu0 0.0
      %3268 = vmatpush1.msra.mxu0 0.0
      %3269 = vmatprep.subr.mxu0 0.0
      %3270 = vmatpush1.msra.mxu0 0.0
      %3271 = vmatprep.subr.mxu0 0.0
      %3272 = vmatpush1.msra.mxu0 0.0
      %3273 = vmatprep.subr.mxu0 0.0
      %3274 = vmatpush1.msra.mxu0 %v3164
      %3275 = vmatprep.subr.mxu0 0.0
      %3276 = vmatpush1.msra.mxu0 %v3161
      %3277 = vmatprep.subr.mxu0 0.0
      %3278 = vmatpush2.msra.mxu0 0.0
      %3279 = vmatprep.subr.mxu0 0.0
      %3280 = vmatpush2.msra.mxu0 0.0
      %3281 = vmatprep.subr.mxu0 0.0
      %3282 = vmatpush2.msra.mxu0 0.0
      %3283 = vmatprep.subr.mxu0 0.0
      %3284 = vmatpush2.msra.mxu0 0.0
      %3285 = vmatprep.subr.mxu0 0.0
      %3286 = vmatpush2.msra.mxu0 0.0
      %3287 = vmatprep.subr.mxu0 0.0
      %3288 = vmatpush2.msra.mxu0 0.0
      %3289 = vmatprep.subr.mxu0 0.0
      %3290 = vmatpush2.msra.mxu0 0.0
      %3291 = vmatprep.subr.mxu0 0.0
      %3292 = vmatpush2.msra.mxu0 0.0
      %3293 = vmatprep.subr.mxu0 0.0
      %3294 = vmatpush2.msra.mxu0 0.0
      %3295 = vmatprep.subr.mxu0 0.0
      %3296 = vmatpush2.msra.mxu0 0.0
      %3297 = vmatprep.subr.mxu0 0.0
      %3298 = vmatpush2.msra.mxu0 0.0
      %3299 = vmatprep.subr.mxu0 0.0
      %3300 = vmatpush2.msra.mxu0 0.0
      %3301 = vmatprep.subr.mxu0 0.0
      %3302 = vmatpush2.msra.mxu0 0.0
      %3303 = vmatprep.subr.mxu0 0.0
      %3304 = vmatpush2.msra.mxu0 0.0
      %3305 = vmatprep.subr.mxu0 0.0
      %3306 = vmatpush2.msra.mxu0 0.0
      %3307 = vmatprep.subr.mxu0 0.0
      %3308 = vmatpush2.msra.mxu0 0.0
      %3309 = vmatprep.mubr.f32.mxu0 0.0
      %3310 = vmatmul.mubr.f32.gmra.mxu0 %v3172
      %v3311 = vpop.f32.mrf.mxu0
      %v3312 = vadd.f32 0.0, %v3311
      %v3313 = vpop.f32.mrf.mxu0
      %3314 = vdwg.mxu0
      %v3315 = vadd.f32 %v3067, %v3241
      %v3316 = vadd.f32 %v3069, %v3243
      %v3317 = vadd.f32 %v3138, %v3312
      %s3318 = scalar_lea.vmem %s6, 24
      %v3319 = vld [vmem:[%s3318] sm:$0xff]
      %3320 = vrot.lane.b32.xlu0 %v2779, 1
      %v3321 = vpop.permute.xlu0 %3320
      %3322 = vrot.lane.b32.xlu0 %v2780, 1
      %v3323 = vpop.permute.xlu0 %3322
      %3324 = vrot.lane.b32.xlu0 %v2781, 1
      %v3325 = vpop.permute.xlu0 %3324
      %3326 = vrot.lane.b32.xlu0 %v2782, 1
      %v3327 = vpop.permute.xlu0 %3326
      %3328 = vrot.lane.b32.xlu0 %v2783, 1
      %v3329 = vpop.permute.xlu0 %3328
      %3330 = vrot.lane.b32.xlu0 %v2784, 1
      %v3331 = vpop.permute.xlu0 %3330
      %3332 = vrot.lane.b32.xlu0 %v2785, 1
      %v3333 = vpop.permute.xlu0 %3332
      %3334 = vrot.lane.b32.xlu0 %v2786, 1
      %v3335 = vpop.permute.xlu0 %3334
      %v3336 = vsel %vm1601, %v3321, %v3323
      %v3337 = vsel %vm1601, %v3323, %v3325
      %v3338 = vsel %vm1601, %v3325, %v3327
      %v3339 = vsel %vm1601, %v3329, %v3331
      %v3340 = vsel %vm1601, %v3331, %v3333
      %v3341 = vsel %vm1601, %v3333, %v3335
      %v3349 = vsel %vm1041, %v3319, 0
      %3351 = vmatprep.subr.mxu0 0.0
      %3352 = vmatpush1.msra.mxu0 0.0
      %3353 = vmatprep.subr.mxu0 0.0
      %3354 = vmatpush1.msra.mxu0 0.0
      %3355 = vmatprep.subr.mxu0 0.0
      %3356 = vmatpush1.msra.mxu0 0.0
      %3357 = vmatprep.subr.mxu0 0.0
      %3358 = vmatpush1.msra.mxu0 0.0
      %3359 = vmatprep.subr.mxu0 0.0
      %3360 = vmatpush1.msra.mxu0 0.0
      %3361 = vmatprep.subr.mxu0 0.0
      %3362 = vmatpush1.msra.mxu0 0.0
      %3363 = vmatprep.subr.mxu0 0.0
      %3364 = vmatpush1.msra.mxu0 0.0
      %3365 = vmatprep.subr.mxu0 0.0
      %3366 = vmatpush1.msra.mxu0 0.0
      %3367 = vmatprep.subr.mxu0 0.0
      %3368 = vmatpush1.msra.mxu0 0.0
      %3369 = vmatprep.subr.mxu0 0.0
      %3370 = vmatpush1.msra.mxu0 0.0
      %3371 = vmatprep.subr.mxu0 0.0
      %3372 = vmatpush1.msra.mxu0 0.0
      %3373 = vmatprep.subr.mxu0 0.0
      %3374 = vmatpush1.msra.mxu0 0.0
      %3375 = vmatprep.subr.mxu0 0.0
      %3376 = vmatpush1.msra.mxu0 0.0
      %3377 = vmatprep.subr.mxu0 0.0
      %3378 = vmatpush1.msra.mxu0 0.0
      %3379 = vmatprep.subr.mxu0 %v3340
      %3380 = vmatpush1.msra.mxu0 %v3339
      %3381 = vmatprep.subr.mxu0 %v3337
      %3382 = vmatpush1.msra.mxu0 %v3336
      %3383 = vmatprep.subr.mxu0 0.0
      %3384 = vmatpush2.msra.mxu0 0.0
      %3385 = vmatprep.subr.mxu0 0.0
      %3386 = vmatpush2.msra.mxu0 0.0
      %3387 = vmatprep.subr.mxu0 0.0
      %3388 = vmatpush2.msra.mxu0 0.0
      %3389 = vmatprep.subr.mxu0 0.0
      %3390 = vmatpush2.msra.mxu0 0.0
      %3391 = vmatprep.subr.mxu0 0.0
      %3392 = vmatpush2.msra.mxu0 0.0
      %3393 = vmatprep.subr.mxu0 0.0
      %3394 = vmatpush2.msra.mxu0 0.0
      %3395 = vmatprep.subr.mxu0 0.0
      %3396 = vmatpush2.msra.mxu0 0.0
      %3397 = vmatprep.subr.mxu0 0.0
      %3398 = vmatpush2.msra.mxu0 0.0
      %3399 = vmatprep.subr.mxu0 0.0
      %3400 = vmatpush2.msra.mxu0 0.0
      %3401 = vmatprep.subr.mxu0 0.0
      %3402 = vmatpush2.msra.mxu0 0.0
      %3403 = vmatprep.subr.mxu0 0.0
      %3404 = vmatpush2.msra.mxu0 0.0
      %3405 = vmatprep.subr.mxu0 0.0
      %3406 = vmatpush2.msra.mxu0 0.0
      %3407 = vmatprep.subr.mxu0 0.0
      %3408 = vmatpush2.msra.mxu0 0.0
      %3409 = vmatprep.subr.mxu0 0.0
      %3410 = vmatpush2.msra.mxu0 0.0
      %3411 = vmatprep.subr.mxu0 0.0
      %3412 = vmatpush2.msra.mxu0 0.0
      %3413 = vmatprep.subr.mxu0 0.0
      %3414 = vmatpush2.msra.mxu0 0.0
      %3415 = vmatprep.mubr.f32.mxu0 0.0
      %3416 = vmatmul.mubr.f32.gmra.mxu0 %v3349
      %v3417 = vpop.f32.mrf.mxu0
      %v3418 = vadd.f32 0.0, %v3417
      %v3419 = vpop.f32.mrf.mxu0
      %v3420 = vadd.f32 0.0, %v3419
      %3421 = vdwg.mxu0
      %3422 = vmatprep.subr.mxu0 0.0
      %3423 = vmatpush1.msra.mxu0 0.0
      %3424 = vmatprep.subr.mxu0 0.0
      %3425 = vmatpush1.msra.mxu0 0.0
      %3426 = vmatprep.subr.mxu0 0.0
      %3427 = vmatpush1.msra.mxu0 0.0
      %3428 = vmatprep.subr.mxu0 0.0
      %3429 = vmatpush1.msra.mxu0 0.0
      %3430 = vmatprep.subr.mxu0 0.0
      %3431 = vmatpush1.msra.mxu0 0.0
      %3432 = vmatprep.subr.mxu0 0.0
      %3433 = vmatpush1.msra.mxu0 0.0
      %3434 = vmatprep.subr.mxu0 0.0
      %3435 = vmatpush1.msra.mxu0 0.0
      %3436 = vmatprep.subr.mxu0 0.0
      %3437 = vmatpush1.msra.mxu0 0.0
      %3438 = vmatprep.subr.mxu0 0.0
      %3439 = vmatpush1.msra.mxu0 0.0
      %3440 = vmatprep.subr.mxu0 0.0
      %3441 = vmatpush1.msra.mxu0 0.0
      %3442 = vmatprep.subr.mxu0 0.0
      %3443 = vmatpush1.msra.mxu0 0.0
      %3444 = vmatprep.subr.mxu0 0.0
      %3445 = vmatpush1.msra.mxu0 0.0
      %3446 = vmatprep.subr.mxu0 0.0
      %3447 = vmatpush1.msra.mxu0 0.0
      %3448 = vmatprep.subr.mxu0 0.0
      %3449 = vmatpush1.msra.mxu0 0.0
      %3450 = vmatprep.subr.mxu0 0.0
      %3451 = vmatpush1.msra.mxu0 %v3341
      %3452 = vmatprep.subr.mxu0 0.0
      %3453 = vmatpush1.msra.mxu0 %v3338
      %3454 = vmatprep.subr.mxu0 0.0
      %3455 = vmatpush2.msra.mxu0 0.0
      %3456 = vmatprep.subr.mxu0 0.0
      %3457 = vmatpush2.msra.mxu0 0.0
      %3458 = vmatprep.subr.mxu0 0.0
      %3459 = vmatpush2.msra.mxu0 0.0
      %3460 = vmatprep.subr.mxu0 0.0
      %3461 = vmatpush2.msra.mxu0 0.0
      %3462 = vmatprep.subr.mxu0 0.0
      %3463 = vmatpush2.msra.mxu0 0.0
      %3464 = vmatprep.subr.mxu0 0.0
      %3465 = vmatpush2.msra.mxu0 0.0
      %3466 = vmatprep.subr.mxu0 0.0
      %3467 = vmatpush2.msra.mxu0 0.0
      %3468 = vmatprep.subr.mxu0 0.0
      %3469 = vmatpush2.msra.mxu0 0.0
      %3470 = vmatprep.subr.mxu0 0.0
      %3471 = vmatpush2.msra.mxu0 0.0
      %3472 = vmatprep.subr.mxu0 0.0
      %3473 = vmatpush2.msra.mxu0 0.0
      %3474 = vmatprep.subr.mxu0 0.0
      %3475 = vmatpush2.msra.mxu0 0.0
      %3476 = vmatprep.subr.mxu0 0.0
      %3477 = vmatpush2.msra.mxu0 0.0
      %3478 = vmatprep.subr.mxu0 0.0
      %3479 = vmatpush2.msra.mxu0 0.0
      %3480 = vmatprep.subr.mxu0 0.0
      %3481 = vmatpush2.msra.mxu0 0.0
      %3482 = vmatprep.subr.mxu0 0.0
      %3483 = vmatpush2.msra.mxu0 0.0
      %3484 = vmatprep.subr.mxu0 0.0
      %3485 = vmatpush2.msra.mxu0 0.0
      %3486 = vmatprep.mubr.f32.mxu0 0.0
      %3487 = vmatmul.mubr.f32.gmra.mxu0 %v3349
      %v3488 = vpop.f32.mrf.mxu0
      %v3489 = vadd.f32 0.0, %v3488
      %v3490 = vpop.f32.mrf.mxu0
      %3491 = vdwg.mxu0
      %v3492 = vadd.f32 %v3315, %v3418
      %v3493 = vadd.f32 %v3316, %v3420
      %v3494 = vadd.f32 %v3317, %v3489
      %s3495 = scalar_lea.vmem %s6, 32
      %v3496 = vld [vmem:[%s3495] sm:$0xff]
      %v3498 = vsel %vm1041, %v3496, 0
      %3500 = vmatprep.subr.mxu0 0.0
      %3501 = vmatpush1.msra.mxu0 0.0
      %3502 = vmatprep.subr.mxu0 0.0
      %3503 = vmatpush1.msra.mxu0 0.0
      %3504 = vmatprep.subr.mxu0 0.0
      %3505 = vmatpush1.msra.mxu0 0.0
      %3506 = vmatprep.subr.mxu0 0.0
      %3507 = vmatpush1.msra.mxu0 0.0
      %3508 = vmatprep.subr.mxu0 0.0
      %3509 = vmatpush1.msra.mxu0 0.0
      %3510 = vmatprep.subr.mxu0 0.0
      %3511 = vmatpush1.msra.mxu0 0.0
      %3512 = vmatprep.subr.mxu0 0.0
      %3513 = vmatpush1.msra.mxu0 0.0
      %3514 = vmatprep.subr.mxu0 0.0
      %3515 = vmatpush1.msra.mxu0 0.0
      %3516 = vmatprep.subr.mxu0 0.0
      %3517 = vmatpush1.msra.mxu0 0.0
      %3518 = vmatprep.subr.mxu0 0.0
      %3519 = vmatpush1.msra.mxu0 0.0
      %3520 = vmatprep.subr.mxu0 0.0
      %3521 = vmatpush1.msra.mxu0 0.0
      %3522 = vmatprep.subr.mxu0 0.0
      %3523 = vmatpush1.msra.mxu0 0.0
      %3524 = vmatprep.subr.mxu0 0.0
      %3525 = vmatpush1.msra.mxu0 0.0
      %3526 = vmatprep.subr.mxu0 0.0
      %3527 = vmatpush1.msra.mxu0 0.0
      %3528 = vmatprep.subr.mxu0 %v2785
      %3529 = vmatpush1.msra.mxu0 %v2784
      %3530 = vmatprep.subr.mxu0 %v2781
      %3531 = vmatpush1.msra.mxu0 %v2780
      %3532 = vmatprep.subr.mxu0 0.0
      %3533 = vmatpush2.msra.mxu0 0.0
      %3534 = vmatprep.subr.mxu0 0.0
      %3535 = vmatpush2.msra.mxu0 0.0
      %3536 = vmatprep.subr.mxu0 0.0
      %3537 = vmatpush2.msra.mxu0 0.0
      %3538 = vmatprep.subr.mxu0 0.0
      %3539 = vmatpush2.msra.mxu0 0.0
      %3540 = vmatprep.subr.mxu0 0.0
      %3541 = vmatpush2.msra.mxu0 0.0
      %3542 = vmatprep.subr.mxu0 0.0
      %3543 = vmatpush2.msra.mxu0 0.0
      %3544 = vmatprep.subr.mxu0 0.0
      %3545 = vmatpush2.msra.mxu0 0.0
      %3546 = vmatprep.subr.mxu0 0.0
      %3547 = vmatpush2.msra.mxu0 0.0
      %3548 = vmatprep.subr.mxu0 0.0
      %3549 = vmatpush2.msra.mxu0 0.0
      %3550 = vmatprep.subr.mxu0 0.0
      %3551 = vmatpush2.msra.mxu0 0.0
      %3552 = vmatprep.subr.mxu0 0.0
      %3553 = vmatpush2.msra.mxu0 0.0
      %3554 = vmatprep.subr.mxu0 0.0
      %3555 = vmatpush2.msra.mxu0 0.0
      %3556 = vmatprep.subr.mxu0 0.0
      %3557 = vmatpush2.msra.mxu0 0.0
      %3558 = vmatprep.subr.mxu0 0.0
      %3559 = vmatpush2.msra.mxu0 0.0
      %3560 = vmatprep.subr.mxu0 0.0
      %3561 = vmatpush2.msra.mxu0 0.0
      %3562 = vmatprep.subr.mxu0 0.0
      %3563 = vmatpush2.msra.mxu0 0.0
      %3564 = vmatprep.mubr.f32.mxu0 0.0
      %3565 = vmatmul.mubr.f32.gmra.mxu0 %v3498
      %v3566 = vpop.f32.mrf.mxu0
      %v3567 = vadd.f32 0.0, %v3566
      %v3568 = vpop.f32.mrf.mxu0
      %v3569 = vadd.f32 0.0, %v3568
      %3570 = vdwg.mxu0
      %3571 = vmatprep.subr.mxu0 0.0
      %3572 = vmatpush1.msra.mxu0 0.0
      %3573 = vmatprep.subr.mxu0 0.0
      %3574 = vmatpush1.msra.mxu0 0.0
      %3575 = vmatprep.subr.mxu0 0.0
      %3576 = vmatpush1.msra.mxu0 0.0
      %3577 = vmatprep.subr.mxu0 0.0
      %3578 = vmatpush1.msra.mxu0 0.0
      %3579 = vmatprep.subr.mxu0 0.0
      %3580 = vmatpush1.msra.mxu0 0.0
      %3581 = vmatprep.subr.mxu0 0.0
      %3582 = vmatpush1.msra.mxu0 0.0
      %3583 = vmatprep.subr.mxu0 0.0
      %3584 = vmatpush1.msra.mxu0 0.0
      %3585 = vmatprep.subr.mxu0 0.0
      %3586 = vmatpush1.msra.mxu0 0.0
      %3587 = vmatprep.subr.mxu0 0.0
      %3588 = vmatpush1.msra.mxu0 0.0
      %3589 = vmatprep.subr.mxu0 0.0
      %3590 = vmatpush1.msra.mxu0 0.0
      %3591 = vmatprep.subr.mxu0 0.0
      %3592 = vmatpush1.msra.mxu0 0.0
      %3593 = vmatprep.subr.mxu0 0.0
      %3594 = vmatpush1.msra.mxu0 0.0
      %3595 = vmatprep.subr.mxu0 0.0
      %3596 = vmatpush1.msra.mxu0 0.0
      %3597 = vmatprep.subr.mxu0 0.0
      %3598 = vmatpush1.msra.mxu0 0.0
      %3599 = vmatprep.subr.mxu0 0.0
      %3600 = vmatpush1.msra.mxu0 %v2786
      %3601 = vmatprep.subr.mxu0 0.0
      %3602 = vmatpush1.msra.mxu0 %v2782
      %3603 = vmatprep.subr.mxu0 0.0
      %3604 = vmatpush2.msra.mxu0 0.0
      %3605 = vmatprep.subr.mxu0 0.0
      %3606 = vmatpush2.msra.mxu0 0.0
      %3607 = vmatprep.subr.mxu0 0.0
      %3608 = vmatpush2.msra.mxu0 0.0
      %3609 = vmatprep.subr.mxu0 0.0
      %3610 = vmatpush2.msra.mxu0 0.0
      %3611 = vmatprep.subr.mxu0 0.0
      %3612 = vmatpush2.msra.mxu0 0.0
      %3613 = vmatprep.subr.mxu0 0.0
      %3614 = vmatpush2.msra.mxu0 0.0
      %3615 = vmatprep.subr.mxu0 0.0
      %3616 = vmatpush2.msra.mxu0 0.0
      %3617 = vmatprep.subr.mxu0 0.0
      %3618 = vmatpush2.msra.mxu0 0.0
      %3619 = vmatprep.subr.mxu0 0.0
      %3620 = vmatpush2.msra.mxu0 0.0
      %3621 = vmatprep.subr.mxu0 0.0
      %3622 = vmatpush2.msra.mxu0 0.0
      %3623 = vmatprep.subr.mxu0 0.0
      %3624 = vmatpush2.msra.mxu0 0.0
      %3625 = vmatprep.subr.mxu0 0.0
      %3626 = vmatpush2.msra.mxu0 0.0
      %3627 = vmatprep.subr.mxu0 0.0
      %3628 = vmatpush2.msra.mxu0 0.0
      %3629 = vmatprep.subr.mxu0 0.0
      %3630 = vmatpush2.msra.mxu0 0.0
      %3631 = vmatprep.subr.mxu0 0.0
      %3632 = vmatpush2.msra.mxu0 0.0
      %3633 = vmatprep.subr.mxu0 0.0
      %3634 = vmatpush2.msra.mxu0 0.0
      %3635 = vmatprep.mubr.f32.mxu0 0.0
      %3636 = vmatmul.mubr.f32.gmra.mxu0 %v3498
      %v3637 = vpop.f32.mrf.mxu0
      %v3638 = vadd.f32 0.0, %v3637
      %v3639 = vpop.f32.mrf.mxu0
      %3640 = vdwg.mxu0
      %v3641 = vadd.f32 %v3492, %v3567
      %v3642 = vadd.f32 %v3493, %v3569
      %v3643 = vadd.f32 %v3494, %v3638
      %s3644 = scalar_lea.vmem %s6, 40
      %v3645 = vld [vmem:[%s3644] sm:$0xff]
      %v3646 = vld [vmem:[#allocation2 + $0x8] sm:$0xff]
      %v3647 = vld [vmem:[#allocation2 + $0x10] sm:$0xff]
      %v3648 = vld [vmem:[#allocation2 + $0x18] sm:$0xff]
      %v3649 = vld [vmem:[#allocation2 + $0x20] sm:$0xff]
      %v3650 = vld [vmem:[#allocation2 + $0x30] sm:$0xff]
      %v3651 = vld [vmem:[#allocation2 + $0x38] sm:$0xff]
      %v3652 = vld [vmem:[#allocation2 + $0x40] sm:$0xff]
      %v3653 = vld [vmem:[#allocation2 + $0x48] sm:$0xff]
      %3662 = vrot.lane.b32.xlu0 %v3646, 127
      %v3663 = vpop.permute.xlu0 %3662
      %3664 = vrot.lane.b32.xlu0 %v3647, 127
      %v3665 = vpop.permute.xlu0 %3664
      %3666 = vrot.lane.b32.xlu0 %v3648, 127
      %v3667 = vpop.permute.xlu0 %3666
      %3668 = vrot.lane.b32.xlu0 %v3649, 127
      %v3669 = vpop.permute.xlu0 %3668
      %3670 = vrot.lane.b32.xlu0 %v3650, 127
      %v3671 = vpop.permute.xlu0 %3670
      %3672 = vrot.lane.b32.xlu0 %v3651, 127
      %v3673 = vpop.permute.xlu0 %3672
      %3674 = vrot.lane.b32.xlu0 %v3652, 127
      %v3675 = vpop.permute.xlu0 %3674
      %3676 = vrot.lane.b32.xlu0 %v3653, 127
      %v3677 = vpop.permute.xlu0 %3676
      %v3678 = vsel %vm438, %v3663, %v3665
      %v3679 = vsel %vm438, %v3665, %v3667
      %v3680 = vsel %vm438, %v3667, %v3669
      %v3681 = vsel %vm438, %v3671, %v3673
      %v3682 = vsel %vm438, %v3673, %v3675
      %v3683 = vsel %vm438, %v3675, %v3677
      %v3691 = vsel %vm1041, %v3645, 0
      %3693 = vmatprep.subr.mxu0 0.0
      %3694 = vmatpush1.msra.mxu0 0.0
      %3695 = vmatprep.subr.mxu0 0.0
      %3696 = vmatpush1.msra.mxu0 0.0
      %3697 = vmatprep.subr.mxu0 0.0
      %3698 = vmatpush1.msra.mxu0 0.0
      %3699 = vmatprep.subr.mxu0 0.0
      %3700 = vmatpush1.msra.mxu0 0.0
      %3701 = vmatprep.subr.mxu0 0.0
      %3702 = vmatpush1.msra.mxu0 0.0
      %3703 = vmatprep.subr.mxu0 0.0
      %3704 = vmatpush1.msra.mxu0 0.0
      %3705 = vmatprep.subr.mxu0 0.0
      %3706 = vmatpush1.msra.mxu0 0.0
      %3707 = vmatprep.subr.mxu0 0.0
      %3708 = vmatpush1.msra.mxu0 0.0
      %3709 = vmatprep.subr.mxu0 0.0
      %3710 = vmatpush1.msra.mxu0 0.0
      %3711 = vmatprep.subr.mxu0 0.0
      %3712 = vmatpush1.msra.mxu0 0.0
      %3713 = vmatprep.subr.mxu0 0.0
      %3714 = vmatpush1.msra.mxu0 0.0
      %3715 = vmatprep.subr.mxu0 0.0
      %3716 = vmatpush1.msra.mxu0 0.0
      %3717 = vmatprep.subr.mxu0 0.0
      %3718 = vmatpush1.msra.mxu0 0.0
      %3719 = vmatprep.subr.mxu0 0.0
      %3720 = vmatpush1.msra.mxu0 0.0
      %3721 = vmatprep.subr.mxu0 %v3682
      %3722 = vmatpush1.msra.mxu0 %v3681
      %3723 = vmatprep.subr.mxu0 %v3679
      %3724 = vmatpush1.msra.mxu0 %v3678
      %3725 = vmatprep.subr.mxu0 0.0
      %3726 = vmatpush2.msra.mxu0 0.0
      %3727 = vmatprep.subr.mxu0 0.0
      %3728 = vmatpush2.msra.mxu0 0.0
      %3729 = vmatprep.subr.mxu0 0.0
      %3730 = vmatpush2.msra.mxu0 0.0
      %3731 = vmatprep.subr.mxu0 0.0
      %3732 = vmatpush2.msra.mxu0 0.0
      %3733 = vmatprep.subr.mxu0 0.0
      %3734 = vmatpush2.msra.mxu0 0.0
      %3735 = vmatprep.subr.mxu0 0.0
      %3736 = vmatpush2.msra.mxu0 0.0
      %3737 = vmatprep.subr.mxu0 0.0
      %3738 = vmatpush2.msra.mxu0 0.0
      %3739 = vmatprep.subr.mxu0 0.0
      %3740 = vmatpush2.msra.mxu0 0.0
      %3741 = vmatprep.subr.mxu0 0.0
      %3742 = vmatpush2.msra.mxu0 0.0
      %3743 = vmatprep.subr.mxu0 0.0
      %3744 = vmatpush2.msra.mxu0 0.0
      %3745 = vmatprep.subr.mxu0 0.0
      %3746 = vmatpush2.msra.mxu0 0.0
      %3747 = vmatprep.subr.mxu0 0.0
      %3748 = vmatpush2.msra.mxu0 0.0
      %3749 = vmatprep.subr.mxu0 0.0
      %3750 = vmatpush2.msra.mxu0 0.0
      %3751 = vmatprep.subr.mxu0 0.0
      %3752 = vmatpush2.msra.mxu0 0.0
      %3753 = vmatprep.subr.mxu0 0.0
      %3754 = vmatpush2.msra.mxu0 0.0
      %3755 = vmatprep.subr.mxu0 0.0
      %3756 = vmatpush2.msra.mxu0 0.0
      %3757 = vmatprep.mubr.f32.mxu0 0.0
      %3758 = vmatmul.mubr.f32.gmra.mxu0 %v3691
      %v3759 = vpop.f32.mrf.mxu0
      %v3760 = vadd.f32 0.0, %v3759
      %v3761 = vpop.f32.mrf.mxu0
      %v3762 = vadd.f32 0.0, %v3761
      %3763 = vdwg.mxu0
      %3764 = vmatprep.subr.mxu0 0.0
      %3765 = vmatpush1.msra.mxu0 0.0
      %3766 = vmatprep.subr.mxu0 0.0
      %3767 = vmatpush1.msra.mxu0 0.0
      %3768 = vmatprep.subr.mxu0 0.0
      %3769 = vmatpush1.msra.mxu0 0.0
      %3770 = vmatprep.subr.mxu0 0.0
      %3771 = vmatpush1.msra.mxu0 0.0
      %3772 = vmatprep.subr.mxu0 0.0
      %3773 = vmatpush1.msra.mxu0 0.0
      %3774 = vmatprep.subr.mxu0 0.0
      %3775 = vmatpush1.msra.mxu0 0.0
      %3776 = vmatprep.subr.mxu0 0.0
      %3777 = vmatpush1.msra.mxu0 0.0
      %3778 = vmatprep.subr.mxu0 0.0
      %3779 = vmatpush1.msra.mxu0 0.0
      %3780 = vmatprep.subr.mxu0 0.0
      %3781 = vmatpush1.msra.mxu0 0.0
      %3782 = vmatprep.subr.mxu0 0.0
      %3783 = vmatpush1.msra.mxu0 0.0
      %3784 = vmatprep.subr.mxu0 0.0
      %3785 = vmatpush1.msra.mxu0 0.0
      %3786 = vmatprep.subr.mxu0 0.0
      %3787 = vmatpush1.msra.mxu0 0.0
      %3788 = vmatprep.subr.mxu0 0.0
      %3789 = vmatpush1.msra.mxu0 0.0
      %3790 = vmatprep.subr.mxu0 0.0
      %3791 = vmatpush1.msra.mxu0 0.0
      %3792 = vmatprep.subr.mxu0 0.0
      %3793 = vmatpush1.msra.mxu0 %v3683
      %3794 = vmatprep.subr.mxu0 0.0
      %3795 = vmatpush1.msra.mxu0 %v3680
      %3796 = vmatprep.subr.mxu0 0.0
      %3797 = vmatpush2.msra.mxu0 0.0
      %3798 = vmatprep.subr.mxu0 0.0
      %3799 = vmatpush2.msra.mxu0 0.0
      %3800 = vmatprep.subr.mxu0 0.0
      %3801 = vmatpush2.msra.mxu0 0.0
      %3802 = vmatprep.subr.mxu0 0.0
      %3803 = vmatpush2.msra.mxu0 0.0
      %3804 = vmatprep.subr.mxu0 0.0
      %3805 = vmatpush2.msra.mxu0 0.0
      %3806 = vmatprep.subr.mxu0 0.0
      %3807 = vmatpush2.msra.mxu0 0.0
      %3808 = vmatprep.subr.mxu0 0.0
      %3809 = vmatpush2.msra.mxu0 0.0
      %3810 = vmatprep.subr.mxu0 0.0
      %3811 = vmatpush2.msra.mxu0 0.0
      %3812 = vmatprep.subr.mxu0 0.0
      %3813 = vmatpush2.msra.mxu0 0.0
      %3814 = vmatprep.subr.mxu0 0.0
      %3815 = vmatpush2.msra.mxu0 0.0
      %3816 = vmatprep.subr.mxu0 0.0
      %3817 = vmatpush2.msra.mxu0 0.0
      %3818 = vmatprep.subr.mxu0 0.0
      %3819 = vmatpush2.msra.mxu0 0.0
      %3820 = vmatprep.subr.mxu0 0.0
      %3821 = vmatpush2.msra.mxu0 0.0
      %3822 = vmatprep.subr.mxu0 0.0
      %3823 = vmatpush2.msra.mxu0 0.0
      %3824 = vmatprep.subr.mxu0 0.0
      %3825 = vmatpush2.msra.mxu0 0.0
      %3826 = vmatprep.subr.mxu0 0.0
      %3827 = vmatpush2.msra.mxu0 0.0
      %3828 = vmatprep.mubr.f32.mxu0 0.0
      %3829 = vmatmul.mubr.f32.gmra.mxu0 %v3691
      %v3830 = vpop.f32.mrf.mxu0
      %v3831 = vadd.f32 0.0, %v3830
      %v3832 = vpop.f32.mrf.mxu0
      %3833 = vdwg.mxu0
      %v3834 = vadd.f32 %v3641, %v3760
      %v3835 = vadd.f32 %v3642, %v3762
      %v3836 = vadd.f32 %v3643, %v3831
      %s3837 = scalar_lea.vmem %s6, 48
      %v3838 = vld [vmem:[%s3837] sm:$0xff]
      %3839 = vrot.lane.b32.xlu0 %v3646, 111
      %v3840 = vpop.permute.xlu0 %3839
      %3841 = vrot.lane.b32.xlu0 %v3647, 111
      %v3842 = vpop.permute.xlu0 %3841
      %3843 = vrot.lane.b32.xlu0 %v3648, 111
      %v3844 = vpop.permute.xlu0 %3843
      %3845 = vrot.lane.b32.xlu0 %v3649, 111
      %v3846 = vpop.permute.xlu0 %3845
      %3847 = vrot.lane.b32.xlu0 %v3650, 111
      %v3848 = vpop.permute.xlu0 %3847
      %3849 = vrot.lane.b32.xlu0 %v3651, 111
      %v3850 = vpop.permute.xlu0 %3849
      %3851 = vrot.lane.b32.xlu0 %v3652, 111
      %v3852 = vpop.permute.xlu0 %3851
      %3853 = vrot.lane.b32.xlu0 %v3653, 111
      %v3854 = vpop.permute.xlu0 %3853
      %v3855 = vsel %vm2175, %v3840, %v3842
      %v3856 = vsel %vm2175, %v3842, %v3844
      %v3857 = vsel %vm2175, %v3844, %v3846
      %v3858 = vsel %vm2175, %v3848, %v3850
      %v3859 = vsel %vm2175, %v3850, %v3852
      %v3860 = vsel %vm2175, %v3852, %v3854
      %v3868 = vsel %vm1041, %v3838, 0
      %3870 = vmatprep.subr.mxu0 0.0
      %3871 = vmatpush1.msra.mxu0 0.0
      %3872 = vmatprep.subr.mxu0 0.0
      %3873 = vmatpush1.msra.mxu0 0.0
      %3874 = vmatprep.subr.mxu0 0.0
      %3875 = vmatpush1.msra.mxu0 0.0
      %3876 = vmatprep.subr.mxu0 0.0
      %3877 = vmatpush1.msra.mxu0 0.0
      %3878 = vmatprep.subr.mxu0 0.0
      %3879 = vmatpush1.msra.mxu0 0.0
      %3880 = vmatprep.subr.mxu0 0.0
      %3881 = vmatpush1.msra.mxu0 0.0
      %3882 = vmatprep.subr.mxu0 0.0
      %3883 = vmatpush1.msra.mxu0 0.0
      %3884 = vmatprep.subr.mxu0 0.0
      %3885 = vmatpush1.msra.mxu0 0.0
      %3886 = vmatprep.subr.mxu0 0.0
      %3887 = vmatpush1.msra.mxu0 0.0
      %3888 = vmatprep.subr.mxu0 0.0
      %3889 = vmatpush1.msra.mxu0 0.0
      %3890 = vmatprep.subr.mxu0 0.0
      %3891 = vmatpush1.msra.mxu0 0.0
      %3892 = vmatprep.subr.mxu0 0.0
      %3893 = vmatpush1.msra.mxu0 0.0
      %3894 = vmatprep.subr.mxu0 0.0
      %3895 = vmatpush1.msra.mxu0 0.0
      %3896 = vmatprep.subr.mxu0 0.0
      %3897 = vmatpush1.msra.mxu0 0.0
      %3898 = vmatprep.subr.mxu0 %v3859
      %3899 = vmatpush1.msra.mxu0 %v3858
      %3900 = vmatprep.subr.mxu0 %v3856
      %3901 = vmatpush1.msra.mxu0 %v3855
      %3902 = vmatprep.subr.mxu0 0.0
      %3903 = vmatpush2.msra.mxu0 0.0
      %3904 = vmatprep.subr.mxu0 0.0
      %3905 = vmatpush2.msra.mxu0 0.0
      %3906 = vmatprep.subr.mxu0 0.0
      %3907 = vmatpush2.msra.mxu0 0.0
      %3908 = vmatprep.subr.mxu0 0.0
      %3909 = vmatpush2.msra.mxu0 0.0
      %3910 = vmatprep.subr.mxu0 0.0
      %3911 = vmatpush2.msra.mxu0 0.0
      %3912 = vmatprep.subr.mxu0 0.0
      %3913 = vmatpush2.msra.mxu0 0.0
      %3914 = vmatprep.subr.mxu0 0.0
      %3915 = vmatpush2.msra.mxu0 0.0
      %3916 = vmatprep.subr.mxu0 0.0
      %3917 = vmatpush2.msra.mxu0 0.0
      %3918 = vmatprep.subr.mxu0 0.0
      %3919 = vmatpush2.msra.mxu0 0.0
      %3920 = vmatprep.subr.mxu0 0.0
      %3921 = vmatpush2.msra.mxu0 0.0
      %3922 = vmatprep.subr.mxu0 0.0
      %3923 = vmatpush2.msra.mxu0 0.0
      %3924 = vmatprep.subr.mxu0 0.0
      %3925 = vmatpush2.msra.mxu0 0.0
      %3926 = vmatprep.subr.mxu0 0.0
      %3927 = vmatpush2.msra.mxu0 0.0
      %3928 = vmatprep.subr.mxu0 0.0
      %3929 = vmatpush2.msra.mxu0 0.0
      %3930 = vmatprep.subr.mxu0 0.0
      %3931 = vmatpush2.msra.mxu0 0.0
      %3932 = vmatprep.subr.mxu0 0.0
      %3933 = vmatpush2.msra.mxu0 0.0
      %3934 = vmatprep.mubr.f32.mxu0 0.0
      %3935 = vmatmul.mubr.f32.gmra.mxu0 %v3868
      %v3936 = vpop.f32.mrf.mxu0
      %v3937 = vadd.f32 0.0, %v3936
      %v3938 = vpop.f32.mrf.mxu0
      %v3939 = vadd.f32 0.0, %v3938
      %3940 = vdwg.mxu0
      %3941 = vmatprep.subr.mxu0 0.0
      %3942 = vmatpush1.msra.mxu0 0.0
      %3943 = vmatprep.subr.mxu0 0.0
      %3944 = vmatpush1.msra.mxu0 0.0
      %3945 = vmatprep.subr.mxu0 0.0
      %3946 = vmatpush1.msra.mxu0 0.0
      %3947 = vmatprep.subr.mxu0 0.0
      %3948 = vmatpush1.msra.mxu0 0.0
      %3949 = vmatprep.subr.mxu0 0.0
      %3950 = vmatpush1.msra.mxu0 0.0
      %3951 = vmatprep.subr.mxu0 0.0
      %3952 = vmatpush1.msra.mxu0 0.0
      %3953 = vmatprep.subr.mxu0 0.0
      %3954 = vmatpush1.msra.mxu0 0.0
      %3955 = vmatprep.subr.mxu0 0.0
      %3956 = vmatpush1.msra.mxu0 0.0
      %3957 = vmatprep.subr.mxu0 0.0
      %3958 = vmatpush1.msra.mxu0 0.0
      %3959 = vmatprep.subr.mxu0 0.0
      %3960 = vmatpush1.msra.mxu0 0.0
      %3961 = vmatprep.subr.mxu0 0.0
      %3962 = vmatpush1.msra.mxu0 0.0
      %3963 = vmatprep.subr.mxu0 0.0
      %3964 = vmatpush1.msra.mxu0 0.0
      %3965 = vmatprep.subr.mxu0 0.0
      %3966 = vmatpush1.msra.mxu0 0.0
      %3967 = vmatprep.subr.mxu0 0.0
      %3968 = vmatpush1.msra.mxu0 0.0
      %3969 = vmatprep.subr.mxu0 0.0
      %3970 = vmatpush1.msra.mxu0 %v3860
      %3971 = vmatprep.subr.mxu0 0.0
      %3972 = vmatpush1.msra.mxu0 %v3857
      %3973 = vmatprep.subr.mxu0 0.0
      %3974 = vmatpush2.msra.mxu0 0.0
      %3975 = vmatprep.subr.mxu0 0.0
      %3976 = vmatpush2.msra.mxu0 0.0
      %3977 = vmatprep.subr.mxu0 0.0
      %3978 = vmatpush2.msra.mxu0 0.0
      %3979 = vmatprep.subr.mxu0 0.0
      %3980 = vmatpush2.msra.mxu0 0.0
      %3981 = vmatprep.subr.mxu0 0.0
      %3982 = vmatpush2.msra.mxu0 0.0
      %3983 = vmatprep.subr.mxu0 0.0
      %3984 = vmatpush2.msra.mxu0 0.0
      %3985 = vmatprep.subr.mxu0 0.0
      %3986 = vmatpush2.msra.mxu0 0.0
      %3987 = vmatprep.subr.mxu0 0.0
      %3988 = vmatpush2.msra.mxu0 0.0
      %3989 = vmatprep.subr.mxu0 0.0
      %3990 = vmatpush2.msra.mxu0 0.0
      %3991 = vmatprep.subr.mxu0 0.0
      %3992 = vmatpush2.msra.mxu0 0.0
      %3993 = vmatprep.subr.mxu0 0.0
      %3994 = vmatpush2.msra.mxu0 0.0
      %3995 = vmatprep.subr.mxu0 0.0
      %3996 = vmatpush2.msra.mxu0 0.0
      %3997 = vmatprep.subr.mxu0 0.0
      %3998 = vmatpush2.msra.mxu0 0.0
      %3999 = vmatprep.subr.mxu0 0.0
      %4000 = vmatpush2.msra.mxu0 0.0
      %4001 = vmatprep.subr.mxu0 0.0
      %4002 = vmatpush2.msra.mxu0 0.0
      %4003 = vmatprep.subr.mxu0 0.0
      %4004 = vmatpush2.msra.mxu0 0.0
      %4005 = vmatprep.mubr.f32.mxu0 0.0
      %4006 = vmatmul.mubr.f32.gmra.mxu0 %v3868
      %v4007 = vpop.f32.mrf.mxu0
      %v4008 = vadd.f32 0.0, %v4007
      %v4009 = vpop.f32.mrf.mxu0
      %4010 = vdwg.mxu0
      %v4011 = vadd.f32 %v3834, %v3937
      %v4012 = vadd.f32 %v3835, %v3939
      %v4013 = vadd.f32 %v3836, %v4008
      %s4014 = scalar_lea.vmem %s6, 56
      %v4015 = vld [vmem:[%s4014] sm:$0xff]
      %4016 = vrot.lane.b32.xlu0 %v3646, 110
      %v4017 = vpop.permute.xlu0 %4016
      %4018 = vrot.lane.b32.xlu0 %v3647, 110
      %v4019 = vpop.permute.xlu0 %4018
      %4020 = vrot.lane.b32.xlu0 %v3648, 110
      %v4021 = vpop.permute.xlu0 %4020
      %4022 = vrot.lane.b32.xlu0 %v3649, 110
      %v4023 = vpop.permute.xlu0 %4022
      %4024 = vrot.lane.b32.xlu0 %v3650, 110
      %v4025 = vpop.permute.xlu0 %4024
      %4026 = vrot.lane.b32.xlu0 %v3651, 110
      %v4027 = vpop.permute.xlu0 %4026
      %4028 = vrot.lane.b32.xlu0 %v3652, 110
      %v4029 = vpop.permute.xlu0 %4028
      %4030 = vrot.lane.b32.xlu0 %v3653, 110
      %v4031 = vpop.permute.xlu0 %4030
      %v4032 = vsel %vm564, %v4017, %v4019
      %v4033 = vsel %vm564, %v4019, %v4021
      %v4034 = vsel %vm564, %v4021, %v4023
      %v4035 = vsel %vm564, %v4025, %v4027
      %v4036 = vsel %vm564, %v4027, %v4029
      %v4037 = vsel %vm564, %v4029, %v4031
      %v4045 = vsel %vm1041, %v4015, 0
      %4047 = vmatprep.subr.mxu0 0.0
      %4048 = vmatpush1.msra.mxu0 0.0
      %4049 = vmatprep.subr.mxu0 0.0
      %4050 = vmatpush1.msra.mxu0 0.0
      %4051 = vmatprep.subr.mxu0 0.0
      %4052 = vmatpush1.msra.mxu0 0.0
      %4053 = vmatprep.subr.mxu0 0.0
      %4054 = vmatpush1.msra.mxu0 0.0
      %4055 = vmatprep.subr.mxu0 0.0
      %4056 = vmatpush1.msra.mxu0 0.0
      %4057 = vmatprep.subr.mxu0 0.0
      %4058 = vmatpush1.msra.mxu0 0.0
      %4059 = vmatprep.subr.mxu0 0.0
      %4060 = vmatpush1.msra.mxu0 0.0
      %4061 = vmatprep.subr.mxu0 0.0
      %4062 = vmatpush1.msra.mxu0 0.0
      %4063 = vmatprep.subr.mxu0 0.0
      %4064 = vmatpush1.msra.mxu0 0.0
      %4065 = vmatprep.subr.mxu0 0.0
      %4066 = vmatpush1.msra.mxu0 0.0
      %4067 = vmatprep.subr.mxu0 0.0
      %4068 = vmatpush1.msra.mxu0 0.0
      %4069 = vmatprep.subr.mxu0 0.0
      %4070 = vmatpush1.msra.mxu0 0.0
      %4071 = vmatprep.subr.mxu0 0.0
      %4072 = vmatpush1.msra.mxu0 0.0
      %4073 = vmatprep.subr.mxu0 0.0
      %4074 = vmatpush1.msra.mxu0 0.0
      %4075 = vmatprep.subr.mxu0 %v4036
      %4076 = vmatpush1.msra.mxu0 %v4035
      %4077 = vmatprep.subr.mxu0 %v4033
      %4078 = vmatpush1.msra.mxu0 %v4032
      %4079 = vmatprep.subr.mxu0 0.0
      %4080 = vmatpush2.msra.mxu0 0.0
      %4081 = vmatprep.subr.mxu0 0.0
      %4082 = vmatpush2.msra.mxu0 0.0
      %4083 = vmatprep.subr.mxu0 0.0
      %4084 = vmatpush2.msra.mxu0 0.0
      %4085 = vmatprep.subr.mxu0 0.0
      %4086 = vmatpush2.msra.mxu0 0.0
      %4087 = vmatprep.subr.mxu0 0.0
      %4088 = vmatpush2.msra.mxu0 0.0
      %4089 = vmatprep.subr.mxu0 0.0
      %4090 = vmatpush2.msra.mxu0 0.0
      %4091 = vmatprep.subr.mxu0 0.0
      %4092 = vmatpush2.msra.mxu0 0.0
      %4093 = vmatprep.subr.mxu0 0.0
      %4094 = vmatpush2.msra.mxu0 0.0
      %4095 = vmatprep.subr.mxu0 0.0
      %4096 = vmatpush2.msra.mxu0 0.0
      %4097 = vmatprep.subr.mxu0 0.0
      %4098 = vmatpush2.msra.mxu0 0.0
      %4099 = vmatprep.subr.mxu0 0.0
      %4100 = vmatpush2.msra.mxu0 0.0
      %4101 = vmatprep.subr.mxu0 0.0
      %4102 = vmatpush2.msra.mxu0 0.0
      %4103 = vmatprep.subr.mxu0 0.0
      %4104 = vmatpush2.msra.mxu0 0.0
      %4105 = vmatprep.subr.mxu0 0.0
      %4106 = vmatpush2.msra.mxu0 0.0
      %4107 = vmatprep.subr.mxu0 0.0
      %4108 = vmatpush2.msra.mxu0 0.0
      %4109 = vmatprep.subr.mxu0 0.0
      %4110 = vmatpush2.msra.mxu0 0.0
      %4111 = vmatprep.mubr.f32.mxu0 0.0
      %4112 = vmatmul.mubr.f32.gmra.mxu0 %v4045
      %v4113 = vpop.f32.mrf.mxu0
      %v4114 = vadd.f32 0.0, %v4113
      %v4115 = vpop.f32.mrf.mxu0
      %v4116 = vadd.f32 0.0, %v4115
      %4117 = vdwg.mxu0
      %4118 = vmatprep.subr.mxu0 0.0
      %4119 = vmatpush1.msra.mxu0 0.0
      %4120 = vmatprep.subr.mxu0 0.0
      %4121 = vmatpush1.msra.mxu0 0.0
      %4122 = vmatprep.subr.mxu0 0.0
      %4123 = vmatpush1.msra.mxu0 0.0
      %4124 = vmatprep.subr.mxu0 0.0
      %4125 = vmatpush1.msra.mxu0 0.0
      %4126 = vmatprep.subr.mxu0 0.0
      %4127 = vmatpush1.msra.mxu0 0.0
      %4128 = vmatprep.subr.mxu0 0.0
      %4129 = vmatpush1.msra.mxu0 0.0
      %4130 = vmatprep.subr.mxu0 0.0
      %4131 = vmatpush1.msra.mxu0 0.0
      %4132 = vmatprep.subr.mxu0 0.0
      %4133 = vmatpush1.msra.mxu0 0.0
      %4134 = vmatprep.subr.mxu0 0.0
      %4135 = vmatpush1.msra.mxu0 0.0
      %4136 = vmatprep.subr.mxu0 0.0
      %4137 = vmatpush1.msra.mxu0 0.0
      %4138 = vmatprep.subr.mxu0 0.0
      %4139 = vmatpush1.msra.mxu0 0.0
      %4140 = vmatprep.subr.mxu0 0.0
      %4141 = vmatpush1.msra.mxu0 0.0
      %4142 = vmatprep.subr.mxu0 0.0
      %4143 = vmatpush1.msra.mxu0 0.0
      %4144 = vmatprep.subr.mxu0 0.0
      %4145 = vmatpush1.msra.mxu0 0.0
      %4146 = vmatprep.subr.mxu0 0.0
      %4147 = vmatpush1.msra.mxu0 %v4037
      %4148 = vmatprep.subr.mxu0 0.0
      %4149 = vmatpush1.msra.mxu0 %v4034
      %4150 = vmatprep.subr.mxu0 0.0
      %4151 = vmatpush2.msra.mxu0 0.0
      %4152 = vmatprep.subr.mxu0 0.0
      %4153 = vmatpush2.msra.mxu0 0.0
      %4154 = vmatprep.subr.mxu0 0.0
      %4155 = vmatpush2.msra.mxu0 0.0
      %4156 = vmatprep.subr.mxu0 0.0
      %4157 = vmatpush2.msra.mxu0 0.0
      %4158 = vmatprep.subr.mxu0 0.0
      %4159 = vmatpush2.msra.mxu0 0.0
      %4160 = vmatprep.subr.mxu0 0.0
      %4161 = vmatpush2.msra.mxu0 0.0
      %4162 = vmatprep.subr.mxu0 0.0
      %4163 = vmatpush2.msra.mxu0 0.0
      %4164 = vmatprep.subr.mxu0 0.0
      %4165 = vmatpush2.msra.mxu0 0.0
      %4166 = vmatprep.subr.mxu0 0.0
      %4167 = vmatpush2.msra.mxu0 0.0
      %4168 = vmatprep.subr.mxu0 0.0
      %4169 = vmatpush2.msra.mxu0 0.0
      %4170 = vmatprep.subr.mxu0 0.0
      %4171 = vmatpush2.msra.mxu0 0.0
      %4172 = vmatprep.subr.mxu0 0.0
      %4173 = vmatpush2.msra.mxu0 0.0
      %4174 = vmatprep.subr.mxu0 0.0
      %4175 = vmatpush2.msra.mxu0 0.0
      %4176 = vmatprep.subr.mxu0 0.0
      %4177 = vmatpush2.msra.mxu0 0.0
      %4178 = vmatprep.subr.mxu0 0.0
      %4179 = vmatpush2.msra.mxu0 0.0
      %4180 = vmatprep.subr.mxu0 0.0
      %4181 = vmatpush2.msra.mxu0 0.0
      %4182 = vmatprep.mubr.f32.mxu0 0.0
      %4183 = vmatmul.mubr.f32.gmra.mxu0 %v4045
      %v4184 = vpop.f32.mrf.mxu0
      %v4185 = vadd.f32 0.0, %v4184
      %v4186 = vpop.f32.mrf.mxu0
      %4187 = vdwg.mxu0
      %v4188 = vadd.f32 %v4011, %v4114
      %v4189 = vadd.f32 %v4012, %v4116
      %v4190 = vadd.f32 %v4013, %v4185
      %s4191 = scalar_lea.vmem %s6, 64
      %v4192 = vld [vmem:[%s4191] sm:$0xff]
      %4193 = vrot.lane.b32.xlu0 %v3646, 109
      %v4194 = vpop.permute.xlu0 %4193
      %4195 = vrot.lane.b32.xlu0 %v3647, 109
      %v4196 = vpop.permute.xlu0 %4195
      %4197 = vrot.lane.b32.xlu0 %v3648, 109
      %v4198 = vpop.permute.xlu0 %4197
      %4199 = vrot.lane.b32.xlu0 %v3649, 109
      %v4200 = vpop.permute.xlu0 %4199
      %4201 = vrot.lane.b32.xlu0 %v3650, 109
      %v4202 = vpop.permute.xlu0 %4201
      %4203 = vrot.lane.b32.xlu0 %v3651, 109
      %v4204 = vpop.permute.xlu0 %4203
      %4205 = vrot.lane.b32.xlu0 %v3652, 109
      %v4206 = vpop.permute.xlu0 %4205
      %4207 = vrot.lane.b32.xlu0 %v3653, 109
      %v4208 = vpop.permute.xlu0 %4207
      %v4209 = vsel %vm619, %v4194, %v4196
      %v4210 = vsel %vm619, %v4196, %v4198
      %v4211 = vsel %vm619, %v4198, %v4200
      %v4212 = vsel %vm619, %v4202, %v4204
      %v4213 = vsel %vm619, %v4204, %v4206
      %v4214 = vsel %vm619, %v4206, %v4208
      %v4222 = vsel %vm1041, %v4192, 0
      %4224 = vmatprep.subr.mxu0 0.0
      %4225 = vmatpush1.msra.mxu0 0.0
      %4226 = vmatprep.subr.mxu0 0.0
      %4227 = vmatpush1.msra.mxu0 0.0
      %4228 = vmatprep.subr.mxu0 0.0
      %4229 = vmatpush1.msra.mxu0 0.0
      %4230 = vmatprep.subr.mxu0 0.0
      %4231 = vmatpush1.msra.mxu0 0.0
      %4232 = vmatprep.subr.mxu0 0.0
      %4233 = vmatpush1.msra.mxu0 0.0
      %4234 = vmatprep.subr.mxu0 0.0
      %4235 = vmatpush1.msra.mxu0 0.0
      %4236 = vmatprep.subr.mxu0 0.0
      %4237 = vmatpush1.msra.mxu0 0.0
      %4238 = vmatprep.subr.mxu0 0.0
      %4239 = vmatpush1.msra.mxu0 0.0
      %4240 = vmatprep.subr.mxu0 0.0
      %4241 = vmatpush1.msra.mxu0 0.0
      %4242 = vmatprep.subr.mxu0 0.0
      %4243 = vmatpush1.msra.mxu0 0.0
      %4244 = vmatprep.subr.mxu0 0.0
      %4245 = vmatpush1.msra.mxu0 0.0
      %4246 = vmatprep.subr.mxu0 0.0
      %4247 = vmatpush1.msra.mxu0 0.0
      %4248 = vmatprep.subr.mxu0 0.0
      %4249 = vmatpush1.msra.mxu0 0.0
      %4250 = vmatprep.subr.mxu0 0.0
      %4251 = vmatpush1.msra.mxu0 0.0
      %4252 = vmatprep.subr.mxu0 %v4213
      %4253 = vmatpush1.msra.mxu0 %v4212
      %4254 = vmatprep.subr.mxu0 %v4210
      %4255 = vmatpush1.msra.mxu0 %v4209
      %4256 = vmatprep.subr.mxu0 0.0
      %4257 = vmatpush2.msra.mxu0 0.0
      %4258 = vmatprep.subr.mxu0 0.0
      %4259 = vmatpush2.msra.mxu0 0.0
      %4260 = vmatprep.subr.mxu0 0.0
      %4261 = vmatpush2.msra.mxu0 0.0
      %4262 = vmatprep.subr.mxu0 0.0
      %4263 = vmatpush2.msra.mxu0 0.0
      %4264 = vmatprep.subr.mxu0 0.0
      %4265 = vmatpush2.msra.mxu0 0.0
      %4266 = vmatprep.subr.mxu0 0.0
      %4267 = vmatpush2.msra.mxu0 0.0
      %4268 = vmatprep.subr.mxu0 0.0
      %4269 = vmatpush2.msra.mxu0 0.0
      %4270 = vmatprep.subr.mxu0 0.0
      %4271 = vmatpush2.msra.mxu0 0.0
      %4272 = vmatprep.subr.mxu0 0.0
      %4273 = vmatpush2.msra.mxu0 0.0
      %4274 = vmatprep.subr.mxu0 0.0
      %4275 = vmatpush2.msra.mxu0 0.0
      %4276 = vmatprep.subr.mxu0 0.0
      %4277 = vmatpush2.msra.mxu0 0.0
      %4278 = vmatprep.subr.mxu0 0.0
      %4279 = vmatpush2.msra.mxu0 0.0
      %4280 = vmatprep.subr.mxu0 0.0
      %4281 = vmatpush2.msra.mxu0 0.0
      %4282 = vmatprep.subr.mxu0 0.0
      %4283 = vmatpush2.msra.mxu0 0.0
      %4284 = vmatprep.subr.mxu0 0.0
      %4285 = vmatpush2.msra.mxu0 0.0
      %4286 = vmatprep.subr.mxu0 0.0
      %4287 = vmatpush2.msra.mxu0 0.0
      %4288 = vmatprep.mubr.f32.mxu0 0.0
      %4289 = vmatmul.mubr.f32.gmra.mxu0 %v4222
      %v4290 = vpop.f32.mrf.mxu0
      %v4291 = vadd.f32 0.0, %v4290
      %v4292 = vpop.f32.mrf.mxu0
      %v4293 = vadd.f32 0.0, %v4292
      %4294 = vdwg.mxu0
      %4295 = vmatprep.subr.mxu0 0.0
      %4296 = vmatpush1.msra.mxu0 0.0
      %4297 = vmatprep.subr.mxu0 0.0
      %4298 = vmatpush1.msra.mxu0 0.0
      %4299 = vmatprep.subr.mxu0 0.0
      %4300 = vmatpush1.msra.mxu0 0.0
      %4301 = vmatprep.subr.mxu0 0.0
      %4302 = vmatpush1.msra.mxu0 0.0
      %4303 = vmatprep.subr.mxu0 0.0
      %4304 = vmatpush1.msra.mxu0 0.0
      %4305 = vmatprep.subr.mxu0 0.0
      %4306 = vmatpush1.msra.mxu0 0.0
      %4307 = vmatprep.subr.mxu0 0.0
      %4308 = vmatpush1.msra.mxu0 0.0
      %4309 = vmatprep.subr.mxu0 0.0
      %4310 = vmatpush1.msra.mxu0 0.0
      %4311 = vmatprep.subr.mxu0 0.0
      %4312 = vmatpush1.msra.mxu0 0.0
      %4313 = vmatprep.subr.mxu0 0.0
      %4314 = vmatpush1.msra.mxu0 0.0
      %4315 = vmatprep.subr.mxu0 0.0
      %4316 = vmatpush1.msra.mxu0 0.0
      %4317 = vmatprep.subr.mxu0 0.0
      %4318 = vmatpush1.msra.mxu0 0.0
      %4319 = vmatprep.subr.mxu0 0.0
      %4320 = vmatpush1.msra.mxu0 0.0
      %4321 = vmatprep.subr.mxu0 0.0
      %4322 = vmatpush1.msra.mxu0 0.0
      %4323 = vmatprep.subr.mxu0 0.0
      %4324 = vmatpush1.msra.mxu0 %v4214
      %4325 = vmatprep.subr.mxu0 0.0
      %4326 = vmatpush1.msra.mxu0 %v4211
      %4327 = vmatprep.subr.mxu0 0.0
      %4328 = vmatpush2.msra.mxu0 0.0
      %4329 = vmatprep.subr.mxu0 0.0
      %4330 = vmatpush2.msra.mxu0 0.0
      %4331 = vmatprep.subr.mxu0 0.0
      %4332 = vmatpush2.msra.mxu0 0.0
      %4333 = vmatprep.subr.mxu0 0.0
      %4334 = vmatpush2.msra.mxu0 0.0
      %4335 = vmatprep.subr.mxu0 0.0
      %4336 = vmatpush2.msra.mxu0 0.0
      %4337 = vmatprep.subr.mxu0 0.0
      %4338 = vmatpush2.msra.mxu0 0.0
      %4339 = vmatprep.subr.mxu0 0.0
      %4340 = vmatpush2.msra.mxu0 0.0
      %4341 = vmatprep.subr.mxu0 0.0
      %4342 = vmatpush2.msra.mxu0 0.0
      %4343 = vmatprep.subr.mxu0 0.0
      %4344 = vmatpush2.msra.mxu0 0.0
      %4345 = vmatprep.subr.mxu0 0.0
      %4346 = vmatpush2.msra.mxu0 0.0
      %4347 = vmatprep.subr.mxu0 0.0
      %4348 = vmatpush2.msra.mxu0 0.0
      %4349 = vmatprep.subr.mxu0 0.0
      %4350 = vmatpush2.msra.mxu0 0.0
      %4351 = vmatprep.subr.mxu0 0.0
      %4352 = vmatpush2.msra.mxu0 0.0
      %4353 = vmatprep.subr.mxu0 0.0
      %4354 = vmatpush2.msra.mxu0 0.0
      %4355 = vmatprep.subr.mxu0 0.0
      %4356 = vmatpush2.msra.mxu0 0.0
      %4357 = vmatprep.subr.mxu0 0.0
      %4358 = vmatpush2.msra.mxu0 0.0
      %4359 = vmatprep.mubr.f32.mxu0 0.0
      %4360 = vmatmul.mubr.f32.gmra.mxu0 %v4222
      %v4361 = vpop.f32.mrf.mxu0
      %v4362 = vadd.f32 0.0, %v4361
      %v4363 = vpop.f32.mrf.mxu0
      %4364 = vdwg.mxu0
      %v4365 = vadd.f32 %v4188, %v4291
      %v4366 = vadd.f32 %v4189, %v4293
      %v4367 = vadd.f32 %v4190, %v4362
      %v4368 = vld [vmem:[%s7] sm:$0xff]
      %4370 = vset.pattern.permute.xlu0 0
      %4371 = vperm.xlu0 %4370, %v4368
      %v4372 = vpop.permute.xlu0 %4371
      %v4374 = vadd.f32 %v4365, %v4372
      %v4375 = vadd.f32 %v4366, %v4372
      %v4376 = vadd.f32 %v4367, %v4372
      %v4377 = vmax.f32 %v4374, 0.0
      %v4378 = vmax.f32 %v4375, 0.0
      %v4379 = vmax.f32 %v4376, 0.0
      %v4380 = vmul.f32 %v4377, %v323
      %v4381 = vmul.f32 %v4378, %v327
      %v4382 = vmul.f32 %v4379, %v331
      %v4386 = vcombine.low %v4380, %v4381
      %v4388 = vunpack.c.l.s4 1966171168
      %v4389 = vunpack.c.0.s8 %v4388
      %v4390 = vlaneseq
      %v4391 = vshrl.u32 %v4390, 7
      %v4392 = vsub.s32 %v4389, %v4391
      %v4393 = vrot.slane %v4386, %v4392
      %v4395 = vunpack.c.l.s4 1966171168
      %v4396 = vunpack.c.0.s8 %v4395
      %v4397 = vlaneseq
      %v4398 = vshrl.u32 %v4397, 7
      %v4399 = vsub.s32 %v4396, %v4398
      %v4400 = vrot.slane %v4382, %v4399
      %v4401 = vcombine.low %v4393, %v4400
      %v4403 = vunpack.c.l.s4 1966171168
      %v4404 = vunpack.c.0.s8 %v4403
      %v4405 = vlaneseq
      %v4406 = vshrl.u32 %v4405, 7
      %v4407 = vsub.s32 %v4404, %v4406
      %v4408 = vrot.slane %v4401, %v4407
      %v4410 = vlaneseq
      %vm4411 = vcmp.ge.s32.totalorder %v4410, 0
      %vm4412 = vcmp.lt.s32.totalorder %v4410, 384
      %vm4413 = vmand %vm4411, %vm4412
      %4414 = vst.msk [vmem:[%s317] sm:$0x7] %vm4413, %v4408
      %p4415 = scmp.lt.s32.totalorder %s19, 1
      %s4416 = scalar_select %p4415, %s19, 1
      %s4417 = smul.addr %s4416, 3
      %s4418 = scalar_lea.vmem %s8, %s4417
      // Predicated region
      $region53: #{nc_conv2d_masked.1} parent=51 // pred_check
        %p4419 = pneg %p215
      $region54: #{nc_conv2d_masked.1} parent=51 // pred_check_branch
        %4421 = sbr.rel (%p4419) target = $region56
      $region55: #{nc_conv2d_masked.1} parent=51 // pred_region
        _
      $region56: #{nc_conv2d_masked.1} parent=51 // pred_fallthru
        _
    $region52: #{nc_conv2d_masked.1} parent=5 // pred_fallthru
      _
    %p4422 = scmp.le.s32.totalorder 2, %s14
    // Predicated region
    $region57: #{nc_conv2d_masked.1} parent=5 // pred_check
      %p4423 = pneg %p4422
    $region58: #{nc_conv2d_masked.1} parent=5 // pred_check_branch
      %4425 = sbr.rel (%p4423) target = $region60
    $region59: #{nc_conv2d_masked.1} parent=5 // pred_region
      %s4426 = ssub.s32 %s14, 2
      // Predicated region
      $region61: #{nc_conv2d_masked.1} parent=59 // pred_check
        %p4427 = pneg %p221
      $region62: #{nc_conv2d_masked.1} parent=59 // pred_check_branch
        %4429 = sbr.rel (%p4427) target = $region64
      $region63: #{nc_conv2d_masked.1} parent=59 // pred_region
        %p4430 = scmp.lt.s32.totalorder %s20, 1
        %s4431 = scalar_select %p4430, %s20, 1
        %s4432 = smul.addr %s4431, 3
        %s4433 = scalar_lea.vmem %s8, %s4432
      $region64: #{nc_conv2d_masked.1} parent=59 // pred_fallthru
        _
    $region60: #{nc_conv2d_masked.1} parent=5 // pred_fallthru
      _
  $region6: #{nc_conv2d_masked.1} parent=0 // loop_footer
    %s18 = sadd.s32 1, %s14
  $region7: #{nc_conv2d_masked.1} parent=0 // loop_footer_branch
    %13 = sbr.rel target = $region3
  $region8: #{nc_conv2d_masked.1} parent=0 // loop_exit
    _

</llo_original>
